<compile_context>
chip_gen: v7x
topology: tpu7x:2x2x1
jax: 0.10.0
libtpu: 0.0.40
codegen_flags: <defaults>
</compile_context>

<pallas_src>
import functools
import math

import jax
import jax.numpy as jnp
import numpy as np
from jax.experimental import pallas as pl
from jax.experimental.pallas import tpu as pltpu


def mha_kernel(q_ref, k_ref, v_ref,
               wq_ref, bq_ref, wk_ref, bk_ref, wv_ref, bv_ref, wo_ref, bo_ref,
               o_ref,
               kt_scr, v_scr,
               *, num_heads, d_k):
    cdt = q_ref.dtype                      # compute dtype fed to the MXU (no f32 up-cast)
    inv_sqrt_dk = 1.0 / math.sqrt(d_k)
    qs = pl.program_id(1)

    # ---- Project K/V once per batch element (query-tile 0); persists in scratch.
    # Per-head 2-D matmuls from pre-split weights -> no lane slicing; K is stored
    # transposed (d_k, S) so the per-tile score contraction never relayouts.
    @pl.when(qs == 0)
    def _():
        k = k_ref[0]                       # (S, D)
        v = v_ref[0]
        for h in range(num_heads):         # H is small & static
            kp_h = (jnp.dot(k, wk_ref[h], preferred_element_type=jnp.float32)
                    + bk_ref[h])           # (S, d_k) f32
            vp_h = (jnp.dot(v, wv_ref[h], preferred_element_type=jnp.float32)
                    + bv_ref[h])
            kt_scr[h] = kp_h.T.astype(cdt)  # (d_k, S) -- one XLU transpose per batch elt
            v_scr[h] = vp_h.astype(cdt)     # (S, d_k)

    # ---- Head-split Q projection for this tile, straight from the MXU.
    # 1/sqrt(d_k) folded here (O(TILE_S*D) instead of O(H*TILE_S*S)).
    q = q_ref[0]                           # (TILE_S, D)
    qph = jnp.stack(
        [jnp.dot(q, wq_ref[h], preferred_element_type=jnp.float32) + bq_ref[h]
         for h in range(num_heads)],
        axis=0) * inv_sqrt_dk              # leading-axis stack of MXU outputs (no lane slicing)
    qph = qph.astype(cdt)                  # (H, TILE_S, d_k)

    # ---- Head-batched attention: scores (lane-dense in S), stable exp,
    # unnormalized PV matmul, then exact deferred normalization.
    s = jnp.einsum('hqd,hdk->hqk', qph, kt_scr[...],
                   preferred_element_type=jnp.float32)        # (H, TILE_S, S)
    s = s - jnp.max(s, axis=-1, keepdims=True)
    p = jnp.exp(s)                                            # f32
    ctx = jnp.einsum('hqk,hkd->hqd', p.astype(cdt), v_scr[...],
                     preferred_element_type=jnp.float32)      # (H, TILE_S, d_k)
    ctx = (ctx / jnp.sum(p, axis=-1, keepdims=True)).astype(cdt)  # exact normalization

    # ---- Output projection with the head merge folded into the accumulation:
    # out = sum_h ctx_h @ Wo_h + bo   (no concatenate, no lane slices).
    out = jnp.dot(ctx[0], wo_ref[0], preferred_element_type=jnp.float32)
    for h in range(1, num_heads):
        out = out + jnp.dot(ctx[h], wo_ref[h], preferred_element_type=jnp.float32)
    out = out + bo_ref[...]
    o_ref[0] = out.astype(o_ref.dtype)


def _pick_q_tile(seq_len):
    # Prefer MXU-friendly 256/128 tiles; full sequence for small S (full-dim
    # blocks are always legal).
    if seq_len <= 256:
        return seq_len
    for t in (256, 128, 64, 32, 16, 8):
        if seq_len % t == 0:
            return t
    # TODO(synk): for awkward S prefer padding + masked final tile over a
    #             whole-sequence tile (VMEM) or a tiny divisor (MXU underfill).
    return seq_len


def _vmem_limit_bytes(S, D, num_heads, d_k, tile_s, itemsize):
    q_tile = tile_s * D * itemsize
    kv_block = S * D * itemsize
    weights = 4 * D * D * itemsize + (3 * num_heads * d_k + D) * itemsize
    scratch = 2 * num_heads * S * d_k * itemsize                 # K^T + V caches
    work = (num_heads * tile_s * S * 4 * 2                       # f32 scores + exp
            + num_heads * tile_s * d_k * 4 * 2                   # ctx intermediates
            + tile_s * D * 4 * 2)                                # out accumulation
    need = (2 * (2 * q_tile)          # double-buffered q in / o out
            + 2 * (2 * kv_block)      # double-buffered raw K, V blocks
            + 2 * weights             # (conservatively) double-buffered weights
            + scratch + work)
    # Headroom, clamped to a sane range (v5e/v6e have 128 MiB physical, v7x 64 MiB).
    return int(min(max(2 * need, 32 * 1024 * 1024), 100 * 1024 * 1024))


def multi_head_attention(q, k, v, params, *, num_heads):
    """q, k, v: [B, S, d_model]; params: PyTorch nn.Linear layout (W: (out,in), b: (out,))."""
    B, S, D = q.shape
    assert D % num_heads == 0
    d_k = D // num_heads
    tile_s = _pick_q_tile(S)
    num_q_tiles = S // tile_s

    # Pre-split the projections per head on the host so the kernel never lane-slices:
    #   in-projections  -> (H, D, d_k), their biases -> (H, 1, d_k)
    #   out-projection  -> (H, d_k, D), its bias     -> (1, D)
    def split_in_w(w):   # (out, in) -> (H, D_in, d_k)
        return jnp.transpose(w.T.reshape(D, num_heads, d_k), (1, 0, 2))

    def split_in_b(b):   # (out,) -> (H, 1, d_k)
        return b.reshape(num_heads, 1, d_k)

    wq = split_in_w(params["wq"]); bq = split_in_b(params["bq"])
    wk = split_in_w(params["wk"]); bk = split_in_b(params["bk"])
    wv = split_in_w(params["wv"]); bv = split_in_b(params["bv"])
    wo = params["wo"].T.reshape(num_heads, d_k, D)
    bo = params["bo"].reshape(1, D)

    q_spec = pl.BlockSpec((1, tile_s, D), lambda b, qs: (b, qs, 0))
    kv_spec = pl.BlockSpec((1, S, D), lambda b, qs: (b, 0, 0))
    wi_spec = pl.BlockSpec((num_heads, D, d_k), lambda b, qs: (0, 0, 0))   # constant -> no re-DMA
    bi_spec = pl.BlockSpec((num_heads, 1, d_k), lambda b, qs: (0, 0, 0))
    wo_spec = pl.BlockSpec((num_heads, d_k, D), lambda b, qs: (0, 0, 0))
    bo_spec = pl.BlockSpec((1, D), lambda b, qs: (0, 0))
    o_spec = pl.BlockSpec((1, tile_s, D), lambda b, qs: (b, qs, 0))

    kernel = functools.partial(mha_kernel, num_heads=num_heads, d_k=d_k)
    itemsize = q.dtype.itemsize

    return pl.pallas_call(
        kernel,
        out_shape=jax.ShapeDtypeStruct((B, S, D), q.dtype),
        grid_spec=pltpu.PrefetchScalarGridSpec(
            num_scalar_prefetch=0,
            grid=(B, num_q_tiles),
            in_specs=[q_spec, kv_spec, kv_spec,
                      wi_spec, bi_spec,   # Wq (H,D,d_k), bq (H,1,d_k)
                      wi_spec, bi_spec,   # Wk, bk
                      wi_spec, bi_spec,   # Wv, bv
                      wo_spec, bo_spec],  # Wo (H,d_k,D), bo (1,D)
            out_specs=o_spec,
            scratch_shapes=[
                pltpu.VMEM((num_heads, d_k, S), q.dtype),   # projected K, pre-transposed
                pltpu.VMEM((num_heads, S, d_k), q.dtype),   # projected V
            ]),
        compiler_params=pltpu.CompilerParams(
            # Batch axis shardable across TensorCores; query-tile axis stays
            # sequential since the K/V scratch is built at tile 0.
            dimension_semantics=("parallel", "arbitrary"),
            vmem_limit_bytes=_vmem_limit_bytes(S, D, num_heads, d_k, tile_s, itemsize)),
    )(q, k, v, wq, bq, wk, bk, wv, bv, wo, bo)


def reference_mha(q, k, v, params, *, num_heads):
    """Pure-JAX reference mirroring the PyTorch forward (mask=None, eval dropout)."""
    B, S, D = q.shape
    d_k = D // num_heads

    def lin(x, w, b):               # nn.Linear: y = x @ W.T + b, W: (out, in)
        return jnp.einsum("bsd,ed->bse", x, w) + b

    qp = lin(q, params["wq"], params["bq"]).reshape(B, S, num_heads, d_k).transpose(0, 2, 1, 3)
    kp = lin(k, params["wk"], params["bk"]).reshape(B, S, num_heads, d_k).transpose(0, 2, 1, 3)
    vp = lin(v, params["wv"], params["bv"]).reshape(B, S, num_heads, d_k).transpose(0, 2, 1, 3)

    scores = jnp.einsum("bhqd,bhkd->bhqk", qp, kp) / math.sqrt(d_k)
    p = jax.nn.softmax(scores, axis=-1)
    x = jnp.einsum("bhqk,bhkd->bhqd", p, vp)
    x = x.transpose(0, 2, 1, 3).reshape(B, S, D)
    return lin(x, params["wo"], params["bo"])


def make_params(key, d_model):
    ks = jax.random.split(key, 8)
    scale = 1.0 / math.sqrt(d_model)

    def w(k_):
        return jax.random.normal(k_, (d_model, d_model), jnp.float32) * scale

    def b(k_):
        return jax.random.normal(k_, (d_model,), jnp.float32) * scale

    # PyTorch nn.Linear layout: weight (out, in), bias (out,).
    return {"wq": w(ks[0]), "bq": b(ks[1]),
            "wk": w(ks[2]), "bk": b(ks[3]),
            "wv": w(ks[4]), "bv": b(ks[5]),
            "wo": w(ks[6]), "bo": b(ks[7])}


if __name__ == "__main__":
    B, S, d_model, num_heads = 2, 8, 32, 4

    key = jax.random.PRNGKey(0)
    kq, kk, kv, kp = jax.random.split(key, 4)
    q = jax.random.normal(kq, (B, S, d_model), jnp.float32)
    k = jax.random.normal(kk, (B, S, d_model), jnp.float32)
    v = jax.random.normal(kv, (B, S, d_model), jnp.float32)
    params = make_params(kp, d_model)

    out = multi_head_attention(q, k, v, params, num_heads=num_heads)
    out = jax.block_until_ready(out)

    ref = reference_mha(q, k, v, params, num_heads=num_heads)
    # Exact softmax normalization now; tolerance only covers f32 matmul-order
    # / default-precision differences.
    np.testing.assert_allclose(np.asarray(out), np.asarray(ref), rtol=1e-3, atol=1e-4)

    print("KERNEL_OK")
</pallas_src>

<mosaic_0001>
module attributes {stable_mosaic.version = 11 : i64} {
  func.func @mha_kernel(%arg0: i32, %arg1: i32, %arg2: memref<1x8x32xf32, #tpu.memory_space<vmem>>, %arg3: memref<1x8x32xf32, #tpu.memory_space<vmem>>, %arg4: memref<1x8x32xf32, #tpu.memory_space<vmem>>, %arg5: memref<4x32x8xf32, #tpu.memory_space<vmem>>, %arg6: memref<4x1x8xf32, #tpu.memory_space<vmem>>, %arg7: memref<4x32x8xf32, #tpu.memory_space<vmem>>, %arg8: memref<4x1x8xf32, #tpu.memory_space<vmem>>, %arg9: memref<4x32x8xf32, #tpu.memory_space<vmem>>, %arg10: memref<4x1x8xf32, #tpu.memory_space<vmem>>, %arg11: memref<4x8x32xf32, #tpu.memory_space<vmem>>, %arg12: memref<1x32xf32, #tpu.memory_space<vmem>>, %arg13: memref<1x8x32xf32, #tpu.memory_space<vmem>>, %arg14: memref<4x8x8xf32, #tpu.memory_space<vmem>>, %arg15: memref<4x8x8xf32, #tpu.memory_space<vmem>>) attributes {dimension_semantics = [#tpu.dimension_semantics<parallel>, #tpu.dimension_semantics<arbitrary>], iteration_bounds = array<i64: 2, 1>, scalar_prefetch = 0 : i64, scratch_operands = 2 : i64, tpu.core_type = #tpu.core_type<tc>, window_params = [{transform_indices = @transform_0, window_bounds = array<i64: 1, 8, 32>}, {transform_indices = @transform_1, window_bounds = array<i64: 1, 8, 32>}, {transform_indices = @transform_2, window_bounds = array<i64: 1, 8, 32>}, {pipeline_mode = #tpu.pipeline_mode<synchronous>, transform_indices = @transform_3, window_bounds = array<i64: 4, 32, 8>}, {pipeline_mode = #tpu.pipeline_mode<synchronous>, transform_indices = @transform_4, window_bounds = array<i64: 4, 1, 8>}, {pipeline_mode = #tpu.pipeline_mode<synchronous>, transform_indices = @transform_5, window_bounds = array<i64: 4, 32, 8>}, {pipeline_mode = #tpu.pipeline_mode<synchronous>, transform_indices = @transform_6, window_bounds = array<i64: 4, 1, 8>}, {pipeline_mode = #tpu.pipeline_mode<synchronous>, transform_indices = @transform_7, window_bounds = array<i64: 4, 32, 8>}, {pipeline_mode = #tpu.pipeline_mode<synchronous>, transform_indices = @transform_8, window_bounds = array<i64: 4, 1, 8>}, {pipeline_mode = #tpu.pipeline_mode<synchronous>, transform_indices = @transform_9, window_bounds = array<i64: 4, 8, 32>}, {pipeline_mode = #tpu.pipeline_mode<synchronous>, transform_indices = @transform_10, window_bounds = array<i64: 1, 32>}, {transform_indices = @transform_11, window_bounds = array<i64: 1, 8, 32>}]} {
    %c0_i32 = arith.constant 0 : i32
    %0 = arith.cmpi eq, %arg1, %c0_i32 : i32
    %1 = arith.extui %0 : i1 to i32
    %c0_i32_0 = arith.constant 0 : i32
    %2 = arith.cmpi ne, %1, %c0_i32_0 : i32
    scf.if %2 {
      %c0_59 = arith.constant 0 : index
      %c0_60 = arith.constant 0 : index
      %c0_61 = arith.constant 0 : index
      %82 = vector.load %arg3[%c0_59, %c0_60, %c0_61] : memref<1x8x32xf32, #tpu.memory_space<vmem>>, vector<1x8x32xf32>
      %83 = vector.shape_cast %82 : vector<1x8x32xf32> to vector<8x32xf32>
      %c0_62 = arith.constant 0 : index
      %c0_63 = arith.constant 0 : index
      %c0_64 = arith.constant 0 : index
      %84 = vector.load %arg4[%c0_62, %c0_63, %c0_64] : memref<1x8x32xf32, #tpu.memory_space<vmem>>, vector<1x8x32xf32>
      %85 = vector.shape_cast %84 : vector<1x8x32xf32> to vector<8x32xf32>
      %c0_65 = arith.constant 0 : index
      %c0_66 = arith.constant 0 : index
      %c0_67 = arith.constant 0 : index
      %86 = vector.load %arg7[%c0_65, %c0_66, %c0_67] : memref<4x32x8xf32, #tpu.memory_space<vmem>>, vector<1x32x8xf32>
      %87 = vector.shape_cast %86 : vector<1x32x8xf32> to vector<32x8xf32>
      %cst_68 = arith.constant dense<0.000000e+00> : vector<8x8xf32>
      %88 = tpu.matmul %83, %87, %cst_68 {dimension_numbers = #tpu.dot_dimension_numbers<[1], [0], [0], [1], [0, 0, 1, 1], [], []>} : vector<8x32xf32>, vector<32x8xf32>, vector<8x8xf32> -> vector<8x8xf32>
      %c0_69 = arith.constant 0 : index
      %c0_70 = arith.constant 0 : index
      %c0_71 = arith.constant 0 : index
      %89 = vector.load %arg8[%c0_69, %c0_70, %c0_71] : memref<4x1x8xf32, #tpu.memory_space<vmem>>, vector<1x1x8xf32>
      %90 = vector.shape_cast %89 : vector<1x1x8xf32> to vector<1x8xf32>
      %91 = vector.broadcast %90 : vector<1x8xf32> to vector<8x8xf32>
      %92 = arith.addf %88, %91 : vector<8x8xf32>
      %c0_72 = arith.constant 0 : index
      %c0_73 = arith.constant 0 : index
      %c0_74 = arith.constant 0 : index
      %93 = vector.load %arg9[%c0_72, %c0_73, %c0_74] : memref<4x32x8xf32, #tpu.memory_space<vmem>>, vector<1x32x8xf32>
      %94 = vector.shape_cast %93 : vector<1x32x8xf32> to vector<32x8xf32>
      %cst_75 = arith.constant dense<0.000000e+00> : vector<8x8xf32>
      %95 = tpu.matmul %85, %94, %cst_75 {dimension_numbers = #tpu.dot_dimension_numbers<[1], [0], [0], [1], [0, 0, 1, 1], [], []>} : vector<8x32xf32>, vector<32x8xf32>, vector<8x8xf32> -> vector<8x8xf32>
      %c0_76 = arith.constant 0 : index
      %c0_77 = arith.constant 0 : index
      %c0_78 = arith.constant 0 : index
      %96 = vector.load %arg10[%c0_76, %c0_77, %c0_78] : memref<4x1x8xf32, #tpu.memory_space<vmem>>, vector<1x1x8xf32>
      %97 = vector.shape_cast %96 : vector<1x1x8xf32> to vector<1x8xf32>
      %98 = vector.broadcast %97 : vector<1x8xf32> to vector<8x8xf32>
      %99 = arith.addf %95, %98 : vector<8x8xf32>
      %100 = tpu.transpose %92, [1, 0] : vector<8x8xf32> -> vector<8x8xf32>
      %c0_79 = arith.constant 0 : index
      %c0_80 = arith.constant 0 : index
      %c0_81 = arith.constant 0 : index
      %101 = vector.load %arg14[%c0_79, %c0_80, %c0_81] : memref<4x8x8xf32, #tpu.memory_space<vmem>>, vector<1x8x8xf32>
      %102 = vector.shape_cast %101 : vector<1x8x8xf32> to vector<8x8xf32>
      %103 = vector.shape_cast %100 : vector<8x8xf32> to vector<1x8x8xf32>
      tpu.vector_store %arg14[%c0_79, %c0_80, %c0_81], %103 {strides = array<i32>} : memref<4x8x8xf32, #tpu.memory_space<vmem>>, vector<1x8x8xf32>,
      %c0_82 = arith.constant 0 : index
      %c0_83 = arith.constant 0 : index
      %c0_84 = arith.constant 0 : index
      %104 = vector.load %arg15[%c0_82, %c0_83, %c0_84] : memref<4x8x8xf32, #tpu.memory_space<vmem>>, vector<1x8x8xf32>
      %105 = vector.shape_cast %104 : vector<1x8x8xf32> to vector<8x8xf32>
      %106 = vector.shape_cast %99 : vector<8x8xf32> to vector<1x8x8xf32>
      tpu.vector_store %arg15[%c0_82, %c0_83, %c0_84], %106 {strides = array<i32>} : memref<4x8x8xf32, #tpu.memory_space<vmem>>, vector<1x8x8xf32>,
      %c1_85 = arith.constant 1 : index
      %c0_86 = arith.constant 0 : index
      %c0_87 = arith.constant 0 : index
      %107 = vector.load %arg7[%c1_85, %c0_86, %c0_87] : memref<4x32x8xf32, #tpu.memory_space<vmem>>, vector<1x32x8xf32>
      %108 = vector.shape_cast %107 : vector<1x32x8xf32> to vector<32x8xf32>
      %cst_88 = arith.constant dense<0.000000e+00> : vector<8x8xf32>
      %109 = tpu.matmul %83, %108, %cst_88 {dimension_numbers = #tpu.dot_dimension_numbers<[1], [0], [0], [1], [0, 0, 1, 1], [], []>} : vector<8x32xf32>, vector<32x8xf32>, vector<8x8xf32> -> vector<8x8xf32>
      %c1_89 = arith.constant 1 : index
      %c0_90 = arith.constant 0 : index
      %c0_91 = arith.constant 0 : index
      %110 = vector.load %arg8[%c1_89, %c0_90, %c0_91] : memref<4x1x8xf32, #tpu.memory_space<vmem>>, vector<1x1x8xf32>
      %111 = vector.shape_cast %110 : vector<1x1x8xf32> to vector<1x8xf32>
      %112 = vector.broadcast %111 : vector<1x8xf32> to vector<8x8xf32>
      %113 = arith.addf %109, %112 : vector<8x8xf32>
      %c1_92 = arith.constant 1 : index
      %c0_93 = arith.constant 0 : index
      %c0_94 = arith.constant 0 : index
      %114 = vector.load %arg9[%c1_92, %c0_93, %c0_94] : memref<4x32x8xf32, #tpu.memory_space<vmem>>, vector<1x32x8xf32>
      %115 = vector.shape_cast %114 : vector<1x32x8xf32> to vector<32x8xf32>
      %cst_95 = arith.constant dense<0.000000e+00> : vector<8x8xf32>
      %116 = tpu.matmul %85, %115, %cst_95 {dimension_numbers = #tpu.dot_dimension_numbers<[1], [0], [0], [1], [0, 0, 1, 1], [], []>} : vector<8x32xf32>, vector<32x8xf32>, vector<8x8xf32> -> vector<8x8xf32>
      %c1_96 = arith.constant 1 : index
      %c0_97 = arith.constant 0 : index
      %c0_98 = arith.constant 0 : index
      %117 = vector.load %arg10[%c1_96, %c0_97, %c0_98] : memref<4x1x8xf32, #tpu.memory_space<vmem>>, vector<1x1x8xf32>
      %118 = vector.shape_cast %117 : vector<1x1x8xf32> to vector<1x8xf32>
      %119 = vector.broadcast %118 : vector<1x8xf32> to vector<8x8xf32>
      %120 = arith.addf %116, %119 : vector<8x8xf32>
      %121 = tpu.transpose %113, [1, 0] : vector<8x8xf32> -> vector<8x8xf32>
      %c1_99 = arith.constant 1 : index
      %c0_100 = arith.constant 0 : index
      %c0_101 = arith.constant 0 : index
      %122 = vector.load %arg14[%c1_99, %c0_100, %c0_101] : memref<4x8x8xf32, #tpu.memory_space<vmem>>, vector<1x8x8xf32>
      %123 = vector.shape_cast %122 : vector<1x8x8xf32> to vector<8x8xf32>
      %124 = vector.shape_cast %121 : vector<8x8xf32> to vector<1x8x8xf32>
      tpu.vector_store %arg14[%c1_99, %c0_100, %c0_101], %124 {strides = array<i32>} : memref<4x8x8xf32, #tpu.memory_space<vmem>>, vector<1x8x8xf32>,
      %c1_102 = arith.constant 1 : index
      %c0_103 = arith.constant 0 : index
      %c0_104 = arith.constant 0 : index
      %125 = vector.load %arg15[%c1_102, %c0_103, %c0_104] : memref<4x8x8xf32, #tpu.memory_space<vmem>>, vector<1x8x8xf32>
      %126 = vector.shape_cast %125 : vector<1x8x8xf32> to vector<8x8xf32>
      %127 = vector.shape_cast %120 : vector<8x8xf32> to vector<1x8x8xf32>
      tpu.vector_store %arg15[%c1_102, %c0_103, %c0_104], %127 {strides = array<i32>} : memref<4x8x8xf32, #tpu.memory_space<vmem>>, vector<1x8x8xf32>,
      %c2_105 = arith.constant 2 : index
      %c0_106 = arith.constant 0 : index
      %c0_107 = arith.constant 0 : index
      %128 = vector.load %arg7[%c2_105, %c0_106, %c0_107] : memref<4x32x8xf32, #tpu.memory_space<vmem>>, vector<1x32x8xf32>
      %129 = vector.shape_cast %128 : vector<1x32x8xf32> to vector<32x8xf32>
      %cst_108 = arith.constant dense<0.000000e+00> : vector<8x8xf32>
      %130 = tpu.matmul %83, %129, %cst_108 {dimension_numbers = #tpu.dot_dimension_numbers<[1], [0], [0], [1], [0, 0, 1, 1], [], []>} : vector<8x32xf32>, vector<32x8xf32>, vector<8x8xf32> -> vector<8x8xf32>
      %c2_109 = arith.constant 2 : index
      %c0_110 = arith.constant 0 : index
      %c0_111 = arith.constant 0 : index
      %131 = vector.load %arg8[%c2_109, %c0_110, %c0_111] : memref<4x1x8xf32, #tpu.memory_space<vmem>>, vector<1x1x8xf32>
      %132 = vector.shape_cast %131 : vector<1x1x8xf32> to vector<1x8xf32>
      %133 = vector.broadcast %132 : vector<1x8xf32> to vector<8x8xf32>
      %134 = arith.addf %130, %133 : vector<8x8xf32>
      %c2_112 = arith.constant 2 : index
      %c0_113 = arith.constant 0 : index
      %c0_114 = arith.constant 0 : index
      %135 = vector.load %arg9[%c2_112, %c0_113, %c0_114] : memref<4x32x8xf32, #tpu.memory_space<vmem>>, vector<1x32x8xf32>
      %136 = vector.shape_cast %135 : vector<1x32x8xf32> to vector<32x8xf32>
      %cst_115 = arith.constant dense<0.000000e+00> : vector<8x8xf32>
      %137 = tpu.matmul %85, %136, %cst_115 {dimension_numbers = #tpu.dot_dimension_numbers<[1], [0], [0], [1], [0, 0, 1, 1], [], []>} : vector<8x32xf32>, vector<32x8xf32>, vector<8x8xf32> -> vector<8x8xf32>
      %c2_116 = arith.constant 2 : index
      %c0_117 = arith.constant 0 : index
      %c0_118 = arith.constant 0 : index
      %138 = vector.load %arg10[%c2_116, %c0_117, %c0_118] : memref<4x1x8xf32, #tpu.memory_space<vmem>>, vector<1x1x8xf32>
      %139 = vector.shape_cast %138 : vector<1x1x8xf32> to vector<1x8xf32>
      %140 = vector.broadcast %139 : vector<1x8xf32> to vector<8x8xf32>
      %141 = arith.addf %137, %140 : vector<8x8xf32>
      %142 = tpu.transpose %134, [1, 0] : vector<8x8xf32> -> vector<8x8xf32>
      %c2_119 = arith.constant 2 : index
      %c0_120 = arith.constant 0 : index
      %c0_121 = arith.constant 0 : index
      %143 = vector.load %arg14[%c2_119, %c0_120, %c0_121] : memref<4x8x8xf32, #tpu.memory_space<vmem>>, vector<1x8x8xf32>
      %144 = vector.shape_cast %143 : vector<1x8x8xf32> to vector<8x8xf32>
      %145 = vector.shape_cast %142 : vector<8x8xf32> to vector<1x8x8xf32>
      tpu.vector_store %arg14[%c2_119, %c0_120, %c0_121], %145 {strides = array<i32>} : memref<4x8x8xf32, #tpu.memory_space<vmem>>, vector<1x8x8xf32>,
      %c2_122 = arith.constant 2 : index
      %c0_123 = arith.constant 0 : index
      %c0_124 = arith.constant 0 : index
      %146 = vector.load %arg15[%c2_122, %c0_123, %c0_124] : memref<4x8x8xf32, #tpu.memory_space<vmem>>, vector<1x8x8xf32>
      %147 = vector.shape_cast %146 : vector<1x8x8xf32> to vector<8x8xf32>
      %148 = vector.shape_cast %141 : vector<8x8xf32> to vector<1x8x8xf32>
      tpu.vector_store %arg15[%c2_122, %c0_123, %c0_124], %148 {strides = array<i32>} : memref<4x8x8xf32, #tpu.memory_space<vmem>>, vector<1x8x8xf32>,
      %c3_125 = arith.constant 3 : index
      %c0_126 = arith.constant 0 : index
      %c0_127 = arith.constant 0 : index
      %149 = vector.load %arg7[%c3_125, %c0_126, %c0_127] : memref<4x32x8xf32, #tpu.memory_space<vmem>>, vector<1x32x8xf32>
      %150 = vector.shape_cast %149 : vector<1x32x8xf32> to vector<32x8xf32>
      %cst_128 = arith.constant dense<0.000000e+00> : vector<8x8xf32>
      %151 = tpu.matmul %83, %150, %cst_128 {dimension_numbers = #tpu.dot_dimension_numbers<[1], [0], [0], [1], [0, 0, 1, 1], [], []>} : vector<8x32xf32>, vector<32x8xf32>, vector<8x8xf32> -> vector<8x8xf32>
      %c3_129 = arith.constant 3 : index
      %c0_130 = arith.constant 0 : index
      %c0_131 = arith.constant 0 : index
      %152 = vector.load %arg8[%c3_129, %c0_130, %c0_131] : memref<4x1x8xf32, #tpu.memory_space<vmem>>, vector<1x1x8xf32>
      %153 = vector.shape_cast %152 : vector<1x1x8xf32> to vector<1x8xf32>
      %154 = vector.broadcast %153 : vector<1x8xf32> to vector<8x8xf32>
      %155 = arith.addf %151, %154 : vector<8x8xf32>
      %c3_132 = arith.constant 3 : index
      %c0_133 = arith.constant 0 : index
      %c0_134 = arith.constant 0 : index
      %156 = vector.load %arg9[%c3_132, %c0_133, %c0_134] : memref<4x32x8xf32, #tpu.memory_space<vmem>>, vector<1x32x8xf32>
      %157 = vector.shape_cast %156 : vector<1x32x8xf32> to vector<32x8xf32>
      %cst_135 = arith.constant dense<0.000000e+00> : vector<8x8xf32>
      %158 = tpu.matmul %85, %157, %cst_135 {dimension_numbers = #tpu.dot_dimension_numbers<[1], [0], [0], [1], [0, 0, 1, 1], [], []>} : vector<8x32xf32>, vector<32x8xf32>, vector<8x8xf32> -> vector<8x8xf32>
      %c3_136 = arith.constant 3 : index
      %c0_137 = arith.constant 0 : index
      %c0_138 = arith.constant 0 : index
      %159 = vector.load %arg10[%c3_136, %c0_137, %c0_138] : memref<4x1x8xf32, #tpu.memory_space<vmem>>, vector<1x1x8xf32>
      %160 = vector.shape_cast %159 : vector<1x1x8xf32> to vector<1x8xf32>
      %161 = vector.broadcast %160 : vector<1x8xf32> to vector<8x8xf32>
      %162 = arith.addf %158, %161 : vector<8x8xf32>
      %163 = tpu.transpose %155, [1, 0] : vector<8x8xf32> -> vector<8x8xf32>
      %c3_139 = arith.constant 3 : index
      %c0_140 = arith.constant 0 : index
      %c0_141 = arith.constant 0 : index
      %164 = vector.load %arg14[%c3_139, %c0_140, %c0_141] : memref<4x8x8xf32, #tpu.memory_space<vmem>>, vector<1x8x8xf32>
      %165 = vector.shape_cast %164 : vector<1x8x8xf32> to vector<8x8xf32>
      %166 = vector.shape_cast %163 : vector<8x8xf32> to vector<1x8x8xf32>
      tpu.vector_store %arg14[%c3_139, %c0_140, %c0_141], %166 {strides = array<i32>} : memref<4x8x8xf32, #tpu.memory_space<vmem>>, vector<1x8x8xf32>,
      %c3_142 = arith.constant 3 : index
      %c0_143 = arith.constant 0 : index
      %c0_144 = arith.constant 0 : index
      %167 = vector.load %arg15[%c3_142, %c0_143, %c0_144] : memref<4x8x8xf32, #tpu.memory_space<vmem>>, vector<1x8x8xf32>
      %168 = vector.shape_cast %167 : vector<1x8x8xf32> to vector<8x8xf32>
      %169 = vector.shape_cast %162 : vector<8x8xf32> to vector<1x8x8xf32>
      tpu.vector_store %arg15[%c3_142, %c0_143, %c0_144], %169 {strides = array<i32>} : memref<4x8x8xf32, #tpu.memory_space<vmem>>, vector<1x8x8xf32>,
    } else {
    }
    %c0 = arith.constant 0 : index
    %c0_1 = arith.constant 0 : index
    %c0_2 = arith.constant 0 : index
    %3 = vector.load %arg2[%c0, %c0_1, %c0_2] : memref<1x8x32xf32, #tpu.memory_space<vmem>>, vector<1x8x32xf32>
    %4 = vector.shape_cast %3 : vector<1x8x32xf32> to vector<8x32xf32>
    %c0_3 = arith.constant 0 : index
    %c0_4 = arith.constant 0 : index
    %c0_5 = arith.constant 0 : index
    %5 = vector.load %arg5[%c0_3, %c0_4, %c0_5] : memref<4x32x8xf32, #tpu.memory_space<vmem>>, vector<1x32x8xf32>
    %6 = vector.shape_cast %5 : vector<1x32x8xf32> to vector<32x8xf32>
    %cst = arith.constant dense<0.000000e+00> : vector<8x8xf32>
    %7 = tpu.matmul %4, %6, %cst {dimension_numbers = #tpu.dot_dimension_numbers<[1], [0], [0], [1], [0, 0, 1, 1], [], []>} : vector<8x32xf32>, vector<32x8xf32>, vector<8x8xf32> -> vector<8x8xf32>
    %c0_6 = arith.constant 0 : index
    %c0_7 = arith.constant 0 : index
    %c0_8 = arith.constant 0 : index
    %8 = vector.load %arg6[%c0_6, %c0_7, %c0_8] : memref<4x1x8xf32, #tpu.memory_space<vmem>>, vector<1x1x8xf32>
    %9 = vector.shape_cast %8 : vector<1x1x8xf32> to vector<1x8xf32>
    %10 = vector.broadcast %9 : vector<1x8xf32> to vector<8x8xf32>
    %11 = arith.addf %7, %10 : vector<8x8xf32>
    %c1 = arith.constant 1 : index
    %c0_9 = arith.constant 0 : index
    %c0_10 = arith.constant 0 : index
    %12 = vector.load %arg5[%c1, %c0_9, %c0_10] : memref<4x32x8xf32, #tpu.memory_space<vmem>>, vector<1x32x8xf32>
    %13 = vector.shape_cast %12 : vector<1x32x8xf32> to vector<32x8xf32>
    %cst_11 = arith.constant dense<0.000000e+00> : vector<8x8xf32>
    %14 = tpu.matmul %4, %13, %cst_11 {dimension_numbers = #tpu.dot_dimension_numbers<[1], [0], [0], [1], [0, 0, 1, 1], [], []>} : vector<8x32xf32>, vector<32x8xf32>, vector<8x8xf32> -> vector<8x8xf32>
    %c1_12 = arith.constant 1 : index
    %c0_13 = arith.constant 0 : index
    %c0_14 = arith.constant 0 : index
    %15 = vector.load %arg6[%c1_12, %c0_13, %c0_14] : memref<4x1x8xf32, #tpu.memory_space<vmem>>, vector<1x1x8xf32>
    %16 = vector.shape_cast %15 : vector<1x1x8xf32> to vector<1x8xf32>
    %17 = vector.broadcast %16 : vector<1x8xf32> to vector<8x8xf32>
    %18 = arith.addf %14, %17 : vector<8x8xf32>
    %c2 = arith.constant 2 : index
    %c0_15 = arith.constant 0 : index
    %c0_16 = arith.constant 0 : index
    %19 = vector.load %arg5[%c2, %c0_15, %c0_16] : memref<4x32x8xf32, #tpu.memory_space<vmem>>, vector<1x32x8xf32>
    %20 = vector.shape_cast %19 : vector<1x32x8xf32> to vector<32x8xf32>
    %cst_17 = arith.constant dense<0.000000e+00> : vector<8x8xf32>
    %21 = tpu.matmul %4, %20, %cst_17 {dimension_numbers = #tpu.dot_dimension_numbers<[1], [0], [0], [1], [0, 0, 1, 1], [], []>} : vector<8x32xf32>, vector<32x8xf32>, vector<8x8xf32> -> vector<8x8xf32>
    %c2_18 = arith.constant 2 : index
    %c0_19 = arith.constant 0 : index
    %c0_20 = arith.constant 0 : index
    %22 = vector.load %arg6[%c2_18, %c0_19, %c0_20] : memref<4x1x8xf32, #tpu.memory_space<vmem>>, vector<1x1x8xf32>
    %23 = vector.shape_cast %22 : vector<1x1x8xf32> to vector<1x8xf32>
    %24 = vector.broadcast %23 : vector<1x8xf32> to vector<8x8xf32>
    %25 = arith.addf %21, %24 : vector<8x8xf32>
    %c3 = arith.constant 3 : index
    %c0_21 = arith.constant 0 : index
    %c0_22 = arith.constant 0 : index
    %26 = vector.load %arg5[%c3, %c0_21, %c0_22] : memref<4x32x8xf32, #tpu.memory_space<vmem>>, vector<1x32x8xf32>
    %27 = vector.shape_cast %26 : vector<1x32x8xf32> to vector<32x8xf32>
    %cst_23 = arith.constant dense<0.000000e+00> : vector<8x8xf32>
    %28 = tpu.matmul %4, %27, %cst_23 {dimension_numbers = #tpu.dot_dimension_numbers<[1], [0], [0], [1], [0, 0, 1, 1], [], []>} : vector<8x32xf32>, vector<32x8xf32>, vector<8x8xf32> -> vector<8x8xf32>
    %c3_24 = arith.constant 3 : index
    %c0_25 = arith.constant 0 : index
    %c0_26 = arith.constant 0 : index
    %29 = vector.load %arg6[%c3_24, %c0_25, %c0_26] : memref<4x1x8xf32, #tpu.memory_space<vmem>>, vector<1x1x8xf32>
    %30 = vector.shape_cast %29 : vector<1x1x8xf32> to vector<1x8xf32>
    %31 = vector.broadcast %30 : vector<1x8xf32> to vector<8x8xf32>
    %32 = arith.addf %28, %31 : vector<8x8xf32>
    %33 = vector.shape_cast %11 : vector<8x8xf32> to vector<1x8x8xf32>
    %34 = vector.shape_cast %18 : vector<8x8xf32> to vector<1x8x8xf32>
    %35 = vector.shape_cast %25 : vector<8x8xf32> to vector<1x8x8xf32>
    %36 = vector.shape_cast %32 : vector<8x8xf32> to vector<1x8x8xf32>
    %37 = tpu.concatenate %33, %34, %35, %36 in 0 : vector<1x8x8xf32>, vector<1x8x8xf32>, vector<1x8x8xf32>, vector<1x8x8xf32> -> vector<4x8x8xf32>
    %cst_27 = arith.constant 0.353553385 : f32
    %38 = vector.broadcast %cst_27 : f32 to vector<4x8x8xf32>
    %39 = arith.mulf %37, %38 : vector<4x8x8xf32>
    %c0_28 = arith.constant 0 : index
    %c0_29 = arith.constant 0 : index
    %c0_30 = arith.constant 0 : index
    %40 = vector.load %arg14[%c0_28, %c0_29, %c0_30] : memref<4x8x8xf32, #tpu.memory_space<vmem>>, vector<4x8x8xf32>
    "tpu.trace_start"() <{level = 10 : i32, message = "hqd,hdk->hqk"}> : () -> ()
    %cst_31 = arith.constant dense<0.000000e+00> : vector<4x8x8xf32>
    %41 = tpu.matmul %39, %40, %cst_31 {dimension_numbers = #tpu.dot_dimension_numbers<[2], [1], [1], [2], [0, 0, 0, 1, 1, 2], [0], [0]>} : vector<4x8x8xf32>, vector<4x8x8xf32>, vector<4x8x8xf32> -> vector<4x8x8xf32>
    "tpu.trace_stop"() : () -> ()
    %cst_32 = arith.constant dense<0xFF800000> : vector<4x8xf32>
    %42 = vector.multi_reduction <maximumf>, %41, %cst_32 [2] : vector<4x8x8xf32> to vector<4x8xf32>
    %43 = vector.shape_cast %42 : vector<4x8xf32> to vector<4x8x1xf32>
    %44 = vector.broadcast %43 : vector<4x8x1xf32> to vector<4x8x8xf32>
    %45 = arith.subf %41, %44 : vector<4x8x8xf32>
    %46 = math.exp %45 : vector<4x8x8xf32>
    %c0_33 = arith.constant 0 : index
    %c0_34 = arith.constant 0 : index
    %c0_35 = arith.constant 0 : index
    %47 = vector.load %arg15[%c0_33, %c0_34, %c0_35] : memref<4x8x8xf32, #tpu.memory_space<vmem>>, vector<4x8x8xf32>
    "tpu.trace_start"() <{level = 10 : i32, message = "hqk,hkd->hqd"}> : () -> ()
    %cst_36 = arith.constant dense<0.000000e+00> : vector<4x8x8xf32>
    %48 = tpu.matmul %46, %47, %cst_36 {dimension_numbers = #tpu.dot_dimension_numbers<[2], [1], [1], [2], [0, 0, 0, 1, 1, 2], [0], [0]>} : vector<4x8x8xf32>, vector<4x8x8xf32>, vector<4x8x8xf32> -> vector<4x8x8xf32>
    "tpu.trace_stop"() : () -> ()
    %cst_37 = arith.constant dense<0.000000e+00> : vector<4x8xf32>
    %49 = vector.multi_reduction <add>, %46, %cst_37 [2] : vector<4x8x8xf32> to vector<4x8xf32>
    %50 = vector.shape_cast %49 : vector<4x8xf32> to vector<4x8x1xf32>
    %51 = vector.broadcast %50 : vector<4x8x1xf32> to vector<4x8x8xf32>
    %52 = arith.divf %48, %51 : vector<4x8x8xf32>
    %53 = vector.extract_strided_slice %52 {offsets = [0, 0, 0], sizes = [1, 8, 8], strides = [1, 1, 1]} : vector<4x8x8xf32> to vector<1x8x8xf32>
    %54 = vector.shape_cast %53 : vector<1x8x8xf32> to vector<8x8xf32>
    %c0_38 = arith.constant 0 : index
    %c0_39 = arith.constant 0 : index
    %c0_40 = arith.constant 0 : index
    %55 = vector.load %arg11[%c0_38, %c0_39, %c0_40] : memref<4x8x32xf32, #tpu.memory_space<vmem>>, vector<1x8x32xf32>
    %56 = vector.shape_cast %55 : vector<1x8x32xf32> to vector<8x32xf32>
    %cst_41 = arith.constant dense<0.000000e+00> : vector<8x32xf32>
    %57 = tpu.matmul %54, %56, %cst_41 {dimension_numbers = #tpu.dot_dimension_numbers<[1], [0], [0], [1], [0, 0, 1, 1], [], []>} : vector<8x8xf32>, vector<8x32xf32>, vector<8x32xf32> -> vector<8x32xf32>
    %58 = vector.extract_strided_slice %52 {offsets = [1, 0, 0], sizes = [1, 8, 8], strides = [1, 1, 1]} : vector<4x8x8xf32> to vector<1x8x8xf32>
    %59 = vector.shape_cast %58 : vector<1x8x8xf32> to vector<8x8xf32>
    %c1_42 = arith.constant 1 : index
    %c0_43 = arith.constant 0 : index
    %c0_44 = arith.constant 0 : index
    %60 = vector.load %arg11[%c1_42, %c0_43, %c0_44] : memref<4x8x32xf32, #tpu.memory_space<vmem>>, vector<1x8x32xf32>
    %61 = vector.shape_cast %60 : vector<1x8x32xf32> to vector<8x32xf32>
    %cst_45 = arith.constant dense<0.000000e+00> : vector<8x32xf32>
    %62 = tpu.matmul %59, %61, %cst_45 {dimension_numbers = #tpu.dot_dimension_numbers<[1], [0], [0], [1], [0, 0, 1, 1], [], []>} : vector<8x8xf32>, vector<8x32xf32>, vector<8x32xf32> -> vector<8x32xf32>
    %63 = arith.addf %57, %62 : vector<8x32xf32>
    %64 = vector.extract_strided_slice %52 {offsets = [2, 0, 0], sizes = [1, 8, 8], strides = [1, 1, 1]} : vector<4x8x8xf32> to vector<1x8x8xf32>
    %65 = vector.shape_cast %64 : vector<1x8x8xf32> to vector<8x8xf32>
    %c2_46 = arith.constant 2 : index
    %c0_47 = arith.constant 0 : index
    %c0_48 = arith.constant 0 : index
    %66 = vector.load %arg11[%c2_46, %c0_47, %c0_48] : memref<4x8x32xf32, #tpu.memory_space<vmem>>, vector<1x8x32xf32>
    %67 = vector.shape_cast %66 : vector<1x8x32xf32> to vector<8x32xf32>
    %cst_49 = arith.constant dense<0.000000e+00> : vector<8x32xf32>
    %68 = tpu.matmul %65, %67, %cst_49 {dimension_numbers = #tpu.dot_dimension_numbers<[1], [0], [0], [1], [0, 0, 1, 1], [], []>} : vector<8x8xf32>, vector<8x32xf32>, vector<8x32xf32> -> vector<8x32xf32>
    %69 = arith.addf %63, %68 : vector<8x32xf32>
    %70 = vector.extract_strided_slice %52 {offsets = [3, 0, 0], sizes = [1, 8, 8], strides = [1, 1, 1]} : vector<4x8x8xf32> to vector<1x8x8xf32>
    %71 = vector.shape_cast %70 : vector<1x8x8xf32> to vector<8x8xf32>
    %c3_50 = arith.constant 3 : index
    %c0_51 = arith.constant 0 : index
    %c0_52 = arith.constant 0 : index
    %72 = vector.load %arg11[%c3_50, %c0_51, %c0_52] : memref<4x8x32xf32, #tpu.memory_space<vmem>>, vector<1x8x32xf32>
    %73 = vector.shape_cast %72 : vector<1x8x32xf32> to vector<8x32xf32>
    %cst_53 = arith.constant dense<0.000000e+00> : vector<8x32xf32>
    %74 = tpu.matmul %71, %73, %cst_53 {dimension_numbers = #tpu.dot_dimension_numbers<[1], [0], [0], [1], [0, 0, 1, 1], [], []>} : vector<8x8xf32>, vector<8x32xf32>, vector<8x32xf32> -> vector<8x32xf32>
    %75 = arith.addf %69, %74 : vector<8x32xf32>
    %c0_54 = arith.constant 0 : index
    %c0_55 = arith.constant 0 : index
    %76 = vector.load %arg12[%c0_54, %c0_55] : memref<1x32xf32, #tpu.memory_space<vmem>>, vector<1x32xf32>
    %77 = vector.broadcast %76 : vector<1x32xf32> to vector<8x32xf32>
    %78 = arith.addf %75, %77 : vector<8x32xf32>
    %c0_56 = arith.constant 0 : index
    %c0_57 = arith.constant 0 : index
    %c0_58 = arith.constant 0 : index
    %79 = vector.load %arg13[%c0_56, %c0_57, %c0_58] : memref<1x8x32xf32, #tpu.memory_space<vmem>>, vector<1x8x32xf32>
    %80 = vector.shape_cast %79 : vector<1x8x32xf32> to vector<8x32xf32>
    %81 = vector.shape_cast %78 : vector<8x32xf32> to vector<1x8x32xf32>
    tpu.vector_store %arg13[%c0_56, %c0_57, %c0_58], %81 {strides = array<i32>} : memref<1x8x32xf32, #tpu.memory_space<vmem>>, vector<1x8x32xf32>,
    return
  }
  func.func @transform_0(%arg0: i32, %arg1: i32) -> (i32, i32, i32) {
    %c0_i32 = arith.constant 0 : i32
    %c0_i32_0 = arith.constant 0 : i32
    return %arg0, %arg1, %c0_i32 : i32, i32, i32
  }
  func.func @transform_1(%arg0: i32, %arg1: i32) -> (i32, i32, i32) {
    %c0_i32 = arith.constant 0 : i32
    %c0_i32_0 = arith.constant 0 : i32
    %c0_i32_1 = arith.constant 0 : i32
    return %arg0, %c0_i32, %c0_i32_0 : i32, i32, i32
  }
  func.func @transform_2(%arg0: i32, %arg1: i32) -> (i32, i32, i32) {
    %c0_i32 = arith.constant 0 : i32
    %c0_i32_0 = arith.constant 0 : i32
    %c0_i32_1 = arith.constant 0 : i32
    return %arg0, %c0_i32, %c0_i32_0 : i32, i32, i32
  }
  func.func @transform_3(%arg0: i32, %arg1: i32) -> (i32, i32, i32) {
    %c0_i32 = arith.constant 0 : i32
    %c0_i32_0 = arith.constant 0 : i32
    %c0_i32_1 = arith.constant 0 : i32
    %c0_i32_2 = arith.constant 0 : i32
    return %c0_i32, %c0_i32_0, %c0_i32_1 : i32, i32, i32
  }
  func.func @transform_4(%arg0: i32, %arg1: i32) -> (i32, i32, i32) {
    %c0_i32 = arith.constant 0 : i32
    %c0_i32_0 = arith.constant 0 : i32
    %c0_i32_1 = arith.constant 0 : i32
    %c0_i32_2 = arith.constant 0 : i32
    return %c0_i32, %c0_i32_0, %c0_i32_1 : i32, i32, i32
  }
  func.func @transform_5(%arg0: i32, %arg1: i32) -> (i32, i32, i32) {
    %c0_i32 = arith.constant 0 : i32
    %c0_i32_0 = arith.constant 0 : i32
    %c0_i32_1 = arith.constant 0 : i32
    %c0_i32_2 = arith.constant 0 : i32
    return %c0_i32, %c0_i32_0, %c0_i32_1 : i32, i32, i32
  }
  func.func @transform_6(%arg0: i32, %arg1: i32) -> (i32, i32, i32) {
    %c0_i32 = arith.constant 0 : i32
    %c0_i32_0 = arith.constant 0 : i32
    %c0_i32_1 = arith.constant 0 : i32
    %c0_i32_2 = arith.constant 0 : i32
    return %c0_i32, %c0_i32_0, %c0_i32_1 : i32, i32, i32
  }
  func.func @transform_7(%arg0: i32, %arg1: i32) -> (i32, i32, i32) {
    %c0_i32 = arith.constant 0 : i32
    %c0_i32_0 = arith.constant 0 : i32
    %c0_i32_1 = arith.constant 0 : i32
    %c0_i32_2 = arith.constant 0 : i32
    return %c0_i32, %c0_i32_0, %c0_i32_1 : i32, i32, i32
  }
  func.func @transform_8(%arg0: i32, %arg1: i32) -> (i32, i32, i32) {
    %c0_i32 = arith.constant 0 : i32
    %c0_i32_0 = arith.constant 0 : i32
    %c0_i32_1 = arith.constant 0 : i32
    %c0_i32_2 = arith.constant 0 : i32
    return %c0_i32, %c0_i32_0, %c0_i32_1 : i32, i32, i32
  }
  func.func @transform_9(%arg0: i32, %arg1: i32) -> (i32, i32, i32) {
    %c0_i32 = arith.constant 0 : i32
    %c0_i32_0 = arith.constant 0 : i32
    %c0_i32_1 = arith.constant 0 : i32
    %c0_i32_2 = arith.constant 0 : i32
    return %c0_i32, %c0_i32_0, %c0_i32_1 : i32, i32, i32
  }
  func.func @transform_10(%arg0: i32, %arg1: i32) -> (i32, i32) {
    %c0_i32 = arith.constant 0 : i32
    %c0_i32_0 = arith.constant 0 : i32
    %c0_i32_1 = arith.constant 0 : i32
    return %c0_i32, %c0_i32_0 : i32, i32
  }
  func.func @transform_11(%arg0: i32, %arg1: i32) -> (i32, i32, i32) {
    %c0_i32 = arith.constant 0 : i32
    %c0_i32_0 = arith.constant 0 : i32
    return %arg0, %arg1, %c0_i32 : i32, i32, i32
  }
}

</mosaic_0001>

<llo_original>
// kernel: tpu_custom_call.1
$region0: #{tpu_custom_call.1}
  #allocation0 [shape = 'u32[]', space=smem, size = 0x4, offset = 0x4, fixed_abs, tag = 'smem constant byte address 0x4 - core index']
  #allocation1 [shape = 'u32[144,128]{1,0:T(1,128)}', space=vmem, size = 0x12000, scoped, tag = 'internal scratch']
  #allocation2 [shape = 'f32[4,8,8]{2,1,0:T(8,128)}', space=vmem, size = 0x4000, scoped, tag = 'scratch operand']
  #allocation3 [shape = 'f32[4,8,8]{2,1,0:T(8,128)}', space=vmem, size = 0x4000, scoped, tag = 'scratch operand']
  %s0 = inlined_call_operand.vmem [shape: f32[2,8,32], index: 0, kind: input, shape index: {}]
  %s1 = inlined_call_operand.vmem [shape: f32[2,8,32], index: 1, kind: input, shape index: {}]
  %s2 = inlined_call_operand.vmem [shape: f32[2,8,32], index: 2, kind: input, shape index: {}]
  %s3 = inlined_call_operand.vmem [shape: f32[4,32,8], index: 3, kind: input, shape index: {}]
  %s4 = inlined_call_operand.vmem [shape: f32[4,1,8], index: 4, kind: input, shape index: {}]
  %s5 = inlined_call_operand.vmem [shape: f32[4,32,8], index: 5, kind: input, shape index: {}]
  %s6 = inlined_call_operand.vmem [shape: f32[4,1,8], index: 6, kind: input, shape index: {}]
  %s7 = inlined_call_operand.vmem [shape: f32[4,32,8], index: 7, kind: input, shape index: {}]
  %s8 = inlined_call_operand.vmem [shape: f32[4,1,8], index: 8, kind: input, shape index: {}]
  %s9 = inlined_call_operand.vmem [shape: f32[4,8,32], index: 9, kind: input, shape index: {}]
  %s10 = inlined_call_operand.vmem [shape: f32[1,32], index: 10, kind: input, shape index: {}]
  %s11 = inlined_call_operand.hbm [shape: f32[2,8,32], index: 11, kind: output, shape index: {}]
  %s12 = sld [smem:[#allocation0]]
  $region81: #{tpu_custom_call.1} parent=0
    _
  %s14 = ssub.s32 1, %s12
  %s15 = scalar_select 0, %s14, %s12
  $region1: #{tpu_custom_call.1} parent=0
    #allocation4 [shape = 'u8[8192]{0}', space=vmem, size = 0x2000, scoped, tag = 'output window, operand 0']
    #allocation5 [shape = 's32[2]{0}', space=sflag, size = 0x8, scoped, tag = 'scoped memory for tpu_custom_call.1']
    %16 = vsyncpa [#allocation5], 0
    %s17 = scalar_lea.sflag [#allocation5], 1
    %18 = vsyncpa %s17, 0
    loop: start=0, step=1, limit=4
    $region2: #{tpu_custom_call.1} parent=1 // loop_pre_header
      _
    $region3: #{tpu_custom_call.1} parent=1 // loop_header
      %s20 = sphi 0, %s24
      %p21 = scmp.ge.s32.totalorder %s20, 4
      %s27 = sphi 0, %s39
      %s28 = sphi 0, %s35
      %s29 = sphi 0, %s27
      %s30 = sphi 0, %s28
      %s31 = sphi 0, %s29
      %s32 = sphi 0, %s30
      %s44 = sphi 0, %s46
      %s47 = sphi 0, %s44
      %s48 = sphi 0, %s47
      %s64 = sphi 0, %s48
      %s70 = sphi 0, %s72
      %s73 = sphi 0, %s70
      %s74 = sphi 0, %s73
      %s90 = sphi 0, %s74
      %s96 = sphi 0, %s98
      %s99 = sphi 0, %s96
      %s100 = sphi 0, %s99
      %s116 = sphi 0, %s100
      %s120 = sphi 0, %s120
      %s122 = sphi 0, %s120
      %s123 = sphi 0, %s122
      %s137 = sphi 0, %s123
      %s141 = sphi 0, %s141
      %s143 = sphi 0, %s141
      %s144 = sphi 0, %s143
      %s158 = sphi 0, %s144
      %s162 = sphi 0, %s162
      %s164 = sphi 0, %s162
      %s165 = sphi 0, %s164
      %s179 = sphi 0, %s165
      %s183 = sphi 0, %s183
      %s185 = sphi 0, %s183
      %s186 = sphi 0, %s185
      %s200 = sphi 0, %s186
      %s204 = sphi 0, %s204
      %s206 = sphi 0, %s204
      %s207 = sphi 0, %s206
      %s221 = sphi 0, %s207
      %s225 = sphi 0, %s225
      %s227 = sphi 0, %s225
      %s228 = sphi 0, %s227
      %s242 = sphi 0, %s228
      %s246 = sphi 0, %s246
      %s248 = sphi 0, %s246
      %s249 = sphi 0, %s248
      %s263 = sphi 0, %s249
      %s267 = sphi 0, %s267
      %s269 = sphi 0, %s267
      %s270 = sphi 0, %s269
      %s284 = sphi 0, %s270
      %s292 = sphi 0, %s294
      %s295 = sphi 0, %s292
      %s296 = sphi 0, %s295
      %s312 = sphi 0, %s296
    $region4: #{tpu_custom_call.1} parent=1 // loop_header_branch
      %23 = sbr.rel (%p21) target = $region8
    $region5: #{tpu_custom_call.1} parent=1 // loop_body
      %s25 = ssub.s32 %s20, 1
      %s26 = ssub.s32 %s20, 2
      %s33 = sadd.s32 1, %s28
      %p34 = scmp.ge.s32.totalorder %s33, 1
      %s35 = scalar_select %p34, 0, %s33
      %s36 = sadd.s32 1, %s27
      %s37 = scalar_select %p34, %s36, %s27
      %p38 = scmp.ge.s32.totalorder %s37, 2
      %s39 = scalar_select %p38, 0, %s37
      %s40 = ssub.s32 %s27, %s39
      %s41 = ssub.s32 %s28, %s35
      %s42 = sor.u32 %s40, %s41
      %p43 = scmp.eq.s32.totalorder %s42, 0
      %s45 = sadd.s32 %s44, 1
      %s46 = scalar_select %p43, %s44, %s45
      %p49 = pneg %p43
      %p50 = scmp.eq.s32.totalorder %s20, 1
      %p51 = por %p49, %p50
      %p52 = scmp.ne.s32.totalorder %s44, %s47
      %p53 = scmp.eq.s32.totalorder %s20, 0
      %p54 = por %p52, %p53
      %p55 = scmp.ne.s32.totalorder %s44, %s47
      %p56 = scmp.eq.s32.totalorder %s25, 1
      %p57 = por %p55, %p56
      %p58 = scmp.ne.s32.totalorder %s47, %s48
      %p59 = scmp.eq.s32.totalorder %s25, 0
      %p60 = por %p58, %p59
      %p61 = scmp.ne.s32.totalorder %s47, %s48
      %p62 = scmp.eq.s32.totalorder %s26, 1
      %p63 = por %p61, %p62
      %p65 = scmp.ne.s32.totalorder %s48, %s64
      %p66 = scmp.eq.s32.totalorder %s26, 0
      %p67 = por %p65, %p66
      %s68 = ssub.s32 %s27, %s39
      %p69 = scmp.eq.s32.totalorder %s68, 0
      %s71 = sadd.s32 %s70, 1
      %s72 = scalar_select %p69, %s70, %s71
      %p75 = pneg %p69
      %p76 = scmp.eq.s32.totalorder %s20, 1
      %p77 = por %p75, %p76
      %p78 = scmp.ne.s32.totalorder %s70, %s73
      %p79 = scmp.eq.s32.totalorder %s20, 0
      %p80 = por %p78, %p79
      %p81 = scmp.ne.s32.totalorder %s70, %s73
      %p82 = scmp.eq.s32.totalorder %s25, 1
      %p83 = por %p81, %p82
      %p84 = scmp.ne.s32.totalorder %s73, %s74
      %p85 = scmp.eq.s32.totalorder %s25, 0
      %p86 = por %p84, %p85
      %p87 = scmp.ne.s32.totalorder %s73, %s74
      %p88 = scmp.eq.s32.totalorder %s26, 1
      %p89 = por %p87, %p88
      %p91 = scmp.ne.s32.totalorder %s74, %s90
      %p92 = scmp.eq.s32.totalorder %s26, 0
      %p93 = por %p91, %p92
      %s94 = ssub.s32 %s27, %s39
      %p95 = scmp.eq.s32.totalorder %s94, 0
      %s97 = sadd.s32 %s96, 1
      %s98 = scalar_select %p95, %s96, %s97
      %p101 = pneg %p95
      %p102 = scmp.eq.s32.totalorder %s20, 1
      %p103 = por %p101, %p102
      %p104 = scmp.ne.s32.totalorder %s96, %s99
      %p105 = scmp.eq.s32.totalorder %s20, 0
      %p106 = por %p104, %p105
      %p107 = scmp.ne.s32.totalorder %s96, %s99
      %p108 = scmp.eq.s32.totalorder %s25, 1
      %p109 = por %p107, %p108
      %p110 = scmp.ne.s32.totalorder %s99, %s100
      %p111 = scmp.eq.s32.totalorder %s25, 0
      %p112 = por %p110, %p111
      %p113 = scmp.ne.s32.totalorder %s99, %s100
      %p114 = scmp.eq.s32.totalorder %s26, 1
      %p115 = por %p113, %p114
      %p117 = scmp.ne.s32.totalorder %s100, %s116
      %p118 = scmp.eq.s32.totalorder %s26, 0
      %p119 = por %p117, %p118
      %s121 = sadd.s32 %s120, 1
      %p124 = scmp.eq.s32.totalorder %s20, 1
      %p125 = scmp.ne.s32.totalorder %s120, %s122
      %p126 = scmp.eq.s32.totalorder %s20, 0
      %p127 = por %p125, %p126
      %p128 = scmp.ne.s32.totalorder %s120, %s122
      %p129 = scmp.eq.s32.totalorder %s25, 1
      %p130 = por %p128, %p129
      %p131 = scmp.ne.s32.totalorder %s122, %s123
      %p132 = scmp.eq.s32.totalorder %s25, 0
      %p133 = por %p131, %p132
      %p134 = scmp.ne.s32.totalorder %s122, %s123
      %p135 = scmp.eq.s32.totalorder %s26, 1
      %p136 = por %p134, %p135
      %p138 = scmp.ne.s32.totalorder %s123, %s137
      %p139 = scmp.eq.s32.totalorder %s26, 0
      %p140 = por %p138, %p139
      %s142 = sadd.s32 %s141, 1
      %p145 = scmp.eq.s32.totalorder %s20, 1
      %p146 = scmp.ne.s32.totalorder %s141, %s143
      %p147 = scmp.eq.s32.totalorder %s20, 0
      %p148 = por %p146, %p147
      %p149 = scmp.ne.s32.totalorder %s141, %s143
      %p150 = scmp.eq.s32.totalorder %s25, 1
      %p151 = por %p149, %p150
      %p152 = scmp.ne.s32.totalorder %s143, %s144
      %p153 = scmp.eq.s32.totalorder %s25, 0
      %p154 = por %p152, %p153
      %p155 = scmp.ne.s32.totalorder %s143, %s144
      %p156 = scmp.eq.s32.totalorder %s26, 1
      %p157 = por %p155, %p156
      %p159 = scmp.ne.s32.totalorder %s144, %s158
      %p160 = scmp.eq.s32.totalorder %s26, 0
      %p161 = por %p159, %p160
      %s163 = sadd.s32 %s162, 1
      %p166 = scmp.eq.s32.totalorder %s20, 1
      %p167 = scmp.ne.s32.totalorder %s162, %s164
      %p168 = scmp.eq.s32.totalorder %s20, 0
      %p169 = por %p167, %p168
      %p170 = scmp.ne.s32.totalorder %s162, %s164
      %p171 = scmp.eq.s32.totalorder %s25, 1
      %p172 = por %p170, %p171
      %p173 = scmp.ne.s32.totalorder %s164, %s165
      %p174 = scmp.eq.s32.totalorder %s25, 0
      %p175 = por %p173, %p174
      %p176 = scmp.ne.s32.totalorder %s164, %s165
      %p177 = scmp.eq.s32.totalorder %s26, 1
      %p178 = por %p176, %p177
      %p180 = scmp.ne.s32.totalorder %s165, %s179
      %p181 = scmp.eq.s32.totalorder %s26, 0
      %p182 = por %p180, %p181
      %s184 = sadd.s32 %s183, 1
      %p187 = scmp.eq.s32.totalorder %s20, 1
      %p188 = scmp.ne.s32.totalorder %s183, %s185
      %p189 = scmp.eq.s32.totalorder %s20, 0
      %p190 = por %p188, %p189
      %p191 = scmp.ne.s32.totalorder %s183, %s185
      %p192 = scmp.eq.s32.totalorder %s25, 1
      %p193 = por %p191, %p192
      %p194 = scmp.ne.s32.totalorder %s185, %s186
      %p195 = scmp.eq.s32.totalorder %s25, 0
      %p196 = por %p194, %p195
      %p197 = scmp.ne.s32.totalorder %s185, %s186
      %p198 = scmp.eq.s32.totalorder %s26, 1
      %p199 = por %p197, %p198
      %p201 = scmp.ne.s32.totalorder %s186, %s200
      %p202 = scmp.eq.s32.totalorder %s26, 0
      %p203 = por %p201, %p202
      %s205 = sadd.s32 %s204, 1
      %p208 = scmp.eq.s32.totalorder %s20, 1
      %p209 = scmp.ne.s32.totalorder %s204, %s206
      %p210 = scmp.eq.s32.totalorder %s20, 0
      %p211 = por %p209, %p210
      %p212 = scmp.ne.s32.totalorder %s204, %s206
      %p213 = scmp.eq.s32.totalorder %s25, 1
      %p214 = por %p212, %p213
      %p215 = scmp.ne.s32.totalorder %s206, %s207
      %p216 = scmp.eq.s32.totalorder %s25, 0
      %p217 = por %p215, %p216
      %p218 = scmp.ne.s32.totalorder %s206, %s207
      %p219 = scmp.eq.s32.totalorder %s26, 1
      %p220 = por %p218, %p219
      %p222 = scmp.ne.s32.totalorder %s207, %s221
      %p223 = scmp.eq.s32.totalorder %s26, 0
      %p224 = por %p222, %p223
      %s226 = sadd.s32 %s225, 1
      %p229 = scmp.eq.s32.totalorder %s20, 1
      %p230 = scmp.ne.s32.totalorder %s225, %s227
      %p231 = scmp.eq.s32.totalorder %s20, 0
      %p232 = por %p230, %p231
      %p233 = scmp.ne.s32.totalorder %s225, %s227
      %p234 = scmp.eq.s32.totalorder %s25, 1
      %p235 = por %p233, %p234
      %p236 = scmp.ne.s32.totalorder %s227, %s228
      %p237 = scmp.eq.s32.totalorder %s25, 0
      %p238 = por %p236, %p237
      %p239 = scmp.ne.s32.totalorder %s227, %s228
      %p240 = scmp.eq.s32.totalorder %s26, 1
      %p241 = por %p239, %p240
      %p243 = scmp.ne.s32.totalorder %s228, %s242
      %p244 = scmp.eq.s32.totalorder %s26, 0
      %p245 = por %p243, %p244
      %s247 = sadd.s32 %s246, 1
      %p250 = scmp.eq.s32.totalorder %s20, 1
      %p251 = scmp.ne.s32.totalorder %s246, %s248
      %p252 = scmp.eq.s32.totalorder %s20, 0
      %p253 = por %p251, %p252
      %p254 = scmp.ne.s32.totalorder %s246, %s248
      %p255 = scmp.eq.s32.totalorder %s25, 1
      %p256 = por %p254, %p255
      %p257 = scmp.ne.s32.totalorder %s248, %s249
      %p258 = scmp.eq.s32.totalorder %s25, 0
      %p259 = por %p257, %p258
      %p260 = scmp.ne.s32.totalorder %s248, %s249
      %p261 = scmp.eq.s32.totalorder %s26, 1
      %p262 = por %p260, %p261
      %p264 = scmp.ne.s32.totalorder %s249, %s263
      %p265 = scmp.eq.s32.totalorder %s26, 0
      %p266 = por %p264, %p265
      %s268 = sadd.s32 %s267, 1
      %p271 = scmp.eq.s32.totalorder %s20, 1
      %p272 = scmp.ne.s32.totalorder %s267, %s269
      %p273 = scmp.eq.s32.totalorder %s20, 0
      %p274 = por %p272, %p273
      %p275 = scmp.ne.s32.totalorder %s267, %s269
      %p276 = scmp.eq.s32.totalorder %s25, 1
      %p277 = por %p275, %p276
      %p278 = scmp.ne.s32.totalorder %s269, %s270
      %p279 = scmp.eq.s32.totalorder %s25, 0
      %p280 = por %p278, %p279
      %p281 = scmp.ne.s32.totalorder %s269, %s270
      %p282 = scmp.eq.s32.totalorder %s26, 1
      %p283 = por %p281, %p282
      %p285 = scmp.ne.s32.totalorder %s270, %s284
      %p286 = scmp.eq.s32.totalorder %s26, 0
      %p287 = por %p285, %p286
      %s288 = ssub.s32 %s27, %s39
      %s289 = ssub.s32 %s28, %s35
      %s290 = sor.u32 %s288, %s289
      %p291 = scmp.eq.s32.totalorder %s290, 0
      %s293 = sadd.s32 %s292, 1
      %s294 = scalar_select %p291, %s292, %s293
      %p297 = pneg %p291
      %p298 = scmp.eq.s32.totalorder %s20, 1
      %p299 = por %p297, %p298
      %p300 = scmp.ne.s32.totalorder %s292, %s295
      %p301 = scmp.eq.s32.totalorder %s20, 0
      %p302 = por %p300, %p301
      %p303 = scmp.ne.s32.totalorder %s292, %s295
      %p304 = scmp.eq.s32.totalorder %s25, 1
      %p305 = por %p303, %p304
      %p306 = scmp.ne.s32.totalorder %s295, %s296
      %p307 = scmp.eq.s32.totalorder %s25, 0
      %p308 = por %p306, %p307
      %p309 = scmp.ne.s32.totalorder %s295, %s296
      %p310 = scmp.eq.s32.totalorder %s26, 1
      %p311 = por %p309, %p310
      %p313 = scmp.ne.s32.totalorder %s296, %s312
      %p314 = scmp.eq.s32.totalorder %s26, 0
      %p315 = por %p313, %p314
      %p316 = scmp.le.s32.totalorder 1, %s20
      %p317 = scmp.lt.s32.totalorder %s20, 3
      %p318 = pnand %p316, %p317
      %p319 = pneg %p318
      // Predicated region
      $region9: #{tpu_custom_call.1} parent=5 // pred_check
        _
      $region10: #{tpu_custom_call.1} parent=5 // pred_check_branch
        %321 = sbr.rel (%p318) target = $region12
      $region11: #{tpu_custom_call.1} parent=5 // pred_region
        %s322 = ssub.s32 %s20, 1
        // Predicated region
        $region13: #{tpu_custom_call.1} parent=11 // pred_check
          %p323 = pneg %p133
        $region14: #{tpu_custom_call.1} parent=11 // pred_check_branch
          %325 = sbr.rel (%p323) target = $region16
        $region15: #{tpu_custom_call.1} parent=11 // pred_region
          _
        $region16: #{tpu_custom_call.1} parent=11 // pred_fallthru
          _
        // Predicated region
        $region17: #{tpu_custom_call.1} parent=11 // pred_check
          %p326 = pneg %p154
        $region18: #{tpu_custom_call.1} parent=11 // pred_check_branch
          %328 = sbr.rel (%p326) target = $region20
        $region19: #{tpu_custom_call.1} parent=11 // pred_region
          _
        $region20: #{tpu_custom_call.1} parent=11 // pred_fallthru
          _
        // Predicated region
        $region21: #{tpu_custom_call.1} parent=11 // pred_check
          %p329 = pneg %p175
        $region22: #{tpu_custom_call.1} parent=11 // pred_check_branch
          %331 = sbr.rel (%p329) target = $region24
        $region23: #{tpu_custom_call.1} parent=11 // pred_region
          _
        $region24: #{tpu_custom_call.1} parent=11 // pred_fallthru
          _
        // Predicated region
        $region25: #{tpu_custom_call.1} parent=11 // pred_check
          %p332 = pneg %p196
        $region26: #{tpu_custom_call.1} parent=11 // pred_check_branch
          %334 = sbr.rel (%p332) target = $region28
        $region27: #{tpu_custom_call.1} parent=11 // pred_region
          _
        $region28: #{tpu_custom_call.1} parent=11 // pred_fallthru
          _
        // Predicated region
        $region29: #{tpu_custom_call.1} parent=11 // pred_check
          %p335 = pneg %p217
        $region30: #{tpu_custom_call.1} parent=11 // pred_check_branch
          %337 = sbr.rel (%p335) target = $region32
        $region31: #{tpu_custom_call.1} parent=11 // pred_region
          _
        $region32: #{tpu_custom_call.1} parent=11 // pred_fallthru
          _
        // Predicated region
        $region33: #{tpu_custom_call.1} parent=11 // pred_check
          %p338 = pneg %p238
        $region34: #{tpu_custom_call.1} parent=11 // pred_check_branch
          %340 = sbr.rel (%p338) target = $region36
        $region35: #{tpu_custom_call.1} parent=11 // pred_region
          _
        $region36: #{tpu_custom_call.1} parent=11 // pred_fallthru
          _
        // Predicated region
        $region37: #{tpu_custom_call.1} parent=11 // pred_check
          %p341 = pneg %p259
        $region38: #{tpu_custom_call.1} parent=11 // pred_check_branch
          %343 = sbr.rel (%p341) target = $region40
        $region39: #{tpu_custom_call.1} parent=11 // pred_region
          _
        $region40: #{tpu_custom_call.1} parent=11 // pred_fallthru
          _
        // Predicated region
        $region41: #{tpu_custom_call.1} parent=11 // pred_check
          %p344 = pneg %p280
        $region42: #{tpu_custom_call.1} parent=11 // pred_check_branch
          %346 = sbr.rel (%p344) target = $region44
        $region43: #{tpu_custom_call.1} parent=11 // pred_region
          _
        $region44: #{tpu_custom_call.1} parent=11 // pred_fallthru
          _
      $region12: #{tpu_custom_call.1} parent=5 // pred_fallthru
        _
      %p347 = scmp.lt.s32.totalorder %s20, 2
      // Predicated region
      $region45: #{tpu_custom_call.1} parent=5 // pred_check
        %p348 = pneg %p347
      $region46: #{tpu_custom_call.1} parent=5 // pred_check_branch
        %350 = sbr.rel (%p348) target = $region48
      $region47: #{tpu_custom_call.1} parent=5 // pred_region
        // Predicated region
        $region49: #{tpu_custom_call.1} parent=47 // pred_check
          %p351 = pneg %p54
        $region50: #{tpu_custom_call.1} parent=47 // pred_check_branch
          %353 = sbr.rel (%p351) target = $region52
        $region51: #{tpu_custom_call.1} parent=47 // pred_region
          %p354 = scmp.lt.s32.totalorder %s27, 1
          %s355 = scalar_select %p354, %s27, 1
          %p356 = scmp.lt.s32.totalorder %s28, 0
          %s357 = scalar_select %p356, %s28, 0
          %s358 = sadd.s32 %s357, %s355
          %s359 = smul.addr %s358, 8
          %s360 = scalar_lea.vmem %s0, %s359
        $region52: #{tpu_custom_call.1} parent=47 // pred_fallthru
          _
        // Predicated region
        $region53: #{tpu_custom_call.1} parent=47 // pred_check
          %p361 = pneg %p80
        $region54: #{tpu_custom_call.1} parent=47 // pred_check_branch
          %363 = sbr.rel (%p361) target = $region56
        $region55: #{tpu_custom_call.1} parent=47 // pred_region
          %p364 = scmp.lt.s32.totalorder %s27, 1
          %s365 = scalar_select %p364, %s27, 1
          %s366 = smul.addr %s365, 8
          %s367 = scalar_lea.vmem %s1, %s366
        $region56: #{tpu_custom_call.1} parent=47 // pred_fallthru
          _
        // Predicated region
        $region57: #{tpu_custom_call.1} parent=47 // pred_check
          %p368 = pneg %p106
        $region58: #{tpu_custom_call.1} parent=47 // pred_check_branch
          %370 = sbr.rel (%p368) target = $region60
        $region59: #{tpu_custom_call.1} parent=47 // pred_region
          %p371 = scmp.lt.s32.totalorder %s27, 1
          %s372 = scalar_select %p371, %s27, 1
          %s373 = smul.addr %s372, 8
          %s374 = scalar_lea.vmem %s2, %s373
        $region60: #{tpu_custom_call.1} parent=47 // pred_fallthru
          _
      $region48: #{tpu_custom_call.1} parent=5 // pred_fallthru
        _
      %p375 = scmp.le.s32.totalorder 1, %s20
      %p376 = scmp.lt.s32.totalorder %s20, 3
      %p377 = pnand %p375, %p376
      %p378 = pneg %p377
      // Predicated region
      $region61: #{tpu_custom_call.1} parent=5 // pred_check
        _
      $region62: #{tpu_custom_call.1} parent=5 // pred_check_branch
        %380 = sbr.rel (%p377) target = $region64
      $region63: #{tpu_custom_call.1} parent=5 // pred_region
        %s381 = ssub.s32 %s20, 1
        %p382 = scmp.lt.s32.totalorder %s29, 1
        %s383 = scalar_select %p382, %s29, 1
        %p384 = scmp.lt.s32.totalorder %s30, 0
        %s385 = scalar_select %p384, %s30, 0
        %s386 = sadd.s32 %s385, %s383
        %s387 = smul.addr %s386, 8
        %s388 = scalar_lea.vmem %s0, %s387
        %p389 = pneg %p60
        %p390 = pneg %p57
        %p391 = scmp.lt.s32.totalorder %s29, 1
        %s392 = scalar_select %p391, %s29, 1
        %s393 = smul.addr %s392, 8
        %s394 = scalar_lea.vmem %s1, %s393
        %p395 = pneg %p86
        %p396 = pneg %p83
        %p397 = scmp.lt.s32.totalorder %s29, 1
        %s398 = scalar_select %p397, %s29, 1
        %s399 = smul.addr %s398, 8
        %s400 = scalar_lea.vmem %s2, %s399
        %p401 = pneg %p112
        %p402 = pneg %p109
        %p403 = pneg %p133
        %p404 = pneg %p130
        %p405 = pneg %p154
        %p406 = pneg %p151
        %p407 = pneg %p175
        %p408 = pneg %p172
        %p409 = pneg %p196
        %p410 = pneg %p193
        %p411 = pneg %p217
        %p412 = pneg %p214
        %p413 = pneg %p238
        %p414 = pneg %p235
        %p415 = pneg %p259
        %p416 = pneg %p256
        %p417 = pneg %p280
        %p418 = pneg %p277
        %p419 = pneg %p308
        %p420 = pneg %p305
        %s421 = sand.u32 %s295, 1
        %s422 = scalar_lea.sflag [#allocation5], %s421
        %s423 = sand.u32 %s295, 1
        %s424 = smul.addr %s423, 8
        %s425 = scalar_lea.vmem [#allocation4], %s424
        %p426 = scmp.lt.s32.totalorder %s29, 1
        %s427 = scalar_select %p426, %s29, 1
        %p428 = scmp.lt.s32.totalorder %s30, 0
        %s429 = scalar_select %p428, %s30, 0
        %s430 = sadd.s32 %s429, %s427
        %s431 = smul.addr %s430, 8
        %s432 = scalar_lea.vmem %s0, %s431
        %p433 = scmp.lt.s32.totalorder %s29, 1
        %s434 = scalar_select %p433, %s29, 1
        %s435 = smul.addr %s434, 8
        %s436 = scalar_lea.vmem %s1, %s435
        %p437 = scmp.lt.s32.totalorder %s29, 1
        %s438 = scalar_select %p437, %s29, 1
        %s439 = smul.addr %s438, 8
        %s440 = scalar_lea.vmem %s2, %s439
        %p441 = scmp.eq.s32.totalorder %s30, 0
        // Predicated region
        $region65: #{tpu_custom_call.1} parent=63 // pred_check
          %p442 = pneg %p441
        $region66: #{tpu_custom_call.1} parent=63 // pred_check_branch
          %444 = sbr.rel (%p442) target = $region68
        $region67: #{tpu_custom_call.1} parent=63 // pred_region
          %v445 = vld [vmem:[%s436] sm:$0xff]
          %v446 = vld [vmem:[%s440] sm:$0xff]
          %v447 = vld [vmem:[%s5] sm:$0xff]
          %v448 = vld [vmem:[%s5 + $0x8] sm:$0xff]
          %v449 = vld [vmem:[%s5 + $0x10] sm:$0xff]
          %v450 = vld [vmem:[%s5 + $0x18] sm:$0xff]
          %v451 = vld [vmem:[%s6] sm:$0x1]
          %v453 = vlaneseq
          %v454 = vshrl.u32 %v453, 7
          %v455 = vsub.s32 0, %v454
          %v456 = vrot.slane %v451, %v455
          %vm458 = vcmask 261120
          %v460 = vsel %vm458, %v445, 0
          %462 = vmatprep.subr.mxu0 0.0
          %463 = vmatpush1.msra.mxu0 %v447
          %464 = vmatprep.subr.mxu0 0.0
          %465 = vmatpush1.msra.mxu0 %v448
          %466 = vmatprep.subr.mxu0 0.0
          %467 = vmatpush1.msra.mxu0 %v449
          %468 = vmatprep.subr.mxu0 0.0
          %469 = vmatpush1.msra.mxu0 %v450
          %470 = vmatprep.subr.mxu0 0.0
          %471 = vmatpush1.msra.mxu0 0.0
          %472 = vmatprep.subr.mxu0 0.0
          %473 = vmatpush1.msra.mxu0 0.0
          %474 = vmatprep.subr.mxu0 0.0
          %475 = vmatpush1.msra.mxu0 0.0
          %476 = vmatprep.subr.mxu0 0.0
          %477 = vmatpush1.msra.mxu0 0.0
          %478 = vmatprep.subr.mxu0 0.0
          %479 = vmatpush1.msra.mxu0 0.0
          %480 = vmatprep.subr.mxu0 0.0
          %481 = vmatpush1.msra.mxu0 0.0
          %482 = vmatprep.subr.mxu0 0.0
          %483 = vmatpush1.msra.mxu0 0.0
          %484 = vmatprep.subr.mxu0 0.0
          %485 = vmatpush1.msra.mxu0 0.0
          %486 = vmatprep.subr.mxu0 0.0
          %487 = vmatpush1.msra.mxu0 0.0
          %488 = vmatprep.subr.mxu0 0.0
          %489 = vmatpush1.msra.mxu0 0.0
          %490 = vmatprep.subr.mxu0 0.0
          %491 = vmatpush1.msra.mxu0 0.0
          %492 = vmatprep.subr.mxu0 0.0
          %493 = vmatpush1.msra.mxu0 0.0
          %494 = vmatprep.subr.mxu0 0.0
          %495 = vmatpush1.msra.mxu0 0.0
          %496 = vmatprep.subr.mxu0 0.0
          %497 = vmatpush1.msra.mxu0 0.0
          %498 = vmatprep.subr.mxu0 0.0
          %499 = vmatpush1.msra.mxu0 0.0
          %500 = vmatprep.subr.mxu0 0.0
          %501 = vmatpush1.msra.mxu0 0.0
          %502 = vmatprep.subr.mxu0 0.0
          %503 = vmatpush1.msra.mxu0 0.0
          %504 = vmatprep.subr.mxu0 0.0
          %505 = vmatpush1.msra.mxu0 0.0
          %506 = vmatprep.subr.mxu0 0.0
          %507 = vmatpush1.msra.mxu0 0.0
          %508 = vmatprep.subr.mxu0 0.0
          %509 = vmatpush1.msra.mxu0 0.0
          %510 = vmatprep.subr.mxu0 0.0
          %511 = vmatpush1.msra.mxu0 0.0
          %512 = vmatprep.subr.mxu0 0.0
          %513 = vmatpush1.msra.mxu0 0.0
          %514 = vmatprep.subr.mxu0 0.0
          %515 = vmatpush1.msra.mxu0 0.0
          %516 = vmatprep.subr.mxu0 0.0
          %517 = vmatpush1.msra.mxu0 0.0
          %518 = vmatprep.subr.mxu0 0.0
          %519 = vmatpush1.msra.mxu0 0.0
          %520 = vmatprep.subr.mxu0 0.0
          %521 = vmatpush1.msra.mxu0 0.0
          %522 = vmatprep.subr.mxu0 0.0
          %523 = vmatpush1.msra.mxu0 0.0
          %524 = vmatprep.subr.mxu0 0.0
          %525 = vmatpush1.msra.mxu0 0.0
          %526 = vmatprep.mubr.f32.mxu0 0.0
          %527 = vmatmul.mubr.f32.gmra.mrb[0].mxu0 %v460
          %v528 = vpop.f32.mrb[0].mxu0
          %v529 = vadd.f32 %v456, %v528
          %v530 = vpop.f32.mrb[0].mxu0
          %531 = vdwg.mxu0
          %v532 = vld [vmem:[%s7] sm:$0xff]
          %v533 = vld [vmem:[%s7 + $0x8] sm:$0xff]
          %v534 = vld [vmem:[%s7 + $0x10] sm:$0xff]
          %v535 = vld [vmem:[%s7 + $0x18] sm:$0xff]
          %v536 = vld [vmem:[%s8] sm:$0x1]
          %v538 = vlaneseq
          %v539 = vshrl.u32 %v538, 7
          %v540 = vsub.s32 0, %v539
          %v541 = vrot.slane %v536, %v540
          %v544 = vsel %vm458, %v446, 0
          %546 = vmatprep.subr.mxu0 0.0
          %547 = vmatpush1.msra.mxu0 %v532
          %548 = vmatprep.subr.mxu0 0.0
          %549 = vmatpush1.msra.mxu0 %v533
          %550 = vmatprep.subr.mxu0 0.0
          %551 = vmatpush1.msra.mxu0 %v534
          %552 = vmatprep.subr.mxu0 0.0
          %553 = vmatpush1.msra.mxu0 %v535
          %554 = vmatprep.subr.mxu0 0.0
          %555 = vmatpush1.msra.mxu0 0.0
          %556 = vmatprep.subr.mxu0 0.0
          %557 = vmatpush1.msra.mxu0 0.0
          %558 = vmatprep.subr.mxu0 0.0
          %559 = vmatpush1.msra.mxu0 0.0
          %560 = vmatprep.subr.mxu0 0.0
          %561 = vmatpush1.msra.mxu0 0.0
          %562 = vmatprep.subr.mxu0 0.0
          %563 = vmatpush1.msra.mxu0 0.0
          %564 = vmatprep.subr.mxu0 0.0
          %565 = vmatpush1.msra.mxu0 0.0
          %566 = vmatprep.subr.mxu0 0.0
          %567 = vmatpush1.msra.mxu0 0.0
          %568 = vmatprep.subr.mxu0 0.0
          %569 = vmatpush1.msra.mxu0 0.0
          %570 = vmatprep.subr.mxu0 0.0
          %571 = vmatpush1.msra.mxu0 0.0
          %572 = vmatprep.subr.mxu0 0.0
          %573 = vmatpush1.msra.mxu0 0.0
          %574 = vmatprep.subr.mxu0 0.0
          %575 = vmatpush1.msra.mxu0 0.0
          %576 = vmatprep.subr.mxu0 0.0
          %577 = vmatpush1.msra.mxu0 0.0
          %578 = vmatprep.subr.mxu0 0.0
          %579 = vmatpush1.msra.mxu0 0.0
          %580 = vmatprep.subr.mxu0 0.0
          %581 = vmatpush1.msra.mxu0 0.0
          %582 = vmatprep.subr.mxu0 0.0
          %583 = vmatpush1.msra.mxu0 0.0
          %584 = vmatprep.subr.mxu0 0.0
          %585 = vmatpush1.msra.mxu0 0.0
          %586 = vmatprep.subr.mxu0 0.0
          %587 = vmatpush1.msra.mxu0 0.0
          %588 = vmatprep.subr.mxu0 0.0
          %589 = vmatpush1.msra.mxu0 0.0
          %590 = vmatprep.subr.mxu0 0.0
          %591 = vmatpush1.msra.mxu0 0.0
          %592 = vmatprep.subr.mxu0 0.0
          %593 = vmatpush1.msra.mxu0 0.0
          %594 = vmatprep.subr.mxu0 0.0
          %595 = vmatpush1.msra.mxu0 0.0
          %596 = vmatprep.subr.mxu0 0.0
          %597 = vmatpush1.msra.mxu0 0.0
          %598 = vmatprep.subr.mxu0 0.0
          %599 = vmatpush1.msra.mxu0 0.0
          %600 = vmatprep.subr.mxu0 0.0
          %601 = vmatpush1.msra.mxu0 0.0
          %602 = vmatprep.subr.mxu0 0.0
          %603 = vmatpush1.msra.mxu0 0.0
          %604 = vmatprep.subr.mxu0 0.0
          %605 = vmatpush1.msra.mxu0 0.0
          %606 = vmatprep.subr.mxu0 0.0
          %607 = vmatpush1.msra.mxu0 0.0
          %608 = vmatprep.subr.mxu0 0.0
          %609 = vmatpush1.msra.mxu0 0.0
          %610 = vmatprep.mubr.f32.mxu0 0.0
          %611 = vmatmul.mubr.f32.gmra.mrb[0].mxu0 %v544
          %v612 = vpop.f32.mrb[0].mxu0
          %v613 = vadd.f32 %v541, %v612
          %v614 = vpop.f32.mrb[0].mxu0
          %615 = vdwg.mxu0
          %616 = vxpose.xlu0.b32.start [1/16] %v529, 128
          %617 = vxpose.xlu0.b32.cont [2/16] 0.0, 128
          %618 = vxpose.xlu0.b32.cont [3/16] 0.0, 128
          %619 = vxpose.xlu0.b32.cont [4/16] 0.0, 128
          %620 = vxpose.xlu0.b32.cont [5/16] 0.0, 128
          %621 = vxpose.xlu0.b32.cont [6/16] 0.0, 128
          %622 = vxpose.xlu0.b32.cont [7/16] 0.0, 128
          %623 = vxpose.xlu0.b32.cont [8/16] 0.0, 128
          %624 = vxpose.xlu0.b32.cont [9/16] 0.0, 128
          %625 = vxpose.xlu0.b32.cont [10/16] 0.0, 128
          %626 = vxpose.xlu0.b32.cont [11/16] 0.0, 128
          %627 = vxpose.xlu0.b32.cont [12/16] 0.0, 128
          %628 = vxpose.xlu0.b32.cont [13/16] 0.0, 128
          %629 = vxpose.xlu0.b32.cont [14/16] 0.0, 128
          %630 = vxpose.xlu0.b32.cont [15/16] 0.0, 128
          %631 = vxpose.xlu0.b32.end [16/16] 0.0, 128
          %v632 = vpop.trf.xlu0
          %v633 = vpop.trf.xlu0
          %v634 = vpop.trf.xlu0
          %v635 = vpop.trf.xlu0
          %v636 = vpop.trf.xlu0
          %v637 = vpop.trf.xlu0
          %v638 = vpop.trf.xlu0
          %v639 = vpop.trf.xlu0
          %v640 = vpop.trf.xlu0
          %v641 = vpop.trf.xlu0
          %v642 = vpop.trf.xlu0
          %v643 = vpop.trf.xlu0
          %v644 = vpop.trf.xlu0
          %v645 = vpop.trf.xlu0
          %v646 = vpop.trf.xlu0
          %v647 = vpop.trf.xlu0
          %vm648 = vcmask 64512
          %649 = vst.msk [vmem:[#allocation2] sm:$0xff] %vm648, %v632
          %650 = vst.msk [vmem:[#allocation3] sm:$0xff] %vm648, %v613
          %s651 = scalar_lea.vmem %s5, 32
          %v652 = vld [vmem:[%s651] sm:$0xff]
          %v653 = vld [vmem:[%s651 + $0x8] sm:$0xff]
          %v654 = vld [vmem:[%s651 + $0x10] sm:$0xff]
          %v655 = vld [vmem:[%s651 + $0x18] sm:$0xff]
          %s656 = scalar_lea.vmem %s6, 1
          %v657 = vld [vmem:[%s656] sm:$0x1]
          %v659 = vlaneseq
          %v660 = vshrl.u32 %v659, 7
          %v661 = vsub.s32 0, %v660
          %v662 = vrot.slane %v657, %v661
          %664 = vmatprep.subr.mxu0 0.0
          %665 = vmatpush1.msra.mxu0 %v652
          %666 = vmatprep.subr.mxu0 0.0
          %667 = vmatpush1.msra.mxu0 %v653
          %668 = vmatprep.subr.mxu0 0.0
          %669 = vmatpush1.msra.mxu0 %v654
          %670 = vmatprep.subr.mxu0 0.0
          %671 = vmatpush1.msra.mxu0 %v655
          %672 = vmatprep.subr.mxu0 0.0
          %673 = vmatpush1.msra.mxu0 0.0
          %674 = vmatprep.subr.mxu0 0.0
          %675 = vmatpush1.msra.mxu0 0.0
          %676 = vmatprep.subr.mxu0 0.0
          %677 = vmatpush1.msra.mxu0 0.0
          %678 = vmatprep.subr.mxu0 0.0
          %679 = vmatpush1.msra.mxu0 0.0
          %680 = vmatprep.subr.mxu0 0.0
          %681 = vmatpush1.msra.mxu0 0.0
          %682 = vmatprep.subr.mxu0 0.0
          %683 = vmatpush1.msra.mxu0 0.0
          %684 = vmatprep.subr.mxu0 0.0
          %685 = vmatpush1.msra.mxu0 0.0
          %686 = vmatprep.subr.mxu0 0.0
          %687 = vmatpush1.msra.mxu0 0.0
          %688 = vmatprep.subr.mxu0 0.0
          %689 = vmatpush1.msra.mxu0 0.0
          %690 = vmatprep.subr.mxu0 0.0
          %691 = vmatpush1.msra.mxu0 0.0
          %692 = vmatprep.subr.mxu0 0.0
          %693 = vmatpush1.msra.mxu0 0.0
          %694 = vmatprep.subr.mxu0 0.0
          %695 = vmatpush1.msra.mxu0 0.0
          %696 = vmatprep.subr.mxu0 0.0
          %697 = vmatpush1.msra.mxu0 0.0
          %698 = vmatprep.subr.mxu0 0.0
          %699 = vmatpush1.msra.mxu0 0.0
          %700 = vmatprep.subr.mxu0 0.0
          %701 = vmatpush1.msra.mxu0 0.0
          %702 = vmatprep.subr.mxu0 0.0
          %703 = vmatpush1.msra.mxu0 0.0
          %704 = vmatprep.subr.mxu0 0.0
          %705 = vmatpush1.msra.mxu0 0.0
          %706 = vmatprep.subr.mxu0 0.0
          %707 = vmatpush1.msra.mxu0 0.0
          %708 = vmatprep.subr.mxu0 0.0
          %709 = vmatpush1.msra.mxu0 0.0
          %710 = vmatprep.subr.mxu0 0.0
          %711 = vmatpush1.msra.mxu0 0.0
          %712 = vmatprep.subr.mxu0 0.0
          %713 = vmatpush1.msra.mxu0 0.0
          %714 = vmatprep.subr.mxu0 0.0
          %715 = vmatpush1.msra.mxu0 0.0
          %716 = vmatprep.subr.mxu0 0.0
          %717 = vmatpush1.msra.mxu0 0.0
          %718 = vmatprep.subr.mxu0 0.0
          %719 = vmatpush1.msra.mxu0 0.0
          %720 = vmatprep.subr.mxu0 0.0
          %721 = vmatpush1.msra.mxu0 0.0
          %722 = vmatprep.subr.mxu0 0.0
          %723 = vmatpush1.msra.mxu0 0.0
          %724 = vmatprep.subr.mxu0 0.0
          %725 = vmatpush1.msra.mxu0 0.0
          %726 = vmatprep.subr.mxu0 0.0
          %727 = vmatpush1.msra.mxu0 0.0
          %728 = vmatprep.mubr.f32.mxu0 0.0
          %729 = vmatmul.mubr.f32.gmra.mrb[0].mxu0 %v460
          %v730 = vpop.f32.mrb[0].mxu0
          %v731 = vadd.f32 %v662, %v730
          %v732 = vpop.f32.mrb[0].mxu0
          %733 = vdwg.mxu0
          %s734 = scalar_lea.vmem %s7, 32
          %v735 = vld [vmem:[%s734] sm:$0xff]
          %v736 = vld [vmem:[%s734 + $0x8] sm:$0xff]
          %v737 = vld [vmem:[%s734 + $0x10] sm:$0xff]
          %v738 = vld [vmem:[%s734 + $0x18] sm:$0xff]
          %s739 = scalar_lea.vmem %s8, 1
          %v740 = vld [vmem:[%s739] sm:$0x1]
          %v742 = vlaneseq
          %v743 = vshrl.u32 %v742, 7
          %v744 = vsub.s32 0, %v743
          %v745 = vrot.slane %v740, %v744
          %747 = vmatprep.subr.mxu0 0.0
          %748 = vmatpush1.msra.mxu0 %v735
          %749 = vmatprep.subr.mxu0 0.0
          %750 = vmatpush1.msra.mxu0 %v736
          %751 = vmatprep.subr.mxu0 0.0
          %752 = vmatpush1.msra.mxu0 %v737
          %753 = vmatprep.subr.mxu0 0.0
          %754 = vmatpush1.msra.mxu0 %v738
          %755 = vmatprep.subr.mxu0 0.0
          %756 = vmatpush1.msra.mxu0 0.0
          %757 = vmatprep.subr.mxu0 0.0
          %758 = vmatpush1.msra.mxu0 0.0
          %759 = vmatprep.subr.mxu0 0.0
          %760 = vmatpush1.msra.mxu0 0.0
          %761 = vmatprep.subr.mxu0 0.0
          %762 = vmatpush1.msra.mxu0 0.0
          %763 = vmatprep.subr.mxu0 0.0
          %764 = vmatpush1.msra.mxu0 0.0
          %765 = vmatprep.subr.mxu0 0.0
          %766 = vmatpush1.msra.mxu0 0.0
          %767 = vmatprep.subr.mxu0 0.0
          %768 = vmatpush1.msra.mxu0 0.0
          %769 = vmatprep.subr.mxu0 0.0
          %770 = vmatpush1.msra.mxu0 0.0
          %771 = vmatprep.subr.mxu0 0.0
          %772 = vmatpush1.msra.mxu0 0.0
          %773 = vmatprep.subr.mxu0 0.0
          %774 = vmatpush1.msra.mxu0 0.0
          %775 = vmatprep.subr.mxu0 0.0
          %776 = vmatpush1.msra.mxu0 0.0
          %777 = vmatprep.subr.mxu0 0.0
          %778 = vmatpush1.msra.mxu0 0.0
          %779 = vmatprep.subr.mxu0 0.0
          %780 = vmatpush1.msra.mxu0 0.0
          %781 = vmatprep.subr.mxu0 0.0
          %782 = vmatpush1.msra.mxu0 0.0
          %783 = vmatprep.subr.mxu0 0.0
          %784 = vmatpush1.msra.mxu0 0.0
          %785 = vmatprep.subr.mxu0 0.0
          %786 = vmatpush1.msra.mxu0 0.0
          %787 = vmatprep.subr.mxu0 0.0
          %788 = vmatpush1.msra.mxu0 0.0
          %789 = vmatprep.subr.mxu0 0.0
          %790 = vmatpush1.msra.mxu0 0.0
          %791 = vmatprep.subr.mxu0 0.0
          %792 = vmatpush1.msra.mxu0 0.0
          %793 = vmatprep.subr.mxu0 0.0
          %794 = vmatpush1.msra.mxu0 0.0
          %795 = vmatprep.subr.mxu0 0.0
          %796 = vmatpush1.msra.mxu0 0.0
          %797 = vmatprep.subr.mxu0 0.0
          %798 = vmatpush1.msra.mxu0 0.0
          %799 = vmatprep.subr.mxu0 0.0
          %800 = vmatpush1.msra.mxu0 0.0
          %801 = vmatprep.subr.mxu0 0.0
          %802 = vmatpush1.msra.mxu0 0.0
          %803 = vmatprep.subr.mxu0 0.0
          %804 = vmatpush1.msra.mxu0 0.0
          %805 = vmatprep.subr.mxu0 0.0
          %806 = vmatpush1.msra.mxu0 0.0
          %807 = vmatprep.subr.mxu0 0.0
          %808 = vmatpush1.msra.mxu0 0.0
          %809 = vmatprep.subr.mxu0 0.0
          %810 = vmatpush1.msra.mxu0 0.0
          %811 = vmatprep.mubr.f32.mxu0 0.0
          %812 = vmatmul.mubr.f32.gmra.mrb[0].mxu0 %v544
          %v813 = vpop.f32.mrb[0].mxu0
          %v814 = vadd.f32 %v745, %v813
          %v815 = vpop.f32.mrb[0].mxu0
          %816 = vdwg.mxu0
          %817 = vxpose.xlu0.b32.start [1/16] %v731, 128
          %818 = vxpose.xlu0.b32.cont [2/16] 0.0, 128
          %819 = vxpose.xlu0.b32.cont [3/16] 0.0, 128
          %820 = vxpose.xlu0.b32.cont [4/16] 0.0, 128
          %821 = vxpose.xlu0.b32.cont [5/16] 0.0, 128
          %822 = vxpose.xlu0.b32.cont [6/16] 0.0, 128
          %823 = vxpose.xlu0.b32.cont [7/16] 0.0, 128
          %824 = vxpose.xlu0.b32.cont [8/16] 0.0, 128
          %825 = vxpose.xlu0.b32.cont [9/16] 0.0, 128
          %826 = vxpose.xlu0.b32.cont [10/16] 0.0, 128
          %827 = vxpose.xlu0.b32.cont [11/16] 0.0, 128
          %828 = vxpose.xlu0.b32.cont [12/16] 0.0, 128
          %829 = vxpose.xlu0.b32.cont [13/16] 0.0, 128
          %830 = vxpose.xlu0.b32.cont [14/16] 0.0, 128
          %831 = vxpose.xlu0.b32.cont [15/16] 0.0, 128
          %832 = vxpose.xlu0.b32.end [16/16] 0.0, 128
          %v833 = vpop.trf.xlu0
          %v834 = vpop.trf.xlu0
          %v835 = vpop.trf.xlu0
          %v836 = vpop.trf.xlu0
          %v837 = vpop.trf.xlu0
          %v838 = vpop.trf.xlu0
          %v839 = vpop.trf.xlu0
          %v840 = vpop.trf.xlu0
          %v841 = vpop.trf.xlu0
          %v842 = vpop.trf.xlu0
          %v843 = vpop.trf.xlu0
          %v844 = vpop.trf.xlu0
          %v845 = vpop.trf.xlu0
          %v846 = vpop.trf.xlu0
          %v847 = vpop.trf.xlu0
          %v848 = vpop.trf.xlu0
          %s849 = scalar_lea.vmem [#allocation2], 8
          %850 = vst.msk [vmem:[%s849] sm:$0xff] %vm648, %v833
          %s851 = scalar_lea.vmem [#allocation3], 8
          %852 = vst.msk [vmem:[%s851] sm:$0xff] %vm648, %v814
          %s853 = scalar_lea.vmem %s5, 64
          %v854 = vld [vmem:[%s853] sm:$0xff]
          %v855 = vld [vmem:[%s853 + $0x8] sm:$0xff]
          %v856 = vld [vmem:[%s853 + $0x10] sm:$0xff]
          %v857 = vld [vmem:[%s853 + $0x18] sm:$0xff]
          %s858 = scalar_lea.vmem %s6, 2
          %v859 = vld [vmem:[%s858] sm:$0x1]
          %v861 = vlaneseq
          %v862 = vshrl.u32 %v861, 7
          %v863 = vsub.s32 0, %v862
          %v864 = vrot.slane %v859, %v863
          %866 = vmatprep.subr.mxu0 0.0
          %867 = vmatpush1.msra.mxu0 %v854
          %868 = vmatprep.subr.mxu0 0.0
          %869 = vmatpush1.msra.mxu0 %v855
          %870 = vmatprep.subr.mxu0 0.0
          %871 = vmatpush1.msra.mxu0 %v856
          %872 = vmatprep.subr.mxu0 0.0
          %873 = vmatpush1.msra.mxu0 %v857
          %874 = vmatprep.subr.mxu0 0.0
          %875 = vmatpush1.msra.mxu0 0.0
          %876 = vmatprep.subr.mxu0 0.0
          %877 = vmatpush1.msra.mxu0 0.0
          %878 = vmatprep.subr.mxu0 0.0
          %879 = vmatpush1.msra.mxu0 0.0
          %880 = vmatprep.subr.mxu0 0.0
          %881 = vmatpush1.msra.mxu0 0.0
          %882 = vmatprep.subr.mxu0 0.0
          %883 = vmatpush1.msra.mxu0 0.0
          %884 = vmatprep.subr.mxu0 0.0
          %885 = vmatpush1.msra.mxu0 0.0
          %886 = vmatprep.subr.mxu0 0.0
          %887 = vmatpush1.msra.mxu0 0.0
          %888 = vmatprep.subr.mxu0 0.0
          %889 = vmatpush1.msra.mxu0 0.0
          %890 = vmatprep.subr.mxu0 0.0
          %891 = vmatpush1.msra.mxu0 0.0
          %892 = vmatprep.subr.mxu0 0.0
          %893 = vmatpush1.msra.mxu0 0.0
          %894 = vmatprep.subr.mxu0 0.0
          %895 = vmatpush1.msra.mxu0 0.0
          %896 = vmatprep.subr.mxu0 0.0
          %897 = vmatpush1.msra.mxu0 0.0
          %898 = vmatprep.subr.mxu0 0.0
          %899 = vmatpush1.msra.mxu0 0.0
          %900 = vmatprep.subr.mxu0 0.0
          %901 = vmatpush1.msra.mxu0 0.0
          %902 = vmatprep.subr.mxu0 0.0
          %903 = vmatpush1.msra.mxu0 0.0
          %904 = vmatprep.subr.mxu0 0.0
          %905 = vmatpush1.msra.mxu0 0.0
          %906 = vmatprep.subr.mxu0 0.0
          %907 = vmatpush1.msra.mxu0 0.0
          %908 = vmatprep.subr.mxu0 0.0
          %909 = vmatpush1.msra.mxu0 0.0
          %910 = vmatprep.subr.mxu0 0.0
          %911 = vmatpush1.msra.mxu0 0.0
          %912 = vmatprep.subr.mxu0 0.0
          %913 = vmatpush1.msra.mxu0 0.0
          %914 = vmatprep.subr.mxu0 0.0
          %915 = vmatpush1.msra.mxu0 0.0
          %916 = vmatprep.subr.mxu0 0.0
          %917 = vmatpush1.msra.mxu0 0.0
          %918 = vmatprep.subr.mxu0 0.0
          %919 = vmatpush1.msra.mxu0 0.0
          %920 = vmatprep.subr.mxu0 0.0
          %921 = vmatpush1.msra.mxu0 0.0
          %922 = vmatprep.subr.mxu0 0.0
          %923 = vmatpush1.msra.mxu0 0.0
          %924 = vmatprep.subr.mxu0 0.0
          %925 = vmatpush1.msra.mxu0 0.0
          %926 = vmatprep.subr.mxu0 0.0
          %927 = vmatpush1.msra.mxu0 0.0
          %928 = vmatprep.subr.mxu0 0.0
          %929 = vmatpush1.msra.mxu0 0.0
          %930 = vmatprep.mubr.f32.mxu0 0.0
          %931 = vmatmul.mubr.f32.gmra.mrb[0].mxu0 %v460
          %v932 = vpop.f32.mrb[0].mxu0
          %v933 = vadd.f32 %v864, %v932
          %v934 = vpop.f32.mrb[0].mxu0
          %935 = vdwg.mxu0
          %s936 = scalar_lea.vmem %s7, 64
          %v937 = vld [vmem:[%s936] sm:$0xff]
          %v938 = vld [vmem:[%s936 + $0x8] sm:$0xff]
          %v939 = vld [vmem:[%s936 + $0x10] sm:$0xff]
          %v940 = vld [vmem:[%s936 + $0x18] sm:$0xff]
          %s941 = scalar_lea.vmem %s8, 2
          %v942 = vld [vmem:[%s941] sm:$0x1]
          %v944 = vlaneseq
          %v945 = vshrl.u32 %v944, 7
          %v946 = vsub.s32 0, %v945
          %v947 = vrot.slane %v942, %v946
          %949 = vmatprep.subr.mxu0 0.0
          %950 = vmatpush1.msra.mxu0 %v937
          %951 = vmatprep.subr.mxu0 0.0
          %952 = vmatpush1.msra.mxu0 %v938
          %953 = vmatprep.subr.mxu0 0.0
          %954 = vmatpush1.msra.mxu0 %v939
          %955 = vmatprep.subr.mxu0 0.0
          %956 = vmatpush1.msra.mxu0 %v940
          %957 = vmatprep.subr.mxu0 0.0
          %958 = vmatpush1.msra.mxu0 0.0
          %959 = vmatprep.subr.mxu0 0.0
          %960 = vmatpush1.msra.mxu0 0.0
          %961 = vmatprep.subr.mxu0 0.0
          %962 = vmatpush1.msra.mxu0 0.0
          %963 = vmatprep.subr.mxu0 0.0
          %964 = vmatpush1.msra.mxu0 0.0
          %965 = vmatprep.subr.mxu0 0.0
          %966 = vmatpush1.msra.mxu0 0.0
          %967 = vmatprep.subr.mxu0 0.0
          %968 = vmatpush1.msra.mxu0 0.0
          %969 = vmatprep.subr.mxu0 0.0
          %970 = vmatpush1.msra.mxu0 0.0
          %971 = vmatprep.subr.mxu0 0.0
          %972 = vmatpush1.msra.mxu0 0.0
          %973 = vmatprep.subr.mxu0 0.0
          %974 = vmatpush1.msra.mxu0 0.0
          %975 = vmatprep.subr.mxu0 0.0
          %976 = vmatpush1.msra.mxu0 0.0
          %977 = vmatprep.subr.mxu0 0.0
          %978 = vmatpush1.msra.mxu0 0.0
          %979 = vmatprep.subr.mxu0 0.0
          %980 = vmatpush1.msra.mxu0 0.0
          %981 = vmatprep.subr.mxu0 0.0
          %982 = vmatpush1.msra.mxu0 0.0
          %983 = vmatprep.subr.mxu0 0.0
          %984 = vmatpush1.msra.mxu0 0.0
          %985 = vmatprep.subr.mxu0 0.0
          %986 = vmatpush1.msra.mxu0 0.0
          %987 = vmatprep.subr.mxu0 0.0
          %988 = vmatpush1.msra.mxu0 0.0
          %989 = vmatprep.subr.mxu0 0.0
          %990 = vmatpush1.msra.mxu0 0.0
          %991 = vmatprep.subr.mxu0 0.0
          %992 = vmatpush1.msra.mxu0 0.0
          %993 = vmatprep.subr.mxu0 0.0
          %994 = vmatpush1.msra.mxu0 0.0
          %995 = vmatprep.subr.mxu0 0.0
          %996 = vmatpush1.msra.mxu0 0.0
          %997 = vmatprep.subr.mxu0 0.0
          %998 = vmatpush1.msra.mxu0 0.0
          %999 = vmatprep.subr.mxu0 0.0
          %1000 = vmatpush1.msra.mxu0 0.0
          %1001 = vmatprep.subr.mxu0 0.0
          %1002 = vmatpush1.msra.mxu0 0.0
          %1003 = vmatprep.subr.mxu0 0.0
          %1004 = vmatpush1.msra.mxu0 0.0
          %1005 = vmatprep.subr.mxu0 0.0
          %1006 = vmatpush1.msra.mxu0 0.0
          %1007 = vmatprep.subr.mxu0 0.0
          %1008 = vmatpush1.msra.mxu0 0.0
          %1009 = vmatprep.subr.mxu0 0.0
          %1010 = vmatpush1.msra.mxu0 0.0
          %1011 = vmatprep.subr.mxu0 0.0
          %1012 = vmatpush1.msra.mxu0 0.0
          %1013 = vmatprep.mubr.f32.mxu0 0.0
          %1014 = vmatmul.mubr.f32.gmra.mrb[0].mxu0 %v544
          %v1015 = vpop.f32.mrb[0].mxu0
          %v1016 = vadd.f32 %v947, %v1015
          %v1017 = vpop.f32.mrb[0].mxu0
          %1018 = vdwg.mxu0
          %1019 = vxpose.xlu0.b32.start [1/16] %v933, 128
          %1020 = vxpose.xlu0.b32.cont [2/16] 0.0, 128
          %1021 = vxpose.xlu0.b32.cont [3/16] 0.0, 128
          %1022 = vxpose.xlu0.b32.cont [4/16] 0.0, 128
          %1023 = vxpose.xlu0.b32.cont [5/16] 0.0, 128
          %1024 = vxpose.xlu0.b32.cont [6/16] 0.0, 128
          %1025 = vxpose.xlu0.b32.cont [7/16] 0.0, 128
          %1026 = vxpose.xlu0.b32.cont [8/16] 0.0, 128
          %1027 = vxpose.xlu0.b32.cont [9/16] 0.0, 128
          %1028 = vxpose.xlu0.b32.cont [10/16] 0.0, 128
          %1029 = vxpose.xlu0.b32.cont [11/16] 0.0, 128
          %1030 = vxpose.xlu0.b32.cont [12/16] 0.0, 128
          %1031 = vxpose.xlu0.b32.cont [13/16] 0.0, 128
          %1032 = vxpose.xlu0.b32.cont [14/16] 0.0, 128
          %1033 = vxpose.xlu0.b32.cont [15/16] 0.0, 128
          %1034 = vxpose.xlu0.b32.end [16/16] 0.0, 128
          %v1035 = vpop.trf.xlu0
          %v1036 = vpop.trf.xlu0
          %v1037 = vpop.trf.xlu0
          %v1038 = vpop.trf.xlu0
          %v1039 = vpop.trf.xlu0
          %v1040 = vpop.trf.xlu0
          %v1041 = vpop.trf.xlu0
          %v1042 = vpop.trf.xlu0
          %v1043 = vpop.trf.xlu0
          %v1044 = vpop.trf.xlu0
          %v1045 = vpop.trf.xlu0
          %v1046 = vpop.trf.xlu0
          %v1047 = vpop.trf.xlu0
          %v1048 = vpop.trf.xlu0
          %v1049 = vpop.trf.xlu0
          %v1050 = vpop.trf.xlu0
          %s1051 = scalar_lea.vmem [#allocation2], 16
          %1052 = vst.msk [vmem:[%s1051] sm:$0xff] %vm648, %v1035
          %s1053 = scalar_lea.vmem [#allocation3], 16
          %1054 = vst.msk [vmem:[%s1053] sm:$0xff] %vm648, %v1016
          %s1055 = scalar_lea.vmem %s5, 96
          %v1056 = vld [vmem:[%s1055] sm:$0xff]
          %v1057 = vld [vmem:[%s1055 + $0x8] sm:$0xff]
          %v1058 = vld [vmem:[%s1055 + $0x10] sm:$0xff]
          %v1059 = vld [vmem:[%s1055 + $0x18] sm:$0xff]
          %s1060 = scalar_lea.vmem %s6, 3
          %v1061 = vld [vmem:[%s1060] sm:$0x1]
          %v1063 = vlaneseq
          %v1064 = vshrl.u32 %v1063, 7
          %v1065 = vsub.s32 0, %v1064
          %v1066 = vrot.slane %v1061, %v1065
          %1068 = vmatprep.subr.mxu0 0.0
          %1069 = vmatpush1.msra.mxu0 %v1056
          %1070 = vmatprep.subr.mxu0 0.0
          %1071 = vmatpush1.msra.mxu0 %v1057
          %1072 = vmatprep.subr.mxu0 0.0
          %1073 = vmatpush1.msra.mxu0 %v1058
          %1074 = vmatprep.subr.mxu0 0.0
          %1075 = vmatpush1.msra.mxu0 %v1059
          %1076 = vmatprep.subr.mxu0 0.0
          %1077 = vmatpush1.msra.mxu0 0.0
          %1078 = vmatprep.subr.mxu0 0.0
          %1079 = vmatpush1.msra.mxu0 0.0
          %1080 = vmatprep.subr.mxu0 0.0
          %1081 = vmatpush1.msra.mxu0 0.0
          %1082 = vmatprep.subr.mxu0 0.0
          %1083 = vmatpush1.msra.mxu0 0.0
          %1084 = vmatprep.subr.mxu0 0.0
          %1085 = vmatpush1.msra.mxu0 0.0
          %1086 = vmatprep.subr.mxu0 0.0
          %1087 = vmatpush1.msra.mxu0 0.0
          %1088 = vmatprep.subr.mxu0 0.0
          %1089 = vmatpush1.msra.mxu0 0.0
          %1090 = vmatprep.subr.mxu0 0.0
          %1091 = vmatpush1.msra.mxu0 0.0
          %1092 = vmatprep.subr.mxu0 0.0
          %1093 = vmatpush1.msra.mxu0 0.0
          %1094 = vmatprep.subr.mxu0 0.0
          %1095 = vmatpush1.msra.mxu0 0.0
          %1096 = vmatprep.subr.mxu0 0.0
          %1097 = vmatpush1.msra.mxu0 0.0
          %1098 = vmatprep.subr.mxu0 0.0
          %1099 = vmatpush1.msra.mxu0 0.0
          %1100 = vmatprep.subr.mxu0 0.0
          %1101 = vmatpush1.msra.mxu0 0.0
          %1102 = vmatprep.subr.mxu0 0.0
          %1103 = vmatpush1.msra.mxu0 0.0
          %1104 = vmatprep.subr.mxu0 0.0
          %1105 = vmatpush1.msra.mxu0 0.0
          %1106 = vmatprep.subr.mxu0 0.0
          %1107 = vmatpush1.msra.mxu0 0.0
          %1108 = vmatprep.subr.mxu0 0.0
          %1109 = vmatpush1.msra.mxu0 0.0
          %1110 = vmatprep.subr.mxu0 0.0
          %1111 = vmatpush1.msra.mxu0 0.0
          %1112 = vmatprep.subr.mxu0 0.0
          %1113 = vmatpush1.msra.mxu0 0.0
          %1114 = vmatprep.subr.mxu0 0.0
          %1115 = vmatpush1.msra.mxu0 0.0
          %1116 = vmatprep.subr.mxu0 0.0
          %1117 = vmatpush1.msra.mxu0 0.0
          %1118 = vmatprep.subr.mxu0 0.0
          %1119 = vmatpush1.msra.mxu0 0.0
          %1120 = vmatprep.subr.mxu0 0.0
          %1121 = vmatpush1.msra.mxu0 0.0
          %1122 = vmatprep.subr.mxu0 0.0
          %1123 = vmatpush1.msra.mxu0 0.0
          %1124 = vmatprep.subr.mxu0 0.0
          %1125 = vmatpush1.msra.mxu0 0.0
          %1126 = vmatprep.subr.mxu0 0.0
          %1127 = vmatpush1.msra.mxu0 0.0
          %1128 = vmatprep.subr.mxu0 0.0
          %1129 = vmatpush1.msra.mxu0 0.0
          %1130 = vmatprep.subr.mxu0 0.0
          %1131 = vmatpush1.msra.mxu0 0.0
          %1132 = vmatprep.mubr.f32.mxu0 0.0
          %1133 = vmatmul.mubr.f32.gmra.mrb[0].mxu0 %v460
          %v1134 = vpop.f32.mrb[0].mxu0
          %v1135 = vadd.f32 %v1066, %v1134
          %v1136 = vpop.f32.mrb[0].mxu0
          %1137 = vdwg.mxu0
          %s1138 = scalar_lea.vmem %s7, 96
          %v1139 = vld [vmem:[%s1138] sm:$0xff]
          %v1140 = vld [vmem:[%s1138 + $0x8] sm:$0xff]
          %v1141 = vld [vmem:[%s1138 + $0x10] sm:$0xff]
          %v1142 = vld [vmem:[%s1138 + $0x18] sm:$0xff]
          %s1143 = scalar_lea.vmem %s8, 3
          %v1144 = vld [vmem:[%s1143] sm:$0x1]
          %v1146 = vlaneseq
          %v1147 = vshrl.u32 %v1146, 7
          %v1148 = vsub.s32 0, %v1147
          %v1149 = vrot.slane %v1144, %v1148
          %1151 = vmatprep.subr.mxu0 0.0
          %1152 = vmatpush1.msra.mxu0 %v1139
          %1153 = vmatprep.subr.mxu0 0.0
          %1154 = vmatpush1.msra.mxu0 %v1140
          %1155 = vmatprep.subr.mxu0 0.0
          %1156 = vmatpush1.msra.mxu0 %v1141
          %1157 = vmatprep.subr.mxu0 0.0
          %1158 = vmatpush1.msra.mxu0 %v1142
          %1159 = vmatprep.subr.mxu0 0.0
          %1160 = vmatpush1.msra.mxu0 0.0
          %1161 = vmatprep.subr.mxu0 0.0
          %1162 = vmatpush1.msra.mxu0 0.0
          %1163 = vmatprep.subr.mxu0 0.0
          %1164 = vmatpush1.msra.mxu0 0.0
          %1165 = vmatprep.subr.mxu0 0.0
          %1166 = vmatpush1.msra.mxu0 0.0
          %1167 = vmatprep.subr.mxu0 0.0
          %1168 = vmatpush1.msra.mxu0 0.0
          %1169 = vmatprep.subr.mxu0 0.0
          %1170 = vmatpush1.msra.mxu0 0.0
          %1171 = vmatprep.subr.mxu0 0.0
          %1172 = vmatpush1.msra.mxu0 0.0
          %1173 = vmatprep.subr.mxu0 0.0
          %1174 = vmatpush1.msra.mxu0 0.0
          %1175 = vmatprep.subr.mxu0 0.0
          %1176 = vmatpush1.msra.mxu0 0.0
          %1177 = vmatprep.subr.mxu0 0.0
          %1178 = vmatpush1.msra.mxu0 0.0
          %1179 = vmatprep.subr.mxu0 0.0
          %1180 = vmatpush1.msra.mxu0 0.0
          %1181 = vmatprep.subr.mxu0 0.0
          %1182 = vmatpush1.msra.mxu0 0.0
          %1183 = vmatprep.subr.mxu0 0.0
          %1184 = vmatpush1.msra.mxu0 0.0
          %1185 = vmatprep.subr.mxu0 0.0
          %1186 = vmatpush1.msra.mxu0 0.0
          %1187 = vmatprep.subr.mxu0 0.0
          %1188 = vmatpush1.msra.mxu0 0.0
          %1189 = vmatprep.subr.mxu0 0.0
          %1190 = vmatpush1.msra.mxu0 0.0
          %1191 = vmatprep.subr.mxu0 0.0
          %1192 = vmatpush1.msra.mxu0 0.0
          %1193 = vmatprep.subr.mxu0 0.0
          %1194 = vmatpush1.msra.mxu0 0.0
          %1195 = vmatprep.subr.mxu0 0.0
          %1196 = vmatpush1.msra.mxu0 0.0
          %1197 = vmatprep.subr.mxu0 0.0
          %1198 = vmatpush1.msra.mxu0 0.0
          %1199 = vmatprep.subr.mxu0 0.0
          %1200 = vmatpush1.msra.mxu0 0.0
          %1201 = vmatprep.subr.mxu0 0.0
          %1202 = vmatpush1.msra.mxu0 0.0
          %1203 = vmatprep.subr.mxu0 0.0
          %1204 = vmatpush1.msra.mxu0 0.0
          %1205 = vmatprep.subr.mxu0 0.0
          %1206 = vmatpush1.msra.mxu0 0.0
          %1207 = vmatprep.subr.mxu0 0.0
          %1208 = vmatpush1.msra.mxu0 0.0
          %1209 = vmatprep.subr.mxu0 0.0
          %1210 = vmatpush1.msra.mxu0 0.0
          %1211 = vmatprep.subr.mxu0 0.0
          %1212 = vmatpush1.msra.mxu0 0.0
          %1213 = vmatprep.subr.mxu0 0.0
          %1214 = vmatpush1.msra.mxu0 0.0
          %1215 = vmatprep.mubr.f32.mxu0 0.0
          %1216 = vmatmul.mubr.f32.gmra.mrb[0].mxu0 %v544
          %v1217 = vpop.f32.mrb[0].mxu0
          %v1218 = vadd.f32 %v1149, %v1217
          %v1219 = vpop.f32.mrb[0].mxu0
          %1220 = vdwg.mxu0
          %1221 = vxpose.xlu0.b32.start [1/16] %v1135, 128
          %1222 = vxpose.xlu0.b32.cont [2/16] 0.0, 128
          %1223 = vxpose.xlu0.b32.cont [3/16] 0.0, 128
          %1224 = vxpose.xlu0.b32.cont [4/16] 0.0, 128
          %1225 = vxpose.xlu0.b32.cont [5/16] 0.0, 128
          %1226 = vxpose.xlu0.b32.cont [6/16] 0.0, 128
          %1227 = vxpose.xlu0.b32.cont [7/16] 0.0, 128
          %1228 = vxpose.xlu0.b32.cont [8/16] 0.0, 128
          %1229 = vxpose.xlu0.b32.cont [9/16] 0.0, 128
          %1230 = vxpose.xlu0.b32.cont [10/16] 0.0, 128
          %1231 = vxpose.xlu0.b32.cont [11/16] 0.0, 128
          %1232 = vxpose.xlu0.b32.cont [12/16] 0.0, 128
          %1233 = vxpose.xlu0.b32.cont [13/16] 0.0, 128
          %1234 = vxpose.xlu0.b32.cont [14/16] 0.0, 128
          %1235 = vxpose.xlu0.b32.cont [15/16] 0.0, 128
          %1236 = vxpose.xlu0.b32.end [16/16] 0.0, 128
          %v1237 = vpop.trf.xlu0
          %v1238 = vpop.trf.xlu0
          %v1239 = vpop.trf.xlu0
          %v1240 = vpop.trf.xlu0
          %v1241 = vpop.trf.xlu0
          %v1242 = vpop.trf.xlu0
          %v1243 = vpop.trf.xlu0
          %v1244 = vpop.trf.xlu0
          %v1245 = vpop.trf.xlu0
          %v1246 = vpop.trf.xlu0
          %v1247 = vpop.trf.xlu0
          %v1248 = vpop.trf.xlu0
          %v1249 = vpop.trf.xlu0
          %v1250 = vpop.trf.xlu0
          %v1251 = vpop.trf.xlu0
          %v1252 = vpop.trf.xlu0
          %s1253 = scalar_lea.vmem [#allocation2], 24
          %1254 = vst.msk [vmem:[%s1253] sm:$0xff] %vm648, %v1237
          %s1255 = scalar_lea.vmem [#allocation3], 24
          %1256 = vst.msk [vmem:[%s1255] sm:$0xff] %vm648, %v1218
        $region68: #{tpu_custom_call.1} parent=63 // pred_fallthru
          _
        %v1257 = vld [vmem:[%s432] sm:$0xff]
        %v1258 = vld [vmem:[%s3] sm:$0xff]
        %v1259 = vld [vmem:[%s3 + $0x8] sm:$0xff]
        %v1260 = vld [vmem:[%s3 + $0x10] sm:$0xff]
        %v1261 = vld [vmem:[%s3 + $0x18] sm:$0xff]
        %v1262 = vld [vmem:[%s4] sm:$0x1]
        %v1264 = vlaneseq
        %v1265 = vshrl.u32 %v1264, 7
        %v1266 = vsub.s32 0, %v1265
        %v1267 = vrot.slane %v1262, %v1266
        %vm1269 = vcmask 261120
        %v1271 = vsel %vm1269, %v1257, 0
        %1273 = vmatprep.subr.mxu0 0.0
        %1274 = vmatpush1.msra.mxu0 %v1258
        %1275 = vmatprep.subr.mxu0 0.0
        %1276 = vmatpush1.msra.mxu0 %v1259
        %1277 = vmatprep.subr.mxu0 0.0
        %1278 = vmatpush1.msra.mxu0 %v1260
        %1279 = vmatprep.subr.mxu0 0.0
        %1280 = vmatpush1.msra.mxu0 %v1261
        %1281 = vmatprep.subr.mxu0 0.0
        %1282 = vmatpush1.msra.mxu0 0.0
        %1283 = vmatprep.subr.mxu0 0.0
        %1284 = vmatpush1.msra.mxu0 0.0
        %1285 = vmatprep.subr.mxu0 0.0
        %1286 = vmatpush1.msra.mxu0 0.0
        %1287 = vmatprep.subr.mxu0 0.0
        %1288 = vmatpush1.msra.mxu0 0.0
        %1289 = vmatprep.subr.mxu0 0.0
        %1290 = vmatpush1.msra.mxu0 0.0
        %1291 = vmatprep.subr.mxu0 0.0
        %1292 = vmatpush1.msra.mxu0 0.0
        %1293 = vmatprep.subr.mxu0 0.0
        %1294 = vmatpush1.msra.mxu0 0.0
        %1295 = vmatprep.subr.mxu0 0.0
        %1296 = vmatpush1.msra.mxu0 0.0
        %1297 = vmatprep.subr.mxu0 0.0
        %1298 = vmatpush1.msra.mxu0 0.0
        %1299 = vmatprep.subr.mxu0 0.0
        %1300 = vmatpush1.msra.mxu0 0.0
        %1301 = vmatprep.subr.mxu0 0.0
        %1302 = vmatpush1.msra.mxu0 0.0
        %1303 = vmatprep.subr.mxu0 0.0
        %1304 = vmatpush1.msra.mxu0 0.0
        %1305 = vmatprep.subr.mxu0 0.0
        %1306 = vmatpush1.msra.mxu0 0.0
        %1307 = vmatprep.subr.mxu0 0.0
        %1308 = vmatpush1.msra.mxu0 0.0
        %1309 = vmatprep.subr.mxu0 0.0
        %1310 = vmatpush1.msra.mxu0 0.0
        %1311 = vmatprep.subr.mxu0 0.0
        %1312 = vmatpush1.msra.mxu0 0.0
        %1313 = vmatprep.subr.mxu0 0.0
        %1314 = vmatpush1.msra.mxu0 0.0
        %1315 = vmatprep.subr.mxu0 0.0
        %1316 = vmatpush1.msra.mxu0 0.0
        %1317 = vmatprep.subr.mxu0 0.0
        %1318 = vmatpush1.msra.mxu0 0.0
        %1319 = vmatprep.subr.mxu0 0.0
        %1320 = vmatpush1.msra.mxu0 0.0
        %1321 = vmatprep.subr.mxu0 0.0
        %1322 = vmatpush1.msra.mxu0 0.0
        %1323 = vmatprep.subr.mxu0 0.0
        %1324 = vmatpush1.msra.mxu0 0.0
        %1325 = vmatprep.subr.mxu0 0.0
        %1326 = vmatpush1.msra.mxu0 0.0
        %1327 = vmatprep.subr.mxu0 0.0
        %1328 = vmatpush1.msra.mxu0 0.0
        %1329 = vmatprep.subr.mxu0 0.0
        %1330 = vmatpush1.msra.mxu0 0.0
        %1331 = vmatprep.subr.mxu0 0.0
        %1332 = vmatpush1.msra.mxu0 0.0
        %1333 = vmatprep.subr.mxu0 0.0
        %1334 = vmatpush1.msra.mxu0 0.0
        %1335 = vmatprep.subr.mxu0 0.0
        %1336 = vmatpush1.msra.mxu0 0.0
        %1337 = vmatprep.mubr.f32.mxu0 0.0
        %1338 = vmatmul.mubr.f32.gmra.mrb[0].mxu0 %v1271
        %v1339 = vpop.f32.mrb[0].mxu0
        %v1340 = vadd.f32 %v1267, %v1339
        %v1341 = vpop.f32.mrb[0].mxu0
        %1342 = vdwg.mxu0
        %s1343 = scalar_lea.vmem %s3, 32
        %v1344 = vld [vmem:[%s1343] sm:$0xff]
        %v1345 = vld [vmem:[%s1343 + $0x8] sm:$0xff]
        %v1346 = vld [vmem:[%s1343 + $0x10] sm:$0xff]
        %v1347 = vld [vmem:[%s1343 + $0x18] sm:$0xff]
        %s1348 = scalar_lea.vmem %s4, 1
        %v1349 = vld [vmem:[%s1348] sm:$0x1]
        %v1351 = vlaneseq
        %v1352 = vshrl.u32 %v1351, 7
        %v1353 = vsub.s32 0, %v1352
        %v1354 = vrot.slane %v1349, %v1353
        %1356 = vmatprep.subr.mxu0 0.0
        %1357 = vmatpush1.msra.mxu0 %v1344
        %1358 = vmatprep.subr.mxu0 0.0
        %1359 = vmatpush1.msra.mxu0 %v1345
        %1360 = vmatprep.subr.mxu0 0.0
        %1361 = vmatpush1.msra.mxu0 %v1346
        %1362 = vmatprep.subr.mxu0 0.0
        %1363 = vmatpush1.msra.mxu0 %v1347
        %1364 = vmatprep.subr.mxu0 0.0
        %1365 = vmatpush1.msra.mxu0 0.0
        %1366 = vmatprep.subr.mxu0 0.0
        %1367 = vmatpush1.msra.mxu0 0.0
        %1368 = vmatprep.subr.mxu0 0.0
        %1369 = vmatpush1.msra.mxu0 0.0
        %1370 = vmatprep.subr.mxu0 0.0
        %1371 = vmatpush1.msra.mxu0 0.0
        %1372 = vmatprep.subr.mxu0 0.0
        %1373 = vmatpush1.msra.mxu0 0.0
        %1374 = vmatprep.subr.mxu0 0.0
        %1375 = vmatpush1.msra.mxu0 0.0
        %1376 = vmatprep.subr.mxu0 0.0
        %1377 = vmatpush1.msra.mxu0 0.0
        %1378 = vmatprep.subr.mxu0 0.0
        %1379 = vmatpush1.msra.mxu0 0.0
        %1380 = vmatprep.subr.mxu0 0.0
        %1381 = vmatpush1.msra.mxu0 0.0
        %1382 = vmatprep.subr.mxu0 0.0
        %1383 = vmatpush1.msra.mxu0 0.0
        %1384 = vmatprep.subr.mxu0 0.0
        %1385 = vmatpush1.msra.mxu0 0.0
        %1386 = vmatprep.subr.mxu0 0.0
        %1387 = vmatpush1.msra.mxu0 0.0
        %1388 = vmatprep.subr.mxu0 0.0
        %1389 = vmatpush1.msra.mxu0 0.0
        %1390 = vmatprep.subr.mxu0 0.0
        %1391 = vmatpush1.msra.mxu0 0.0
        %1392 = vmatprep.subr.mxu0 0.0
        %1393 = vmatpush1.msra.mxu0 0.0
        %1394 = vmatprep.subr.mxu0 0.0
        %1395 = vmatpush1.msra.mxu0 0.0
        %1396 = vmatprep.subr.mxu0 0.0
        %1397 = vmatpush1.msra.mxu0 0.0
        %1398 = vmatprep.subr.mxu0 0.0
        %1399 = vmatpush1.msra.mxu0 0.0
        %1400 = vmatprep.subr.mxu0 0.0
        %1401 = vmatpush1.msra.mxu0 0.0
        %1402 = vmatprep.subr.mxu0 0.0
        %1403 = vmatpush1.msra.mxu0 0.0
        %1404 = vmatprep.subr.mxu0 0.0
        %1405 = vmatpush1.msra.mxu0 0.0
        %1406 = vmatprep.subr.mxu0 0.0
        %1407 = vmatpush1.msra.mxu0 0.0
        %1408 = vmatprep.subr.mxu0 0.0
        %1409 = vmatpush1.msra.mxu0 0.0
        %1410 = vmatprep.subr.mxu0 0.0
        %1411 = vmatpush1.msra.mxu0 0.0
        %1412 = vmatprep.subr.mxu0 0.0
        %1413 = vmatpush1.msra.mxu0 0.0
        %1414 = vmatprep.subr.mxu0 0.0
        %1415 = vmatpush1.msra.mxu0 0.0
        %1416 = vmatprep.subr.mxu0 0.0
        %1417 = vmatpush1.msra.mxu0 0.0
        %1418 = vmatprep.subr.mxu0 0.0
        %1419 = vmatpush1.msra.mxu0 0.0
        %1420 = vmatprep.mubr.f32.mxu0 0.0
        %1421 = vmatmul.mubr.f32.gmra.mrb[0].mxu0 %v1271
        %v1422 = vpop.f32.mrb[0].mxu0
        %v1423 = vadd.f32 %v1354, %v1422
        %v1424 = vpop.f32.mrb[0].mxu0
        %1425 = vdwg.mxu0
        %s1426 = scalar_lea.vmem %s3, 64
        %v1427 = vld [vmem:[%s1426] sm:$0xff]
        %v1428 = vld [vmem:[%s1426 + $0x8] sm:$0xff]
        %v1429 = vld [vmem:[%s1426 + $0x10] sm:$0xff]
        %v1430 = vld [vmem:[%s1426 + $0x18] sm:$0xff]
        %s1431 = scalar_lea.vmem %s4, 2
        %v1432 = vld [vmem:[%s1431] sm:$0x1]
        %v1434 = vlaneseq
        %v1435 = vshrl.u32 %v1434, 7
        %v1436 = vsub.s32 0, %v1435
        %v1437 = vrot.slane %v1432, %v1436
        %1439 = vmatprep.subr.mxu0 0.0
        %1440 = vmatpush1.msra.mxu0 %v1427
        %1441 = vmatprep.subr.mxu0 0.0
        %1442 = vmatpush1.msra.mxu0 %v1428
        %1443 = vmatprep.subr.mxu0 0.0
        %1444 = vmatpush1.msra.mxu0 %v1429
        %1445 = vmatprep.subr.mxu0 0.0
        %1446 = vmatpush1.msra.mxu0 %v1430
        %1447 = vmatprep.subr.mxu0 0.0
        %1448 = vmatpush1.msra.mxu0 0.0
        %1449 = vmatprep.subr.mxu0 0.0
        %1450 = vmatpush1.msra.mxu0 0.0
        %1451 = vmatprep.subr.mxu0 0.0
        %1452 = vmatpush1.msra.mxu0 0.0
        %1453 = vmatprep.subr.mxu0 0.0
        %1454 = vmatpush1.msra.mxu0 0.0
        %1455 = vmatprep.subr.mxu0 0.0
        %1456 = vmatpush1.msra.mxu0 0.0
        %1457 = vmatprep.subr.mxu0 0.0
        %1458 = vmatpush1.msra.mxu0 0.0
        %1459 = vmatprep.subr.mxu0 0.0
        %1460 = vmatpush1.msra.mxu0 0.0
        %1461 = vmatprep.subr.mxu0 0.0
        %1462 = vmatpush1.msra.mxu0 0.0
        %1463 = vmatprep.subr.mxu0 0.0
        %1464 = vmatpush1.msra.mxu0 0.0
        %1465 = vmatprep.subr.mxu0 0.0
        %1466 = vmatpush1.msra.mxu0 0.0
        %1467 = vmatprep.subr.mxu0 0.0
        %1468 = vmatpush1.msra.mxu0 0.0
        %1469 = vmatprep.subr.mxu0 0.0
        %1470 = vmatpush1.msra.mxu0 0.0
        %1471 = vmatprep.subr.mxu0 0.0
        %1472 = vmatpush1.msra.mxu0 0.0
        %1473 = vmatprep.subr.mxu0 0.0
        %1474 = vmatpush1.msra.mxu0 0.0
        %1475 = vmatprep.subr.mxu0 0.0
        %1476 = vmatpush1.msra.mxu0 0.0
        %1477 = vmatprep.subr.mxu0 0.0
        %1478 = vmatpush1.msra.mxu0 0.0
        %1479 = vmatprep.subr.mxu0 0.0
        %1480 = vmatpush1.msra.mxu0 0.0
        %1481 = vmatprep.subr.mxu0 0.0
        %1482 = vmatpush1.msra.mxu0 0.0
        %1483 = vmatprep.subr.mxu0 0.0
        %1484 = vmatpush1.msra.mxu0 0.0
        %1485 = vmatprep.subr.mxu0 0.0
        %1486 = vmatpush1.msra.mxu0 0.0
        %1487 = vmatprep.subr.mxu0 0.0
        %1488 = vmatpush1.msra.mxu0 0.0
        %1489 = vmatprep.subr.mxu0 0.0
        %1490 = vmatpush1.msra.mxu0 0.0
        %1491 = vmatprep.subr.mxu0 0.0
        %1492 = vmatpush1.msra.mxu0 0.0
        %1493 = vmatprep.subr.mxu0 0.0
        %1494 = vmatpush1.msra.mxu0 0.0
        %1495 = vmatprep.subr.mxu0 0.0
        %1496 = vmatpush1.msra.mxu0 0.0
        %1497 = vmatprep.subr.mxu0 0.0
        %1498 = vmatpush1.msra.mxu0 0.0
        %1499 = vmatprep.subr.mxu0 0.0
        %1500 = vmatpush1.msra.mxu0 0.0
        %1501 = vmatprep.subr.mxu0 0.0
        %1502 = vmatpush1.msra.mxu0 0.0
        %1503 = vmatprep.mubr.f32.mxu0 0.0
        %1504 = vmatmul.mubr.f32.gmra.mrb[0].mxu0 %v1271
        %v1505 = vpop.f32.mrb[0].mxu0
        %v1506 = vadd.f32 %v1437, %v1505
        %v1507 = vpop.f32.mrb[0].mxu0
        %1508 = vdwg.mxu0
        %s1509 = scalar_lea.vmem %s3, 96
        %v1510 = vld [vmem:[%s1509] sm:$0xff]
        %v1511 = vld [vmem:[%s1509 + $0x8] sm:$0xff]
        %v1512 = vld [vmem:[%s1509 + $0x10] sm:$0xff]
        %v1513 = vld [vmem:[%s1509 + $0x18] sm:$0xff]
        %s1514 = scalar_lea.vmem %s4, 3
        %v1515 = vld [vmem:[%s1514] sm:$0x1]
        %v1517 = vlaneseq
        %v1518 = vshrl.u32 %v1517, 7
        %v1519 = vsub.s32 0, %v1518
        %v1520 = vrot.slane %v1515, %v1519
        %1522 = vmatprep.subr.mxu0 0.0
        %1523 = vmatpush1.msra.mxu0 %v1510
        %1524 = vmatprep.subr.mxu0 0.0
        %1525 = vmatpush1.msra.mxu0 %v1511
        %1526 = vmatprep.subr.mxu0 0.0
        %1527 = vmatpush1.msra.mxu0 %v1512
        %1528 = vmatprep.subr.mxu0 0.0
        %1529 = vmatpush1.msra.mxu0 %v1513
        %1530 = vmatprep.subr.mxu0 0.0
        %1531 = vmatpush1.msra.mxu0 0.0
        %1532 = vmatprep.subr.mxu0 0.0
        %1533 = vmatpush1.msra.mxu0 0.0
        %1534 = vmatprep.subr.mxu0 0.0
        %1535 = vmatpush1.msra.mxu0 0.0
        %1536 = vmatprep.subr.mxu0 0.0
        %1537 = vmatpush1.msra.mxu0 0.0
        %1538 = vmatprep.subr.mxu0 0.0
        %1539 = vmatpush1.msra.mxu0 0.0
        %1540 = vmatprep.subr.mxu0 0.0
        %1541 = vmatpush1.msra.mxu0 0.0
        %1542 = vmatprep.subr.mxu0 0.0
        %1543 = vmatpush1.msra.mxu0 0.0
        %1544 = vmatprep.subr.mxu0 0.0
        %1545 = vmatpush1.msra.mxu0 0.0
        %1546 = vmatprep.subr.mxu0 0.0
        %1547 = vmatpush1.msra.mxu0 0.0
        %1548 = vmatprep.subr.mxu0 0.0
        %1549 = vmatpush1.msra.mxu0 0.0
        %1550 = vmatprep.subr.mxu0 0.0
        %1551 = vmatpush1.msra.mxu0 0.0
        %1552 = vmatprep.subr.mxu0 0.0
        %1553 = vmatpush1.msra.mxu0 0.0
        %1554 = vmatprep.subr.mxu0 0.0
        %1555 = vmatpush1.msra.mxu0 0.0
        %1556 = vmatprep.subr.mxu0 0.0
        %1557 = vmatpush1.msra.mxu0 0.0
        %1558 = vmatprep.subr.mxu0 0.0
        %1559 = vmatpush1.msra.mxu0 0.0
        %1560 = vmatprep.subr.mxu0 0.0
        %1561 = vmatpush1.msra.mxu0 0.0
        %1562 = vmatprep.subr.mxu0 0.0
        %1563 = vmatpush1.msra.mxu0 0.0
        %1564 = vmatprep.subr.mxu0 0.0
        %1565 = vmatpush1.msra.mxu0 0.0
        %1566 = vmatprep.subr.mxu0 0.0
        %1567 = vmatpush1.msra.mxu0 0.0
        %1568 = vmatprep.subr.mxu0 0.0
        %1569 = vmatpush1.msra.mxu0 0.0
        %1570 = vmatprep.subr.mxu0 0.0
        %1571 = vmatpush1.msra.mxu0 0.0
        %1572 = vmatprep.subr.mxu0 0.0
        %1573 = vmatpush1.msra.mxu0 0.0
        %1574 = vmatprep.subr.mxu0 0.0
        %1575 = vmatpush1.msra.mxu0 0.0
        %1576 = vmatprep.subr.mxu0 0.0
        %1577 = vmatpush1.msra.mxu0 0.0
        %1578 = vmatprep.subr.mxu0 0.0
        %1579 = vmatpush1.msra.mxu0 0.0
        %1580 = vmatprep.subr.mxu0 0.0
        %1581 = vmatpush1.msra.mxu0 0.0
        %1582 = vmatprep.subr.mxu0 0.0
        %1583 = vmatpush1.msra.mxu0 0.0
        %1584 = vmatprep.subr.mxu0 0.0
        %1585 = vmatpush1.msra.mxu0 0.0
        %1586 = vmatprep.mubr.f32.mxu0 0.0
        %1587 = vmatmul.mubr.f32.gmra.mrb[0].mxu0 %v1271
        %v1588 = vpop.f32.mrb[0].mxu0
        %v1589 = vadd.f32 %v1520, %v1588
        %v1590 = vpop.f32.mrb[0].mxu0
        %1591 = vdwg.mxu0
        %v1592 = vmul.f32 %v1340, 0.35355338
        %v1593 = vmul.f32 %v1423, 0.35355338
        %v1594 = vmul.f32 %v1506, 0.35355338
        %v1595 = vmul.f32 %v1589, 0.35355338
        %v1596 = vld [vmem:[#allocation2] sm:$0xff]
        %v1597 = vld [vmem:[#allocation2 + $0x8] sm:$0xff]
        %v1598 = vld [vmem:[#allocation2 + $0x10] sm:$0xff]
        %v1599 = vld [vmem:[#allocation2 + $0x18] sm:$0xff]
        %vm1600 = vcmask 64512
        %v1602 = vsel %vm1600, %v1592, 0
        %1604 = vmatprep.subr.mxu0 0.0
        %1605 = vmatpush1.msra.mxu0 %v1596
        %1606 = vmatprep.subr.mxu0 0.0
        %1607 = vmatpush1.msra.mxu0 0.0
        %1608 = vmatprep.subr.mxu0 0.0
        %1609 = vmatpush1.msra.mxu0 0.0
        %1610 = vmatprep.subr.mxu0 0.0
        %1611 = vmatpush1.msra.mxu0 0.0
        %1612 = vmatprep.subr.mxu0 0.0
        %1613 = vmatpush1.msra.mxu0 0.0
        %1614 = vmatprep.subr.mxu0 0.0
        %1615 = vmatpush1.msra.mxu0 0.0
        %1616 = vmatprep.subr.mxu0 0.0
        %1617 = vmatpush1.msra.mxu0 0.0
        %1618 = vmatprep.subr.mxu0 0.0
        %1619 = vmatpush1.msra.mxu0 0.0
        %1620 = vmatprep.subr.mxu0 0.0
        %1621 = vmatpush1.msra.mxu0 0.0
        %1622 = vmatprep.subr.mxu0 0.0
        %1623 = vmatpush1.msra.mxu0 0.0
        %1624 = vmatprep.subr.mxu0 0.0
        %1625 = vmatpush1.msra.mxu0 0.0
        %1626 = vmatprep.subr.mxu0 0.0
        %1627 = vmatpush1.msra.mxu0 0.0
        %1628 = vmatprep.subr.mxu0 0.0
        %1629 = vmatpush1.msra.mxu0 0.0
        %1630 = vmatprep.subr.mxu0 0.0
        %1631 = vmatpush1.msra.mxu0 0.0
        %1632 = vmatprep.subr.mxu0 0.0
        %1633 = vmatpush1.msra.mxu0 0.0
        %1634 = vmatprep.subr.mxu0 0.0
        %1635 = vmatpush1.msra.mxu0 0.0
        %1636 = vmatprep.subr.mxu0 0.0
        %1637 = vmatpush1.msra.mxu0 0.0
        %1638 = vmatprep.subr.mxu0 0.0
        %1639 = vmatpush1.msra.mxu0 0.0
        %1640 = vmatprep.subr.mxu0 0.0
        %1641 = vmatpush1.msra.mxu0 0.0
        %1642 = vmatprep.subr.mxu0 0.0
        %1643 = vmatpush1.msra.mxu0 0.0
        %1644 = vmatprep.subr.mxu0 0.0
        %1645 = vmatpush1.msra.mxu0 0.0
        %1646 = vmatprep.subr.mxu0 0.0
        %1647 = vmatpush1.msra.mxu0 0.0
        %1648 = vmatprep.subr.mxu0 0.0
        %1649 = vmatpush1.msra.mxu0 0.0
        %1650 = vmatprep.subr.mxu0 0.0
        %1651 = vmatpush1.msra.mxu0 0.0
        %1652 = vmatprep.subr.mxu0 0.0
        %1653 = vmatpush1.msra.mxu0 0.0
        %1654 = vmatprep.subr.mxu0 0.0
        %1655 = vmatpush1.msra.mxu0 0.0
        %1656 = vmatprep.subr.mxu0 0.0
        %1657 = vmatpush1.msra.mxu0 0.0
        %1658 = vmatprep.subr.mxu0 0.0
        %1659 = vmatpush1.msra.mxu0 0.0
        %1660 = vmatprep.subr.mxu0 0.0
        %1661 = vmatpush1.msra.mxu0 0.0
        %1662 = vmatprep.subr.mxu0 0.0
        %1663 = vmatpush1.msra.mxu0 0.0
        %1664 = vmatprep.subr.mxu0 0.0
        %1665 = vmatpush1.msra.mxu0 0.0
        %1666 = vmatprep.subr.mxu0 0.0
        %1667 = vmatpush1.msra.mxu0 0.0
        %1668 = vmatprep.mubr.f32.mxu0 0.0
        %1669 = vmatmul.mubr.f32.gmra.mrb[0].mxu0 %v1602
        %v1670 = vpop.f32.mrb[0].mxu0
        %v1671 = vadd.f32 0.0, %v1670
        %v1672 = vpop.f32.mrb[0].mxu0
        %1673 = vdwg.mxu0
        %v1675 = vsel %vm1600, %v1593, 0
        %1677 = vmatprep.subr.mxu0 0.0
        %1678 = vmatpush1.msra.mxu0 %v1597
        %1679 = vmatprep.subr.mxu0 0.0
        %1680 = vmatpush1.msra.mxu0 0.0
        %1681 = vmatprep.subr.mxu0 0.0
        %1682 = vmatpush1.msra.mxu0 0.0
        %1683 = vmatprep.subr.mxu0 0.0
        %1684 = vmatpush1.msra.mxu0 0.0
        %1685 = vmatprep.subr.mxu0 0.0
        %1686 = vmatpush1.msra.mxu0 0.0
        %1687 = vmatprep.subr.mxu0 0.0
        %1688 = vmatpush1.msra.mxu0 0.0
        %1689 = vmatprep.subr.mxu0 0.0
        %1690 = vmatpush1.msra.mxu0 0.0
        %1691 = vmatprep.subr.mxu0 0.0
        %1692 = vmatpush1.msra.mxu0 0.0
        %1693 = vmatprep.subr.mxu0 0.0
        %1694 = vmatpush1.msra.mxu0 0.0
        %1695 = vmatprep.subr.mxu0 0.0
        %1696 = vmatpush1.msra.mxu0 0.0
        %1697 = vmatprep.subr.mxu0 0.0
        %1698 = vmatpush1.msra.mxu0 0.0
        %1699 = vmatprep.subr.mxu0 0.0
        %1700 = vmatpush1.msra.mxu0 0.0
        %1701 = vmatprep.subr.mxu0 0.0
        %1702 = vmatpush1.msra.mxu0 0.0
        %1703 = vmatprep.subr.mxu0 0.0
        %1704 = vmatpush1.msra.mxu0 0.0
        %1705 = vmatprep.subr.mxu0 0.0
        %1706 = vmatpush1.msra.mxu0 0.0
        %1707 = vmatprep.subr.mxu0 0.0
        %1708 = vmatpush1.msra.mxu0 0.0
        %1709 = vmatprep.subr.mxu0 0.0
        %1710 = vmatpush1.msra.mxu0 0.0
        %1711 = vmatprep.subr.mxu0 0.0
        %1712 = vmatpush1.msra.mxu0 0.0
        %1713 = vmatprep.subr.mxu0 0.0
        %1714 = vmatpush1.msra.mxu0 0.0
        %1715 = vmatprep.subr.mxu0 0.0
        %1716 = vmatpush1.msra.mxu0 0.0
        %1717 = vmatprep.subr.mxu0 0.0
        %1718 = vmatpush1.msra.mxu0 0.0
        %1719 = vmatprep.subr.mxu0 0.0
        %1720 = vmatpush1.msra.mxu0 0.0
        %1721 = vmatprep.subr.mxu0 0.0
        %1722 = vmatpush1.msra.mxu0 0.0
        %1723 = vmatprep.subr.mxu0 0.0
        %1724 = vmatpush1.msra.mxu0 0.0
        %1725 = vmatprep.subr.mxu0 0.0
        %1726 = vmatpush1.msra.mxu0 0.0
        %1727 = vmatprep.subr.mxu0 0.0
        %1728 = vmatpush1.msra.mxu0 0.0
        %1729 = vmatprep.subr.mxu0 0.0
        %1730 = vmatpush1.msra.mxu0 0.0
        %1731 = vmatprep.subr.mxu0 0.0
        %1732 = vmatpush1.msra.mxu0 0.0
        %1733 = vmatprep.subr.mxu0 0.0
        %1734 = vmatpush1.msra.mxu0 0.0
        %1735 = vmatprep.subr.mxu0 0.0
        %1736 = vmatpush1.msra.mxu0 0.0
        %1737 = vmatprep.subr.mxu0 0.0
        %1738 = vmatpush1.msra.mxu0 0.0
        %1739 = vmatprep.subr.mxu0 0.0
        %1740 = vmatpush1.msra.mxu0 0.0
        %1741 = vmatprep.mubr.f32.mxu0 0.0
        %1742 = vmatmul.mubr.f32.gmra.mrb[0].mxu0 %v1675
        %v1743 = vpop.f32.mrb[0].mxu0
        %v1744 = vadd.f32 0.0, %v1743
        %v1745 = vpop.f32.mrb[0].mxu0
        %1746 = vdwg.mxu0
        %v1748 = vsel %vm1600, %v1594, 0
        %1750 = vmatprep.subr.mxu0 0.0
        %1751 = vmatpush1.msra.mxu0 %v1598
        %1752 = vmatprep.subr.mxu0 0.0
        %1753 = vmatpush1.msra.mxu0 0.0
        %1754 = vmatprep.subr.mxu0 0.0
        %1755 = vmatpush1.msra.mxu0 0.0
        %1756 = vmatprep.subr.mxu0 0.0
        %1757 = vmatpush1.msra.mxu0 0.0
        %1758 = vmatprep.subr.mxu0 0.0
        %1759 = vmatpush1.msra.mxu0 0.0
        %1760 = vmatprep.subr.mxu0 0.0
        %1761 = vmatpush1.msra.mxu0 0.0
        %1762 = vmatprep.subr.mxu0 0.0
        %1763 = vmatpush1.msra.mxu0 0.0
        %1764 = vmatprep.subr.mxu0 0.0
        %1765 = vmatpush1.msra.mxu0 0.0
        %1766 = vmatprep.subr.mxu0 0.0
        %1767 = vmatpush1.msra.mxu0 0.0
        %1768 = vmatprep.subr.mxu0 0.0
        %1769 = vmatpush1.msra.mxu0 0.0
        %1770 = vmatprep.subr.mxu0 0.0
        %1771 = vmatpush1.msra.mxu0 0.0
        %1772 = vmatprep.subr.mxu0 0.0
        %1773 = vmatpush1.msra.mxu0 0.0
        %1774 = vmatprep.subr.mxu0 0.0
        %1775 = vmatpush1.msra.mxu0 0.0
        %1776 = vmatprep.subr.mxu0 0.0
        %1777 = vmatpush1.msra.mxu0 0.0
        %1778 = vmatprep.subr.mxu0 0.0
        %1779 = vmatpush1.msra.mxu0 0.0
        %1780 = vmatprep.subr.mxu0 0.0
        %1781 = vmatpush1.msra.mxu0 0.0
        %1782 = vmatprep.subr.mxu0 0.0
        %1783 = vmatpush1.msra.mxu0 0.0
        %1784 = vmatprep.subr.mxu0 0.0
        %1785 = vmatpush1.msra.mxu0 0.0
        %1786 = vmatprep.subr.mxu0 0.0
        %1787 = vmatpush1.msra.mxu0 0.0
        %1788 = vmatprep.subr.mxu0 0.0
        %1789 = vmatpush1.msra.mxu0 0.0
        %1790 = vmatprep.subr.mxu0 0.0
        %1791 = vmatpush1.msra.mxu0 0.0
        %1792 = vmatprep.subr.mxu0 0.0
        %1793 = vmatpush1.msra.mxu0 0.0
        %1794 = vmatprep.subr.mxu0 0.0
        %1795 = vmatpush1.msra.mxu0 0.0
        %1796 = vmatprep.subr.mxu0 0.0
        %1797 = vmatpush1.msra.mxu0 0.0
        %1798 = vmatprep.subr.mxu0 0.0
        %1799 = vmatpush1.msra.mxu0 0.0
        %1800 = vmatprep.subr.mxu0 0.0
        %1801 = vmatpush1.msra.mxu0 0.0
        %1802 = vmatprep.subr.mxu0 0.0
        %1803 = vmatpush1.msra.mxu0 0.0
        %1804 = vmatprep.subr.mxu0 0.0
        %1805 = vmatpush1.msra.mxu0 0.0
        %1806 = vmatprep.subr.mxu0 0.0
        %1807 = vmatpush1.msra.mxu0 0.0
        %1808 = vmatprep.subr.mxu0 0.0
        %1809 = vmatpush1.msra.mxu0 0.0
        %1810 = vmatprep.subr.mxu0 0.0
        %1811 = vmatpush1.msra.mxu0 0.0
        %1812 = vmatprep.subr.mxu0 0.0
        %1813 = vmatpush1.msra.mxu0 0.0
        %1814 = vmatprep.mubr.f32.mxu0 0.0
        %1815 = vmatmul.mubr.f32.gmra.mrb[0].mxu0 %v1748
        %v1816 = vpop.f32.mrb[0].mxu0
        %v1817 = vadd.f32 0.0, %v1816
        %v1818 = vpop.f32.mrb[0].mxu0
        %1819 = vdwg.mxu0
        %v1821 = vsel %vm1600, %v1595, 0
        %1823 = vmatprep.subr.mxu0 0.0
        %1824 = vmatpush1.msra.mxu0 %v1599
        %1825 = vmatprep.subr.mxu0 0.0
        %1826 = vmatpush1.msra.mxu0 0.0
        %1827 = vmatprep.subr.mxu0 0.0
        %1828 = vmatpush1.msra.mxu0 0.0
        %1829 = vmatprep.subr.mxu0 0.0
        %1830 = vmatpush1.msra.mxu0 0.0
        %1831 = vmatprep.subr.mxu0 0.0
        %1832 = vmatpush1.msra.mxu0 0.0
        %1833 = vmatprep.subr.mxu0 0.0
        %1834 = vmatpush1.msra.mxu0 0.0
        %1835 = vmatprep.subr.mxu0 0.0
        %1836 = vmatpush1.msra.mxu0 0.0
        %1837 = vmatprep.subr.mxu0 0.0
        %1838 = vmatpush1.msra.mxu0 0.0
        %1839 = vmatprep.subr.mxu0 0.0
        %1840 = vmatpush1.msra.mxu0 0.0
        %1841 = vmatprep.subr.mxu0 0.0
        %1842 = vmatpush1.msra.mxu0 0.0
        %1843 = vmatprep.subr.mxu0 0.0
        %1844 = vmatpush1.msra.mxu0 0.0
        %1845 = vmatprep.subr.mxu0 0.0
        %1846 = vmatpush1.msra.mxu0 0.0
        %1847 = vmatprep.subr.mxu0 0.0
        %1848 = vmatpush1.msra.mxu0 0.0
        %1849 = vmatprep.subr.mxu0 0.0
        %1850 = vmatpush1.msra.mxu0 0.0
        %1851 = vmatprep.subr.mxu0 0.0
        %1852 = vmatpush1.msra.mxu0 0.0
        %1853 = vmatprep.subr.mxu0 0.0
        %1854 = vmatpush1.msra.mxu0 0.0
        %1855 = vmatprep.subr.mxu0 0.0
        %1856 = vmatpush1.msra.mxu0 0.0
        %1857 = vmatprep.subr.mxu0 0.0
        %1858 = vmatpush1.msra.mxu0 0.0
        %1859 = vmatprep.subr.mxu0 0.0
        %1860 = vmatpush1.msra.mxu0 0.0
        %1861 = vmatprep.subr.mxu0 0.0
        %1862 = vmatpush1.msra.mxu0 0.0
        %1863 = vmatprep.subr.mxu0 0.0
        %1864 = vmatpush1.msra.mxu0 0.0
        %1865 = vmatprep.subr.mxu0 0.0
        %1866 = vmatpush1.msra.mxu0 0.0
        %1867 = vmatprep.subr.mxu0 0.0
        %1868 = vmatpush1.msra.mxu0 0.0
        %1869 = vmatprep.subr.mxu0 0.0
        %1870 = vmatpush1.msra.mxu0 0.0
        %1871 = vmatprep.subr.mxu0 0.0
        %1872 = vmatpush1.msra.mxu0 0.0
        %1873 = vmatprep.subr.mxu0 0.0
        %1874 = vmatpush1.msra.mxu0 0.0
        %1875 = vmatprep.subr.mxu0 0.0
        %1876 = vmatpush1.msra.mxu0 0.0
        %1877 = vmatprep.subr.mxu0 0.0
        %1878 = vmatpush1.msra.mxu0 0.0
        %1879 = vmatprep.subr.mxu0 0.0
        %1880 = vmatpush1.msra.mxu0 0.0
        %1881 = vmatprep.subr.mxu0 0.0
        %1882 = vmatpush1.msra.mxu0 0.0
        %1883 = vmatprep.subr.mxu0 0.0
        %1884 = vmatpush1.msra.mxu0 0.0
        %1885 = vmatprep.subr.mxu0 0.0
        %1886 = vmatpush1.msra.mxu0 0.0
        %1887 = vmatprep.mubr.f32.mxu0 0.0
        %1888 = vmatmul.mubr.f32.gmra.mrb[0].mxu0 %v1821
        %v1889 = vpop.f32.mrb[0].mxu0
        %v1890 = vadd.f32 0.0, %v1889
        %v1891 = vpop.f32.mrb[0].mxu0
        %1892 = vdwg.mxu0
        %v1893 = vsel %vm1600, %v1671, -inf
        %1894 = vmax.xlane.f32.xlu0 %v1893
        %v1895 = vpop.xlane.xlu0 %1894
        %v1896 = vsel %vm1600, %v1744, -inf
        %1897 = vmax.xlane.f32.xlu0 %v1896
        %v1898 = vpop.xlane.xlu0 %1897
        %v1899 = vsel %vm1600, %v1817, -inf
        %1900 = vmax.xlane.f32.xlu0 %v1899
        %v1901 = vpop.xlane.xlu0 %1900
        %v1902 = vsel %vm1600, %v1890, -inf
        %1903 = vmax.xlane.f32.xlu0 %v1902
        %v1904 = vpop.xlane.xlu0 %1903
        %v1905 = vsub.f32 %v1671, %v1895
        %v1906 = vsub.f32 %v1744, %v1898
        %v1907 = vsub.f32 %v1817, %v1901
        %v1908 = vsub.f32 %v1890, %v1904
        %v1909 = vmul.f32 %v1905, 1.442695
        %v1910 = vpow.pop %v1909
        %v1911 = vmul.f32 %v1906, 1.442695
        %v1912 = vpow.pop %v1911
        %v1913 = vmul.f32 %v1907, 1.442695
        %v1914 = vpow.pop %v1913
        %v1915 = vmul.f32 %v1908, 1.442695
        %v1916 = vpow.pop %v1915
        %v1917 = vld [vmem:[#allocation3] sm:$0xff]
        %v1918 = vld [vmem:[#allocation3 + $0x8] sm:$0xff]
        %v1919 = vld [vmem:[#allocation3 + $0x10] sm:$0xff]
        %v1920 = vld [vmem:[#allocation3 + $0x18] sm:$0xff]
        %v1922 = vsel %vm1600, %v1910, 0
        %1924 = vmatprep.subr.mxu0 0.0
        %1925 = vmatpush1.msra.mxu0 %v1917
        %1926 = vmatprep.subr.mxu0 0.0
        %1927 = vmatpush1.msra.mxu0 0.0
        %1928 = vmatprep.subr.mxu0 0.0
        %1929 = vmatpush1.msra.mxu0 0.0
        %1930 = vmatprep.subr.mxu0 0.0
        %1931 = vmatpush1.msra.mxu0 0.0
        %1932 = vmatprep.subr.mxu0 0.0
        %1933 = vmatpush1.msra.mxu0 0.0
        %1934 = vmatprep.subr.mxu0 0.0
        %1935 = vmatpush1.msra.mxu0 0.0
        %1936 = vmatprep.subr.mxu0 0.0
        %1937 = vmatpush1.msra.mxu0 0.0
        %1938 = vmatprep.subr.mxu0 0.0
        %1939 = vmatpush1.msra.mxu0 0.0
        %1940 = vmatprep.subr.mxu0 0.0
        %1941 = vmatpush1.msra.mxu0 0.0
        %1942 = vmatprep.subr.mxu0 0.0
        %1943 = vmatpush1.msra.mxu0 0.0
        %1944 = vmatprep.subr.mxu0 0.0
        %1945 = vmatpush1.msra.mxu0 0.0
        %1946 = vmatprep.subr.mxu0 0.0
        %1947 = vmatpush1.msra.mxu0 0.0
        %1948 = vmatprep.subr.mxu0 0.0
        %1949 = vmatpush1.msra.mxu0 0.0
        %1950 = vmatprep.subr.mxu0 0.0
        %1951 = vmatpush1.msra.mxu0 0.0
        %1952 = vmatprep.subr.mxu0 0.0
        %1953 = vmatpush1.msra.mxu0 0.0
        %1954 = vmatprep.subr.mxu0 0.0
        %1955 = vmatpush1.msra.mxu0 0.0
        %1956 = vmatprep.subr.mxu0 0.0
        %1957 = vmatpush1.msra.mxu0 0.0
        %1958 = vmatprep.subr.mxu0 0.0
        %1959 = vmatpush1.msra.mxu0 0.0
        %1960 = vmatprep.subr.mxu0 0.0
        %1961 = vmatpush1.msra.mxu0 0.0
        %1962 = vmatprep.subr.mxu0 0.0
        %1963 = vmatpush1.msra.mxu0 0.0
        %1964 = vmatprep.subr.mxu0 0.0
        %1965 = vmatpush1.msra.mxu0 0.0
        %1966 = vmatprep.subr.mxu0 0.0
        %1967 = vmatpush1.msra.mxu0 0.0
        %1968 = vmatprep.subr.mxu0 0.0
        %1969 = vmatpush1.msra.mxu0 0.0
        %1970 = vmatprep.subr.mxu0 0.0
        %1971 = vmatpush1.msra.mxu0 0.0
        %1972 = vmatprep.subr.mxu0 0.0
        %1973 = vmatpush1.msra.mxu0 0.0
        %1974 = vmatprep.subr.mxu0 0.0
        %1975 = vmatpush1.msra.mxu0 0.0
        %1976 = vmatprep.subr.mxu0 0.0
        %1977 = vmatpush1.msra.mxu0 0.0
        %1978 = vmatprep.subr.mxu0 0.0
        %1979 = vmatpush1.msra.mxu0 0.0
        %1980 = vmatprep.subr.mxu0 0.0
        %1981 = vmatpush1.msra.mxu0 0.0
        %1982 = vmatprep.subr.mxu0 0.0
        %1983 = vmatpush1.msra.mxu0 0.0
        %1984 = vmatprep.subr.mxu0 0.0
        %1985 = vmatpush1.msra.mxu0 0.0
        %1986 = vmatprep.subr.mxu0 0.0
        %1987 = vmatpush1.msra.mxu0 0.0
        %1988 = vmatprep.mubr.f32.mxu0 0.0
        %1989 = vmatmul.mubr.f32.gmra.mrb[0].mxu0 %v1922
        %v1990 = vpop.f32.mrb[0].mxu0
        %v1991 = vadd.f32 0.0, %v1990
        %v1992 = vpop.f32.mrb[0].mxu0
        %1993 = vdwg.mxu0
        %v1995 = vsel %vm1600, %v1912, 0
        %1997 = vmatprep.subr.mxu0 0.0
        %1998 = vmatpush1.msra.mxu0 %v1918
        %1999 = vmatprep.subr.mxu0 0.0
        %2000 = vmatpush1.msra.mxu0 0.0
        %2001 = vmatprep.subr.mxu0 0.0
        %2002 = vmatpush1.msra.mxu0 0.0
        %2003 = vmatprep.subr.mxu0 0.0
        %2004 = vmatpush1.msra.mxu0 0.0
        %2005 = vmatprep.subr.mxu0 0.0
        %2006 = vmatpush1.msra.mxu0 0.0
        %2007 = vmatprep.subr.mxu0 0.0
        %2008 = vmatpush1.msra.mxu0 0.0
        %2009 = vmatprep.subr.mxu0 0.0
        %2010 = vmatpush1.msra.mxu0 0.0
        %2011 = vmatprep.subr.mxu0 0.0
        %2012 = vmatpush1.msra.mxu0 0.0
        %2013 = vmatprep.subr.mxu0 0.0
        %2014 = vmatpush1.msra.mxu0 0.0
        %2015 = vmatprep.subr.mxu0 0.0
        %2016 = vmatpush1.msra.mxu0 0.0
        %2017 = vmatprep.subr.mxu0 0.0
        %2018 = vmatpush1.msra.mxu0 0.0
        %2019 = vmatprep.subr.mxu0 0.0
        %2020 = vmatpush1.msra.mxu0 0.0
        %2021 = vmatprep.subr.mxu0 0.0
        %2022 = vmatpush1.msra.mxu0 0.0
        %2023 = vmatprep.subr.mxu0 0.0
        %2024 = vmatpush1.msra.mxu0 0.0
        %2025 = vmatprep.subr.mxu0 0.0
        %2026 = vmatpush1.msra.mxu0 0.0
        %2027 = vmatprep.subr.mxu0 0.0
        %2028 = vmatpush1.msra.mxu0 0.0
        %2029 = vmatprep.subr.mxu0 0.0
        %2030 = vmatpush1.msra.mxu0 0.0
        %2031 = vmatprep.subr.mxu0 0.0
        %2032 = vmatpush1.msra.mxu0 0.0
        %2033 = vmatprep.subr.mxu0 0.0
        %2034 = vmatpush1.msra.mxu0 0.0
        %2035 = vmatprep.subr.mxu0 0.0
        %2036 = vmatpush1.msra.mxu0 0.0
        %2037 = vmatprep.subr.mxu0 0.0
        %2038 = vmatpush1.msra.mxu0 0.0
        %2039 = vmatprep.subr.mxu0 0.0
        %2040 = vmatpush1.msra.mxu0 0.0
        %2041 = vmatprep.subr.mxu0 0.0
        %2042 = vmatpush1.msra.mxu0 0.0
        %2043 = vmatprep.subr.mxu0 0.0
        %2044 = vmatpush1.msra.mxu0 0.0
        %2045 = vmatprep.subr.mxu0 0.0
        %2046 = vmatpush1.msra.mxu0 0.0
        %2047 = vmatprep.subr.mxu0 0.0
        %2048 = vmatpush1.msra.mxu0 0.0
        %2049 = vmatprep.subr.mxu0 0.0
        %2050 = vmatpush1.msra.mxu0 0.0
        %2051 = vmatprep.subr.mxu0 0.0
        %2052 = vmatpush1.msra.mxu0 0.0
        %2053 = vmatprep.subr.mxu0 0.0
        %2054 = vmatpush1.msra.mxu0 0.0
        %2055 = vmatprep.subr.mxu0 0.0
        %2056 = vmatpush1.msra.mxu0 0.0
        %2057 = vmatprep.subr.mxu0 0.0
        %2058 = vmatpush1.msra.mxu0 0.0
        %2059 = vmatprep.subr.mxu0 0.0
        %2060 = vmatpush1.msra.mxu0 0.0
        %2061 = vmatprep.mubr.f32.mxu0 0.0
        %2062 = vmatmul.mubr.f32.gmra.mrb[0].mxu0 %v1995
        %v2063 = vpop.f32.mrb[0].mxu0
        %v2064 = vadd.f32 0.0, %v2063
        %v2065 = vpop.f32.mrb[0].mxu0
        %2066 = vdwg.mxu0
        %v2068 = vsel %vm1600, %v1914, 0
        %2070 = vmatprep.subr.mxu0 0.0
        %2071 = vmatpush1.msra.mxu0 %v1919
        %2072 = vmatprep.subr.mxu0 0.0
        %2073 = vmatpush1.msra.mxu0 0.0
        %2074 = vmatprep.subr.mxu0 0.0
        %2075 = vmatpush1.msra.mxu0 0.0
        %2076 = vmatprep.subr.mxu0 0.0
        %2077 = vmatpush1.msra.mxu0 0.0
        %2078 = vmatprep.subr.mxu0 0.0
        %2079 = vmatpush1.msra.mxu0 0.0
        %2080 = vmatprep.subr.mxu0 0.0
        %2081 = vmatpush1.msra.mxu0 0.0
        %2082 = vmatprep.subr.mxu0 0.0
        %2083 = vmatpush1.msra.mxu0 0.0
        %2084 = vmatprep.subr.mxu0 0.0
        %2085 = vmatpush1.msra.mxu0 0.0
        %2086 = vmatprep.subr.mxu0 0.0
        %2087 = vmatpush1.msra.mxu0 0.0
        %2088 = vmatprep.subr.mxu0 0.0
        %2089 = vmatpush1.msra.mxu0 0.0
        %2090 = vmatprep.subr.mxu0 0.0
        %2091 = vmatpush1.msra.mxu0 0.0
        %2092 = vmatprep.subr.mxu0 0.0
        %2093 = vmatpush1.msra.mxu0 0.0
        %2094 = vmatprep.subr.mxu0 0.0
        %2095 = vmatpush1.msra.mxu0 0.0
        %2096 = vmatprep.subr.mxu0 0.0
        %2097 = vmatpush1.msra.mxu0 0.0
        %2098 = vmatprep.subr.mxu0 0.0
        %2099 = vmatpush1.msra.mxu0 0.0
        %2100 = vmatprep.subr.mxu0 0.0
        %2101 = vmatpush1.msra.mxu0 0.0
        %2102 = vmatprep.subr.mxu0 0.0
        %2103 = vmatpush1.msra.mxu0 0.0
        %2104 = vmatprep.subr.mxu0 0.0
        %2105 = vmatpush1.msra.mxu0 0.0
        %2106 = vmatprep.subr.mxu0 0.0
        %2107 = vmatpush1.msra.mxu0 0.0
        %2108 = vmatprep.subr.mxu0 0.0
        %2109 = vmatpush1.msra.mxu0 0.0
        %2110 = vmatprep.subr.mxu0 0.0
        %2111 = vmatpush1.msra.mxu0 0.0
        %2112 = vmatprep.subr.mxu0 0.0
        %2113 = vmatpush1.msra.mxu0 0.0
        %2114 = vmatprep.subr.mxu0 0.0
        %2115 = vmatpush1.msra.mxu0 0.0
        %2116 = vmatprep.subr.mxu0 0.0
        %2117 = vmatpush1.msra.mxu0 0.0
        %2118 = vmatprep.subr.mxu0 0.0
        %2119 = vmatpush1.msra.mxu0 0.0
        %2120 = vmatprep.subr.mxu0 0.0
        %2121 = vmatpush1.msra.mxu0 0.0
        %2122 = vmatprep.subr.mxu0 0.0
        %2123 = vmatpush1.msra.mxu0 0.0
        %2124 = vmatprep.subr.mxu0 0.0
        %2125 = vmatpush1.msra.mxu0 0.0
        %2126 = vmatprep.subr.mxu0 0.0
        %2127 = vmatpush1.msra.mxu0 0.0
        %2128 = vmatprep.subr.mxu0 0.0
        %2129 = vmatpush1.msra.mxu0 0.0
        %2130 = vmatprep.subr.mxu0 0.0
        %2131 = vmatpush1.msra.mxu0 0.0
        %2132 = vmatprep.subr.mxu0 0.0
        %2133 = vmatpush1.msra.mxu0 0.0
        %2134 = vmatprep.mubr.f32.mxu0 0.0
        %2135 = vmatmul.mubr.f32.gmra.mrb[0].mxu0 %v2068
        %v2136 = vpop.f32.mrb[0].mxu0
        %v2137 = vadd.f32 0.0, %v2136
        %v2138 = vpop.f32.mrb[0].mxu0
        %2139 = vdwg.mxu0
        %v2141 = vsel %vm1600, %v1916, 0
        %2143 = vmatprep.subr.mxu0 0.0
        %2144 = vmatpush1.msra.mxu0 %v1920
        %2145 = vmatprep.subr.mxu0 0.0
        %2146 = vmatpush1.msra.mxu0 0.0
        %2147 = vmatprep.subr.mxu0 0.0
        %2148 = vmatpush1.msra.mxu0 0.0
        %2149 = vmatprep.subr.mxu0 0.0
        %2150 = vmatpush1.msra.mxu0 0.0
        %2151 = vmatprep.subr.mxu0 0.0
        %2152 = vmatpush1.msra.mxu0 0.0
        %2153 = vmatprep.subr.mxu0 0.0
        %2154 = vmatpush1.msra.mxu0 0.0
        %2155 = vmatprep.subr.mxu0 0.0
        %2156 = vmatpush1.msra.mxu0 0.0
        %2157 = vmatprep.subr.mxu0 0.0
        %2158 = vmatpush1.msra.mxu0 0.0
        %2159 = vmatprep.subr.mxu0 0.0
        %2160 = vmatpush1.msra.mxu0 0.0
        %2161 = vmatprep.subr.mxu0 0.0
        %2162 = vmatpush1.msra.mxu0 0.0
        %2163 = vmatprep.subr.mxu0 0.0
        %2164 = vmatpush1.msra.mxu0 0.0
        %2165 = vmatprep.subr.mxu0 0.0
        %2166 = vmatpush1.msra.mxu0 0.0
        %2167 = vmatprep.subr.mxu0 0.0
        %2168 = vmatpush1.msra.mxu0 0.0
        %2169 = vmatprep.subr.mxu0 0.0
        %2170 = vmatpush1.msra.mxu0 0.0
        %2171 = vmatprep.subr.mxu0 0.0
        %2172 = vmatpush1.msra.mxu0 0.0
        %2173 = vmatprep.subr.mxu0 0.0
        %2174 = vmatpush1.msra.mxu0 0.0
        %2175 = vmatprep.subr.mxu0 0.0
        %2176 = vmatpush1.msra.mxu0 0.0
        %2177 = vmatprep.subr.mxu0 0.0
        %2178 = vmatpush1.msra.mxu0 0.0
        %2179 = vmatprep.subr.mxu0 0.0
        %2180 = vmatpush1.msra.mxu0 0.0
        %2181 = vmatprep.subr.mxu0 0.0
        %2182 = vmatpush1.msra.mxu0 0.0
        %2183 = vmatprep.subr.mxu0 0.0
        %2184 = vmatpush1.msra.mxu0 0.0
        %2185 = vmatprep.subr.mxu0 0.0
        %2186 = vmatpush1.msra.mxu0 0.0
        %2187 = vmatprep.subr.mxu0 0.0
        %2188 = vmatpush1.msra.mxu0 0.0
        %2189 = vmatprep.subr.mxu0 0.0
        %2190 = vmatpush1.msra.mxu0 0.0
        %2191 = vmatprep.subr.mxu0 0.0
        %2192 = vmatpush1.msra.mxu0 0.0
        %2193 = vmatprep.subr.mxu0 0.0
        %2194 = vmatpush1.msra.mxu0 0.0
        %2195 = vmatprep.subr.mxu0 0.0
        %2196 = vmatpush1.msra.mxu0 0.0
        %2197 = vmatprep.subr.mxu0 0.0
        %2198 = vmatpush1.msra.mxu0 0.0
        %2199 = vmatprep.subr.mxu0 0.0
        %2200 = vmatpush1.msra.mxu0 0.0
        %2201 = vmatprep.subr.mxu0 0.0
        %2202 = vmatpush1.msra.mxu0 0.0
        %2203 = vmatprep.subr.mxu0 0.0
        %2204 = vmatpush1.msra.mxu0 0.0
        %2205 = vmatprep.subr.mxu0 0.0
        %2206 = vmatpush1.msra.mxu0 0.0
        %2207 = vmatprep.mubr.f32.mxu0 0.0
        %2208 = vmatmul.mubr.f32.gmra.mrb[0].mxu0 %v2141
        %v2209 = vpop.f32.mrb[0].mxu0
        %v2210 = vadd.f32 0.0, %v2209
        %v2211 = vpop.f32.mrb[0].mxu0
        %2212 = vdwg.mxu0
        %v2213 = vsel %vm1600, %v1910, 0.0
        %2214 = vadd.xlane.f32.xlu0 %v2213
        %v2215 = vpop.xlane.xlu0 %2214
        %v2216 = vsel %vm1600, %v1912, 0.0
        %2217 = vadd.xlane.f32.xlu0 %v2216
        %v2218 = vpop.xlane.xlu0 %2217
        %v2219 = vsel %vm1600, %v1914, 0.0
        %2220 = vadd.xlane.f32.xlu0 %v2219
        %v2221 = vpop.xlane.xlu0 %2220
        %v2222 = vsel %vm1600, %v1916, 0.0
        %2223 = vadd.xlane.f32.xlu0 %v2222
        %v2224 = vpop.xlane.xlu0 %2223
        %v2225 = vrcp.pop %v2215
        %v2226 = vmul.f32 %v1991, %v2225
        %v2227 = vrcp.pop %v2218
        %v2228 = vmul.f32 %v2064, %v2227
        %v2229 = vrcp.pop %v2221
        %v2230 = vmul.f32 %v2137, %v2229
        %v2231 = vrcp.pop %v2224
        %v2232 = vmul.f32 %v2210, %v2231
        %v2233 = vld [vmem:[%s9] sm:$0xff]
        %s2234 = scalar_lea.vmem %s9, 8
        %v2235 = vld [vmem:[%s2234] sm:$0xff]
        %v2237 = vsel %vm1600, %v2228, 0
        %2239 = vmatprep.subr.mxu0 0.0
        %2240 = vmatpush1.msra.mxu0 %v2235
        %2241 = vmatprep.subr.mxu0 0.0
        %2242 = vmatpush1.msra.mxu0 0.0
        %2243 = vmatprep.subr.mxu0 0.0
        %2244 = vmatpush1.msra.mxu0 0.0
        %2245 = vmatprep.subr.mxu0 0.0
        %2246 = vmatpush1.msra.mxu0 0.0
        %2247 = vmatprep.subr.mxu0 0.0
        %2248 = vmatpush1.msra.mxu0 0.0
        %2249 = vmatprep.subr.mxu0 0.0
        %2250 = vmatpush1.msra.mxu0 0.0
        %2251 = vmatprep.subr.mxu0 0.0
        %2252 = vmatpush1.msra.mxu0 0.0
        %2253 = vmatprep.subr.mxu0 0.0
        %2254 = vmatpush1.msra.mxu0 0.0
        %2255 = vmatprep.subr.mxu0 0.0
        %2256 = vmatpush1.msra.mxu0 0.0
        %2257 = vmatprep.subr.mxu0 0.0
        %2258 = vmatpush1.msra.mxu0 0.0
        %2259 = vmatprep.subr.mxu0 0.0
        %2260 = vmatpush1.msra.mxu0 0.0
        %2261 = vmatprep.subr.mxu0 0.0
        %2262 = vmatpush1.msra.mxu0 0.0
        %2263 = vmatprep.subr.mxu0 0.0
        %2264 = vmatpush1.msra.mxu0 0.0
        %2265 = vmatprep.subr.mxu0 0.0
        %2266 = vmatpush1.msra.mxu0 0.0
        %2267 = vmatprep.subr.mxu0 0.0
        %2268 = vmatpush1.msra.mxu0 0.0
        %2269 = vmatprep.subr.mxu0 0.0
        %2270 = vmatpush1.msra.mxu0 0.0
        %2271 = vmatprep.subr.mxu0 0.0
        %2272 = vmatpush1.msra.mxu0 0.0
        %2273 = vmatprep.subr.mxu0 0.0
        %2274 = vmatpush1.msra.mxu0 0.0
        %2275 = vmatprep.subr.mxu0 0.0
        %2276 = vmatpush1.msra.mxu0 0.0
        %2277 = vmatprep.subr.mxu0 0.0
        %2278 = vmatpush1.msra.mxu0 0.0
        %2279 = vmatprep.subr.mxu0 0.0
        %2280 = vmatpush1.msra.mxu0 0.0
        %2281 = vmatprep.subr.mxu0 0.0
        %2282 = vmatpush1.msra.mxu0 0.0
        %2283 = vmatprep.subr.mxu0 0.0
        %2284 = vmatpush1.msra.mxu0 0.0
        %2285 = vmatprep.subr.mxu0 0.0
        %2286 = vmatpush1.msra.mxu0 0.0
        %2287 = vmatprep.subr.mxu0 0.0
        %2288 = vmatpush1.msra.mxu0 0.0
        %2289 = vmatprep.subr.mxu0 0.0
        %2290 = vmatpush1.msra.mxu0 0.0
        %2291 = vmatprep.subr.mxu0 0.0
        %2292 = vmatpush1.msra.mxu0 0.0
        %2293 = vmatprep.subr.mxu0 0.0
        %2294 = vmatpush1.msra.mxu0 0.0
        %2295 = vmatprep.subr.mxu0 0.0
        %2296 = vmatpush1.msra.mxu0 0.0
        %2297 = vmatprep.subr.mxu0 0.0
        %2298 = vmatpush1.msra.mxu0 0.0
        %2299 = vmatprep.subr.mxu0 0.0
        %2300 = vmatpush1.msra.mxu0 0.0
        %2301 = vmatprep.subr.mxu0 0.0
        %2302 = vmatpush1.msra.mxu0 0.0
        %2303 = vmatprep.mubr.f32.mxu0 0.0
        %2304 = vmatmul.mubr.f32.gmra.mrb[0].mxu0 %v2237
        %v2305 = vpop.f32.mrb[0].mxu0
        %v2306 = vadd.f32 0.0, %v2305
        %v2307 = vpop.f32.mrb[0].mxu0
        %2308 = vdwg.mxu0
        %v2310 = vsel %vm1600, %v2226, 0
        %2312 = vmatprep.subr.mxu0 0.0
        %2313 = vmatpush1.msra.mxu0 %v2233
        %2314 = vmatprep.subr.mxu0 0.0
        %2315 = vmatpush1.msra.mxu0 0.0
        %2316 = vmatprep.subr.mxu0 0.0
        %2317 = vmatpush1.msra.mxu0 0.0
        %2318 = vmatprep.subr.mxu0 0.0
        %2319 = vmatpush1.msra.mxu0 0.0
        %2320 = vmatprep.subr.mxu0 0.0
        %2321 = vmatpush1.msra.mxu0 0.0
        %2322 = vmatprep.subr.mxu0 0.0
        %2323 = vmatpush1.msra.mxu0 0.0
        %2324 = vmatprep.subr.mxu0 0.0
        %2325 = vmatpush1.msra.mxu0 0.0
        %2326 = vmatprep.subr.mxu0 0.0
        %2327 = vmatpush1.msra.mxu0 0.0
        %2328 = vmatprep.subr.mxu0 0.0
        %2329 = vmatpush1.msra.mxu0 0.0
        %2330 = vmatprep.subr.mxu0 0.0
        %2331 = vmatpush1.msra.mxu0 0.0
        %2332 = vmatprep.subr.mxu0 0.0
        %2333 = vmatpush1.msra.mxu0 0.0
        %2334 = vmatprep.subr.mxu0 0.0
        %2335 = vmatpush1.msra.mxu0 0.0
        %2336 = vmatprep.subr.mxu0 0.0
        %2337 = vmatpush1.msra.mxu0 0.0
        %2338 = vmatprep.subr.mxu0 0.0
        %2339 = vmatpush1.msra.mxu0 0.0
        %2340 = vmatprep.subr.mxu0 0.0
        %2341 = vmatpush1.msra.mxu0 0.0
        %2342 = vmatprep.subr.mxu0 0.0
        %2343 = vmatpush1.msra.mxu0 0.0
        %2344 = vmatprep.subr.mxu0 0.0
        %2345 = vmatpush1.msra.mxu0 0.0
        %2346 = vmatprep.subr.mxu0 0.0
        %2347 = vmatpush1.msra.mxu0 0.0
        %2348 = vmatprep.subr.mxu0 0.0
        %2349 = vmatpush1.msra.mxu0 0.0
        %2350 = vmatprep.subr.mxu0 0.0
        %2351 = vmatpush1.msra.mxu0 0.0
        %2352 = vmatprep.subr.mxu0 0.0
        %2353 = vmatpush1.msra.mxu0 0.0
        %2354 = vmatprep.subr.mxu0 0.0
        %2355 = vmatpush1.msra.mxu0 0.0
        %2356 = vmatprep.subr.mxu0 0.0
        %2357 = vmatpush1.msra.mxu0 0.0
        %2358 = vmatprep.subr.mxu0 0.0
        %2359 = vmatpush1.msra.mxu0 0.0
        %2360 = vmatprep.subr.mxu0 0.0
        %2361 = vmatpush1.msra.mxu0 0.0
        %2362 = vmatprep.subr.mxu0 0.0
        %2363 = vmatpush1.msra.mxu0 0.0
        %2364 = vmatprep.subr.mxu0 0.0
        %2365 = vmatpush1.msra.mxu0 0.0
        %2366 = vmatprep.subr.mxu0 0.0
        %2367 = vmatpush1.msra.mxu0 0.0
        %2368 = vmatprep.subr.mxu0 0.0
        %2369 = vmatpush1.msra.mxu0 0.0
        %2370 = vmatprep.subr.mxu0 0.0
        %2371 = vmatpush1.msra.mxu0 0.0
        %2372 = vmatprep.subr.mxu0 0.0
        %2373 = vmatpush1.msra.mxu0 0.0
        %2374 = vmatprep.subr.mxu0 0.0
        %2375 = vmatpush1.msra.mxu0 0.0
        %2376 = vmatprep.mubr.f32.mxu0 0.0
        %2377 = vmatmul.mubr.f32.gmra.mrb[0].mxu0 %v2310
        %v2378 = vpop.f32.mrb[0].mxu0
        %v2379 = vadd.f32 %v2306, %v2378
        %v2380 = vpop.f32.mrb[0].mxu0
        %2381 = vdwg.mxu0
        %s2382 = scalar_lea.vmem %s9, 16
        %v2383 = vld [vmem:[%s2382] sm:$0xff]
        %v2385 = vsel %vm1600, %v2230, 0
        %2387 = vmatprep.subr.mxu0 0.0
        %2388 = vmatpush1.msra.mxu0 %v2383
        %2389 = vmatprep.subr.mxu0 0.0
        %2390 = vmatpush1.msra.mxu0 0.0
        %2391 = vmatprep.subr.mxu0 0.0
        %2392 = vmatpush1.msra.mxu0 0.0
        %2393 = vmatprep.subr.mxu0 0.0
        %2394 = vmatpush1.msra.mxu0 0.0
        %2395 = vmatprep.subr.mxu0 0.0
        %2396 = vmatpush1.msra.mxu0 0.0
        %2397 = vmatprep.subr.mxu0 0.0
        %2398 = vmatpush1.msra.mxu0 0.0
        %2399 = vmatprep.subr.mxu0 0.0
        %2400 = vmatpush1.msra.mxu0 0.0
        %2401 = vmatprep.subr.mxu0 0.0
        %2402 = vmatpush1.msra.mxu0 0.0
        %2403 = vmatprep.subr.mxu0 0.0
        %2404 = vmatpush1.msra.mxu0 0.0
        %2405 = vmatprep.subr.mxu0 0.0
        %2406 = vmatpush1.msra.mxu0 0.0
        %2407 = vmatprep.subr.mxu0 0.0
        %2408 = vmatpush1.msra.mxu0 0.0
        %2409 = vmatprep.subr.mxu0 0.0
        %2410 = vmatpush1.msra.mxu0 0.0
        %2411 = vmatprep.subr.mxu0 0.0
        %2412 = vmatpush1.msra.mxu0 0.0
        %2413 = vmatprep.subr.mxu0 0.0
        %2414 = vmatpush1.msra.mxu0 0.0
        %2415 = vmatprep.subr.mxu0 0.0
        %2416 = vmatpush1.msra.mxu0 0.0
        %2417 = vmatprep.subr.mxu0 0.0
        %2418 = vmatpush1.msra.mxu0 0.0
        %2419 = vmatprep.subr.mxu0 0.0
        %2420 = vmatpush1.msra.mxu0 0.0
        %2421 = vmatprep.subr.mxu0 0.0
        %2422 = vmatpush1.msra.mxu0 0.0
        %2423 = vmatprep.subr.mxu0 0.0
        %2424 = vmatpush1.msra.mxu0 0.0
        %2425 = vmatprep.subr.mxu0 0.0
        %2426 = vmatpush1.msra.mxu0 0.0
        %2427 = vmatprep.subr.mxu0 0.0
        %2428 = vmatpush1.msra.mxu0 0.0
        %2429 = vmatprep.subr.mxu0 0.0
        %2430 = vmatpush1.msra.mxu0 0.0
        %2431 = vmatprep.subr.mxu0 0.0
        %2432 = vmatpush1.msra.mxu0 0.0
        %2433 = vmatprep.subr.mxu0 0.0
        %2434 = vmatpush1.msra.mxu0 0.0
        %2435 = vmatprep.subr.mxu0 0.0
        %2436 = vmatpush1.msra.mxu0 0.0
        %2437 = vmatprep.subr.mxu0 0.0
        %2438 = vmatpush1.msra.mxu0 0.0
        %2439 = vmatprep.subr.mxu0 0.0
        %2440 = vmatpush1.msra.mxu0 0.0
        %2441 = vmatprep.subr.mxu0 0.0
        %2442 = vmatpush1.msra.mxu0 0.0
        %2443 = vmatprep.subr.mxu0 0.0
        %2444 = vmatpush1.msra.mxu0 0.0
        %2445 = vmatprep.subr.mxu0 0.0
        %2446 = vmatpush1.msra.mxu0 0.0
        %2447 = vmatprep.subr.mxu0 0.0
        %2448 = vmatpush1.msra.mxu0 0.0
        %2449 = vmatprep.subr.mxu0 0.0
        %2450 = vmatpush1.msra.mxu0 0.0
        %2451 = vmatprep.mubr.f32.mxu0 0.0
        %2452 = vmatmul.mubr.f32.gmra.mrb[0].mxu0 %v2385
        %v2453 = vpop.f32.mrb[0].mxu0
        %v2454 = vadd.f32 0.0, %v2453
        %v2455 = vpop.f32.mrb[0].mxu0
        %2456 = vdwg.mxu0
        %v2457 = vadd.f32 %v2379, %v2454
        %s2458 = scalar_lea.vmem %s9, 24
        %v2459 = vld [vmem:[%s2458] sm:$0xff]
        %v2461 = vsel %vm1600, %v2232, 0
        %2463 = vmatprep.subr.mxu0 0.0
        %2464 = vmatpush1.msra.mxu0 %v2459
        %2465 = vmatprep.subr.mxu0 0.0
        %2466 = vmatpush1.msra.mxu0 0.0
        %2467 = vmatprep.subr.mxu0 0.0
        %2468 = vmatpush1.msra.mxu0 0.0
        %2469 = vmatprep.subr.mxu0 0.0
        %2470 = vmatpush1.msra.mxu0 0.0
        %2471 = vmatprep.subr.mxu0 0.0
        %2472 = vmatpush1.msra.mxu0 0.0
        %2473 = vmatprep.subr.mxu0 0.0
        %2474 = vmatpush1.msra.mxu0 0.0
        %2475 = vmatprep.subr.mxu0 0.0
        %2476 = vmatpush1.msra.mxu0 0.0
        %2477 = vmatprep.subr.mxu0 0.0
        %2478 = vmatpush1.msra.mxu0 0.0
        %2479 = vmatprep.subr.mxu0 0.0
        %2480 = vmatpush1.msra.mxu0 0.0
        %2481 = vmatprep.subr.mxu0 0.0
        %2482 = vmatpush1.msra.mxu0 0.0
        %2483 = vmatprep.subr.mxu0 0.0
        %2484 = vmatpush1.msra.mxu0 0.0
        %2485 = vmatprep.subr.mxu0 0.0
        %2486 = vmatpush1.msra.mxu0 0.0
        %2487 = vmatprep.subr.mxu0 0.0
        %2488 = vmatpush1.msra.mxu0 0.0
        %2489 = vmatprep.subr.mxu0 0.0
        %2490 = vmatpush1.msra.mxu0 0.0
        %2491 = vmatprep.subr.mxu0 0.0
        %2492 = vmatpush1.msra.mxu0 0.0
        %2493 = vmatprep.subr.mxu0 0.0
        %2494 = vmatpush1.msra.mxu0 0.0
        %2495 = vmatprep.subr.mxu0 0.0
        %2496 = vmatpush1.msra.mxu0 0.0
        %2497 = vmatprep.subr.mxu0 0.0
        %2498 = vmatpush1.msra.mxu0 0.0
        %2499 = vmatprep.subr.mxu0 0.0
        %2500 = vmatpush1.msra.mxu0 0.0
        %2501 = vmatprep.subr.mxu0 0.0
        %2502 = vmatpush1.msra.mxu0 0.0
        %2503 = vmatprep.subr.mxu0 0.0
        %2504 = vmatpush1.msra.mxu0 0.0
        %2505 = vmatprep.subr.mxu0 0.0
        %2506 = vmatpush1.msra.mxu0 0.0
        %2507 = vmatprep.subr.mxu0 0.0
        %2508 = vmatpush1.msra.mxu0 0.0
        %2509 = vmatprep.subr.mxu0 0.0
        %2510 = vmatpush1.msra.mxu0 0.0
        %2511 = vmatprep.subr.mxu0 0.0
        %2512 = vmatpush1.msra.mxu0 0.0
        %2513 = vmatprep.subr.mxu0 0.0
        %2514 = vmatpush1.msra.mxu0 0.0
        %2515 = vmatprep.subr.mxu0 0.0
        %2516 = vmatpush1.msra.mxu0 0.0
        %2517 = vmatprep.subr.mxu0 0.0
        %2518 = vmatpush1.msra.mxu0 0.0
        %2519 = vmatprep.subr.mxu0 0.0
        %2520 = vmatpush1.msra.mxu0 0.0
        %2521 = vmatprep.subr.mxu0 0.0
        %2522 = vmatpush1.msra.mxu0 0.0
        %2523 = vmatprep.subr.mxu0 0.0
        %2524 = vmatpush1.msra.mxu0 0.0
        %2525 = vmatprep.subr.mxu0 0.0
        %2526 = vmatpush1.msra.mxu0 0.0
        %2527 = vmatprep.mubr.f32.mxu0 0.0
        %2528 = vmatmul.mubr.f32.gmra.mrb[0].mxu0 %v2461
        %v2529 = vpop.f32.mrb[0].mxu0
        %v2530 = vadd.f32 0.0, %v2529
        %v2531 = vpop.f32.mrb[0].mxu0
        %2532 = vdwg.mxu0
        %v2533 = vadd.f32 %v2457, %v2530
        %v2534 = vld [vmem:[%s10] sm:$0x1]
        %v2536 = vlaneseq
        %v2537 = vshrl.u32 %v2536, 7
        %v2538 = vsub.s32 0, %v2537
        %v2539 = vrot.slane %v2534, %v2538
        %v2541 = vadd.f32 %v2533, %v2539
        %2542 = vst.msk [vmem:[%s425] sm:$0xff] %vm1269, %v2541
        %s2543 = sand.u32 %s295, 1
        %s2544 = scalar_lea.sflag [#allocation5], %s2543
        %s2545 = sand.u32 %s295, 1
        %s2546 = smul.addr %s2545, 8
        %s2547 = scalar_lea.vmem [#allocation4], %s2546
        // Predicated region
        $region69: #{tpu_custom_call.1} parent=63 // pred_check
          %p2548 = pneg %p305
        $region70: #{tpu_custom_call.1} parent=63 // pred_check_branch
          %2550 = sbr.rel (%p2548) target = $region72
        $region71: #{tpu_custom_call.1} parent=63 // pred_region
          %s2552 = ssub.s32 128, 128
          %2553 = vsyncadd %s2544, %s2552
          %s2554 = sadd.s32 %s30, %s29
          %s2555 = smul.addr %s2554, 128
          %s2556 = scalar_lea.hbm %s11, %s2555
          %s2558 = sshll.u32 %s2547, 4
          %s2559 = int_to_ptr.vmem [resolvable:$true] %s2558
          %2561 = dma.vmem_to_hbm [thread:$0]  %s2559, 128, %s2556, %s2544
        $region72: #{tpu_custom_call.1} parent=63 // pred_fallthru
          _
      $region64: #{tpu_custom_call.1} parent=5 // pred_fallthru
        _
      %p2562 = scmp.le.s32.totalorder 2, %s20
      // Predicated region
      $region73: #{tpu_custom_call.1} parent=5 // pred_check
        %p2563 = pneg %p2562
      $region74: #{tpu_custom_call.1} parent=5 // pred_check_branch
        %2565 = sbr.rel (%p2563) target = $region76
      $region75: #{tpu_custom_call.1} parent=5 // pred_region
        %s2566 = ssub.s32 %s20, 2
        // Predicated region
        $region77: #{tpu_custom_call.1} parent=75 // pred_check
          %p2567 = pneg %p311
        $region78: #{tpu_custom_call.1} parent=75 // pred_check_branch
          %2569 = sbr.rel (%p2567) target = $region80
        $region79: #{tpu_custom_call.1} parent=75 // pred_region
          %s2570 = sand.u32 %s296, 1
          %s2571 = scalar_lea.sflag [#allocation5], %s2570
          %s2572 = sand.u32 %s296, 1
          %s2573 = smul.addr %s2572, 8
          %s2574 = scalar_lea.vmem [#allocation4], %s2573
          %2575 = dma.done %s2571, 128
        $region80: #{tpu_custom_call.1} parent=75 // pred_fallthru
          _
      $region76: #{tpu_custom_call.1} parent=5 // pred_fallthru
        _
    $region6: #{tpu_custom_call.1} parent=1 // loop_footer
      %s24 = sadd.s32 1, %s20
    $region7: #{tpu_custom_call.1} parent=1 // loop_footer_branch
      %19 = sbr.rel target = $region3
    $region8: #{tpu_custom_call.1} parent=1 // loop_exit
      _
    %2576 = vsyncpa [#allocation5], 1
    %s2577 = scalar_lea.sflag [#allocation5], 1
    %2578 = vsyncpa %s2577, 1

</llo_original>
